<compile_context>
chip_gen: v7x
topology: tpu7x:2x2x1
jax: 0.10.0
libtpu: 0.0.40
codegen_flags: <defaults>
</compile_context>

<pallas_src>
import functools

import jax
import jax.numpy as jnp
from jax.experimental import pallas as pl
from jax.experimental.pallas import tpu as pltpu


def _encoder_gru_kernel(x_ref, lens_ref, wih_ref, bpre_ref, whh_ref, bhhn_ref,
                        ws_ref, bs_ref,
                        hs_ref, last_ref,
                        xg_ref, h_ref,
                        *, T, B, H):
    """x_ref: (T*B, E) bf16, lens_ref: (B, 1) i32, hs_ref: (T*B, 2H) f32, last_ref: (B, H) f32."""
    H2, H3, H6 = 2 * H, 3 * H, 6 * H

    # ---- pre-pass: ONE fused input projection for both directions (bf16 MXU, f32 acc) ----
    # xg columns = [r_f z_f n_f | r_b z_b n_b]; bias already holds b_ih (all gates) plus
    # b_hh_r / b_hh_z (b_hh_n must stay inside r*(...) below).
    xg_ref[...] = (jnp.dot(x_ref[...], wih_ref[...],
                           preferred_element_type=jnp.float32) + bpre_ref[...])

    # ---- hoist loop-invariant loads / broadcasts out of the serial recurrence ----
    lens = lens_ref[...]                                        # (B, 1) int32
    bhhn = bhhn_ref[...]                                        # (1, 2H) f32
    bhhn_f = jnp.broadcast_to(bhhn[:, :H], (B, H))
    bhhn_b = jnp.broadcast_to(bhhn[:, H:], (B, H))

    h_ref[...] = jnp.zeros_like(h_ref)                          # (B, 2H) carry [fwd | bwd]

    def step(i, carry):
        tf = i                          # forward time index
        tb = T - 1 - i                  # backward time index
        rf = pl.multiple_of(tf * B, B)
        rb = pl.multiple_of(tb * B, B)

        h = h_ref[...]                                          # (B, 2H) f32
        h_f = h[:, :H]
        h_b = h[:, H:]

        # single MXU push per step: block-diag(whh_f, whh_b) handles both directions
        hg = jnp.dot(h.astype(jnp.bfloat16), whh_ref[...],
                     preferred_element_type=jnp.float32)        # (B, 6H)

        xg_f = xg_ref[pl.ds(rf, B), 0:H3]                       # fwd gates at t = tf
        xg_b = xg_ref[pl.ds(rb, B), H3:H6]                      # bwd gates at t = tb

        def gru(xg, hg_d, bhhn_d, h_prev):
            # PyTorch gate order (r, z, n); xg already holds W_ih x + b_ih (+ b_hh_{r,z}).
            rz = jax.nn.sigmoid(xg[:, :H2] + hg_d[:, :H2])
            r = rz[:, :H]
            z = rz[:, H:]
            n = jnp.tanh(xg[:, H2:] + r * (hg_d[:, H2:] + bhhn_d))
            return (1.0 - z) * n + z * h_prev

        hnew_f = gru(xg_f, hg[:, :H3], bhhn_f, h_f)
        hnew_b = gru(xg_b, hg[:, H3:], bhhn_b, h_b)

        # packed-sequence validity: two compares + selects per direction, no mask array.
        m_f = lens > tf                                         # (B, 1) bool
        m_b = lens > tb

        out_f = jnp.where(m_f, hnew_f, 0.0)                     # pad_packed: pads -> 0
        out_b = jnp.where(m_b, hnew_b, 0.0)
        hs_ref[pl.ds(rf, B), 0:H] = out_f                       # concatenated [fwd | bwd]
        hs_ref[pl.ds(rb, B), H:H2] = out_b

        h_ref[:, 0:H] = jnp.where(m_f, hnew_f, h_f)             # hold carry past seq end
        h_ref[:, H:H2] = jnp.where(m_b, hnew_b, h_b)            # bwd carry stays 0 until t < len
        return carry

    unroll = T if T <= 16 else 4
    jax.lax.fori_loop(0, T, step, None, unroll=unroll)

    # h_n[backward] = backward carry after the reverse sweep (its t=0 output) -> tanh(Linear)
    last_ref[...] = jnp.tanh(
        jnp.dot(h_ref[:, H:H2], ws_ref[...], preferred_element_type=jnp.float32)
        + bs_ref[...])


def prepare_params(raw):
    """One-time fusion / bf16 casting of the PyTorch-style parameters."""
    H = raw["whh_f"].shape[0]
    H2, H3 = 2 * H, 3 * H

    # fused input-to-hidden weight [fwd | bwd] along lanes, bf16 for the MXU.
    wih = jnp.concatenate([raw["wih_f"], raw["wih_b"]], axis=1).astype(jnp.bfloat16)  # (E, 6H)

    # pre-pass bias: b_ih (all gates) + b_hh for r/z only (b_hh_n stays in the loop).
    def pre_bias(bih, bhh):
        return jnp.concatenate([bih[:, :H2] + bhh[:, :H2], bih[:, H2:]], axis=1)

    bias_pre = jnp.concatenate([pre_bias(raw["bih_f"], raw["bhh_f"]),
                                pre_bias(raw["bih_b"], raw["bhh_b"])], axis=1)          # (1, 6H)

    # block-diagonal recurrent weight: [h_f | h_b] @ whh -> [h_f@whh_f | h_b@whh_b].
    whh = jnp.zeros((H2, 6 * H), jnp.float32)
    whh = whh.at[:H, :H3].set(raw["whh_f"]).at[H:, H3:].set(raw["whh_b"])
    whh = whh.astype(jnp.bfloat16)                                                      # (2H, 6H)

    bhhn = jnp.concatenate([raw["bhh_f"][:, H2:], raw["bhh_b"][:, H2:]], axis=1)        # (1, 2H)

    return {
        "emb": raw["emb"].astype(jnp.bfloat16),   # bf16 gather, no f32 round-trip
        "wih": wih, "bias_pre": bias_pre, "whh": whh, "bhhn": bhhn,
        "ws": raw["ws"], "bs": raw["bs"],
    }


def encoder_forward(words_in, sent_lens, kp):
    """words_in: (T, B) int32, sent_lens: (B,) int32, kp: output of prepare_params.

    NOTE: like pad_packed_sequence the output is padded to max(sent_lens); this
    implementation requires max(sent_lens) == T (checked in the demo driver).
    """
    T, B = words_in.shape
    E = kp["wih"].shape[0]
    H = kp["whh"].shape[0] // 2
    Bp = ((B + 7) // 8) * 8                                     # pad batch to 8 sublanes

    # Embedding lookup (nn.Embedding, frozen) -- gather glue stays in plain JAX (bf16).
    x = jnp.take(kp["emb"], words_in, axis=0)                   # (T, B, E) bf16
    x = jnp.pad(x, ((0, 0), (0, Bp - B), (0, 0)))               # (T, Bp, E)
    x2d = x.reshape(T * Bp, E)
    lens = jnp.pad(sent_lens.astype(jnp.int32), (0, Bp - B)).reshape(Bp, 1)  # pads: len 0

    kernel = functools.partial(_encoder_gru_kernel, T=T, B=Bp, H=H)
    vmem = pl.BlockSpec(memory_space=pltpu.MemorySpace.VMEM)

    # VMEM budget (whole-tensor residency at these shapes) + headroom; matters on v5e.
    f32, bf16 = 4, 2
    need = (T * Bp * E * bf16                 # x2d
            + Bp * 128 * f32                  # lens (lane-padded)
            + E * 6 * H * bf16                # wih
            + 2 * H * 6 * H * bf16            # whh block-diag
            + (6 * H + 2 * H + H) * f32       # biases
            + H * H * f32                     # ws
            + T * Bp * 2 * H * f32            # hs out
            + Bp * H * f32                    # last out
            + T * Bp * 6 * H * f32            # xg scratch
            + Bp * 2 * H * f32)               # h carry scratch
    vmem_limit = int(min(max(2 * need + (4 << 20), 16 << 20), 48 << 20))

    hs2d, last = pl.pallas_call(
        kernel,
        out_shape=(
            jax.ShapeDtypeStruct((T * Bp, 2 * H), jnp.float32),
            jax.ShapeDtypeStruct((Bp, H), jnp.float32),
        ),
        in_specs=[vmem] * 8,
        out_specs=(vmem, vmem),
        scratch_shapes=[
            pltpu.VMEM((T * Bp, 6 * H), jnp.float32),   # fused pre-computed input gates
            pltpu.VMEM((Bp, 2 * H), jnp.float32),       # [fwd | bwd] hidden carry
        ],
        compiler_params=pltpu.CompilerParams(vmem_limit_bytes=vmem_limit),
    )(x2d, lens, kp["wih"], kp["bias_pre"], kp["whh"], kp["bhhn"], kp["ws"], kp["bs"])

    hidden_states = hs2d.reshape(T, Bp, 2 * H)[:, :B]   # (T, B, 2H), [fwd | bwd]
    # Padded batch rows carry h=0 -> tanh(bs) in `last`; harmless, sliced off here.
    last_hidden = last[:B]                              # (B, H)
    return hidden_states, last_hidden


def init_params(key, vocab, emb_dim, hidden):
    ks = jax.random.split(key, 11)
    s = 1.0 / float(hidden) ** 0.5

    def u(k, shape):
        return jax.random.uniform(k, shape, jnp.float32, minval=-s, maxval=s)

    return {
        "emb":   jax.random.normal(ks[0], (vocab, emb_dim), jnp.float32),
        # GRU weights: columns ordered [r | z | n] along the 3H axis, stored transposed
        # so gates = x @ wih + bih / h @ whh + bhh (PyTorch layout transposed).
        "wih_f": u(ks[1], (emb_dim, 3 * hidden)),
        "whh_f": u(ks[2], (hidden, 3 * hidden)),
        "bih_f": u(ks[3], (1, 3 * hidden)),
        "bhh_f": u(ks[4], (1, 3 * hidden)),
        "wih_b": u(ks[5], (emb_dim, 3 * hidden)),
        "whh_b": u(ks[6], (hidden, 3 * hidden)),
        "bih_b": u(ks[7], (1, 3 * hidden)),
        "bhh_b": u(ks[8], (1, 3 * hidden)),
        # w_s: Linear(hidden, hidden); stored transposed so out = h @ ws + bs
        "ws":    u(ks[9], (hidden, hidden)),
        "bs":    u(ks[10], (1, hidden)),
    }


if __name__ == "__main__":
    key = jax.random.PRNGKey(0)
    vocab, emb_dim, hidden = 50, 32, 32
    T, B = 8, 4

    pkey, wkey = jax.random.split(key)
    raw_params = init_params(pkey, vocab, emb_dim, hidden)
    kparams = prepare_params(raw_params)          # one-time fusion / bf16 cast

    words_in = jax.random.randint(wkey, (T, B), 0, vocab, dtype=jnp.int32)
    # Sorted descending (pack_padded_sequence requirement), max length == T.
    sent_lens = jnp.array([8, 7, 5, 3], dtype=jnp.int32)
    assert int(jnp.max(sent_lens)) == T, "kernel pads to T; require max(sent_lens) == T"

    hidden_states, last_hidden = encoder_forward(words_in, sent_lens, kparams)
    jax.block_until_ready((hidden_states, last_hidden))

    assert hidden_states.shape == (T, B, 2 * hidden)
    assert last_hidden.shape == (B, hidden)
    print("KERNEL_OK")
</pallas_src>

<mosaic_0001>
module attributes {stable_mosaic.version = 11 : i64} {
  func.func @_encoder_gru_kernel(%arg0: memref<64x32xbf16, #tpu.memory_space<vmem>>, %arg1: memref<8x1xi32, #tpu.memory_space<vmem>>, %arg2: memref<32x192xbf16, #tpu.memory_space<vmem>>, %arg3: memref<1x192xf32, #tpu.memory_space<vmem>>, %arg4: memref<64x192xbf16, #tpu.memory_space<vmem>>, %arg5: memref<1x64xf32, #tpu.memory_space<vmem>>, %arg6: memref<32x32xf32, #tpu.memory_space<vmem>>, %arg7: memref<1x32xf32, #tpu.memory_space<vmem>>, %arg8: memref<64x64xf32, #tpu.memory_space<vmem>>, %arg9: memref<8x32xf32, #tpu.memory_space<vmem>>, %arg10: memref<64x192xf32, #tpu.memory_space<vmem>>, %arg11: memref<8x64xf32, #tpu.memory_space<vmem>>) attributes {dimension_semantics = [], scalar_prefetch = 0 : i64, scratch_operands = 2 : i64, tpu.core_type = #tpu.core_type<tc>} {
    %c0 = arith.constant 0 : index
    %c0_0 = arith.constant 0 : index
    %0 = vector.load %arg0[%c0, %c0_0] : memref<64x32xbf16, #tpu.memory_space<vmem>>, vector<64x32xbf16>
    %c0_1 = arith.constant 0 : index
    %c0_2 = arith.constant 0 : index
    %1 = vector.load %arg2[%c0_1, %c0_2] : memref<32x192xbf16, #tpu.memory_space<vmem>>, vector<32x192xbf16>
    %cst = arith.constant dense<0.000000e+00> : vector<64x192xf32>
    %2 = tpu.matmul %0, %1, %cst {dimension_numbers = #tpu.dot_dimension_numbers<[1], [0], [0], [1], [0, 0, 1, 1], [], []>} : vector<64x32xbf16>, vector<32x192xbf16>, vector<64x192xf32> -> vector<64x192xf32>
    %c0_3 = arith.constant 0 : index
    %c0_4 = arith.constant 0 : index
    %3 = vector.load %arg3[%c0_3, %c0_4] : memref<1x192xf32, #tpu.memory_space<vmem>>, vector<1x192xf32>
    %4 = vector.broadcast %3 : vector<1x192xf32> to vector<64x192xf32>
    %5 = arith.addf %2, %4 : vector<64x192xf32>
    %c0_5 = arith.constant 0 : index
    %c0_6 = arith.constant 0 : index
    %6 = vector.load %arg10[%c0_5, %c0_6] : memref<64x192xf32, #tpu.memory_space<vmem>>, vector<64x192xf32>
    tpu.vector_store %arg10[%c0_5, %c0_6], %5 {strides = array<i32>} : memref<64x192xf32, #tpu.memory_space<vmem>>, vector<64x192xf32>,
    %c0_7 = arith.constant 0 : index
    %c0_8 = arith.constant 0 : index
    %7 = vector.load %arg1[%c0_7, %c0_8] : memref<8x1xi32, #tpu.memory_space<vmem>>, vector<8x1xi32>
    %c0_9 = arith.constant 0 : index
    %c0_10 = arith.constant 0 : index
    %8 = vector.load %arg5[%c0_9, %c0_10] : memref<1x64xf32, #tpu.memory_space<vmem>>, vector<1x64xf32>
    %9 = vector.extract_strided_slice %8 {offsets = [0, 0], sizes = [1, 32], strides = [1, 1]} : vector<1x64xf32> to vector<1x32xf32>
    %10 = vector.shape_cast %9 : vector<1x32xf32> to vector<1x32xf32>
    %11 = vector.broadcast %10 : vector<1x32xf32> to vector<8x32xf32>
    %12 = vector.extract_strided_slice %8 {offsets = [0, 32], sizes = [1, 32], strides = [1, 1]} : vector<1x64xf32> to vector<1x32xf32>
    %13 = vector.shape_cast %12 : vector<1x32xf32> to vector<1x32xf32>
    %14 = vector.broadcast %13 : vector<1x32xf32> to vector<8x32xf32>
    %cst_11 = arith.constant 0.000000e+00 : f32
    %15 = vector.broadcast %cst_11 : f32 to vector<8x64xf32>
    %c0_12 = arith.constant 0 : index
    %c0_13 = arith.constant 0 : index
    %16 = vector.load %arg11[%c0_12, %c0_13] : memref<8x64xf32, #tpu.memory_space<vmem>>, vector<8x64xf32>
    tpu.vector_store %arg11[%c0_12, %c0_13], %15 {strides = array<i32>} : memref<8x64xf32, #tpu.memory_space<vmem>>, vector<8x64xf32>,
    %c0_i32 = arith.constant 0 : i32
    %c7_i32 = arith.constant 7 : i32
    %17 = arith.subi %c7_i32, %c0_i32 : i32
    %c8_i32 = arith.constant 8 : i32
    %18 = arith.muli %c0_i32, %c8_i32 : i32
    %19 = tpu.assume_multiple %18, 8 : i32
    %c8_i32_14 = arith.constant 8 : i32
    %20 = arith.muli %17, %c8_i32_14 : i32
    %21 = tpu.assume_multiple %20, 8 : i32
    %c0_15 = arith.constant 0 : index
    %c0_16 = arith.constant 0 : index
    %22 = vector.load %arg11[%c0_15, %c0_16] : memref<8x64xf32, #tpu.memory_space<vmem>>, vector<8x64xf32>
    %23 = vector.extract_strided_slice %22 {offsets = [0, 0], sizes = [8, 32], strides = [1, 1]} : vector<8x64xf32> to vector<8x32xf32>
    %24 = vector.extract_strided_slice %22 {offsets = [0, 32], sizes = [8, 32], strides = [1, 1]} : vector<8x64xf32> to vector<8x32xf32>
    %25 = arith.truncf %22 : vector<8x64xf32> to vector<8x64xbf16>
    %c0_17 = arith.constant 0 : index
    %c0_18 = arith.constant 0 : index
    %26 = vector.load %arg4[%c0_17, %c0_18] : memref<64x192xbf16, #tpu.memory_space<vmem>>, vector<64x192xbf16>
    %cst_19 = arith.constant dense<0.000000e+00> : vector<8x192xf32>
    %27 = tpu.matmul %25, %26, %cst_19 {dimension_numbers = #tpu.dot_dimension_numbers<[1], [0], [0], [1], [0, 0, 1, 1], [], []>} : vector<8x64xbf16>, vector<64x192xbf16>, vector<8x192xf32> -> vector<8x192xf32>
    %28 = arith.index_cast %19 : i32 to index
    %c0_20 = arith.constant 0 : index
    %29 = vector.load %arg10[%28, %c0_20] : memref<64x192xf32, #tpu.memory_space<vmem>>, vector<8x96xf32>
    %30 = arith.index_cast %21 : i32 to index
    %c96 = arith.constant 96 : index
    %31 = vector.load %arg10[%30, %c96] : memref<64x192xf32, #tpu.memory_space<vmem>>, vector<8x96xf32>
    %32 = vector.extract_strided_slice %27 {offsets = [0, 0], sizes = [8, 96], strides = [1, 1]} : vector<8x192xf32> to vector<8x96xf32>
    %33 = vector.extract_strided_slice %29 {offsets = [0, 0], sizes = [8, 64], strides = [1, 1]} : vector<8x96xf32> to vector<8x64xf32>
    %34 = vector.extract_strided_slice %32 {offsets = [0, 0], sizes = [8, 64], strides = [1, 1]} : vector<8x96xf32> to vector<8x64xf32>
    %35 = arith.addf %33, %34 : vector<8x64xf32>
    %36 = arith.negf %35 : vector<8x64xf32>
    %37 = math.exp %36 : vector<8x64xf32>
    %cst_21 = arith.constant 1.000000e+00 : f32
    %38 = vector.broadcast %cst_21 : f32 to vector<8x64xf32>
    %39 = arith.addf %38, %37 : vector<8x64xf32>
    %40 = arith.divf %38, %39 : vector<8x64xf32>
    %41 = vector.extract_strided_slice %40 {offsets = [0, 0], sizes = [8, 32], strides = [1, 1]} : vector<8x64xf32> to vector<8x32xf32>
    %42 = vector.extract_strided_slice %40 {offsets = [0, 32], sizes = [8, 32], strides = [1, 1]} : vector<8x64xf32> to vector<8x32xf32>
    %43 = vector.extract_strided_slice %29 {offsets = [0, 64], sizes = [8, 32], strides = [1, 1]} : vector<8x96xf32> to vector<8x32xf32>
    %44 = vector.extract_strided_slice %32 {offsets = [0, 64], sizes = [8, 32], strides = [1, 1]} : vector<8x96xf32> to vector<8x32xf32>
    %45 = arith.addf %44, %11 : vector<8x32xf32>
    %46 = arith.mulf %41, %45 : vector<8x32xf32>
    %47 = arith.addf %43, %46 : vector<8x32xf32>
    %48 = math.tanh %47 : vector<8x32xf32>
    %cst_22 = arith.constant 1.000000e+00 : f32
    %49 = vector.broadcast %cst_22 : f32 to vector<8x32xf32>
    %50 = arith.subf %49, %42 : vector<8x32xf32>
    %51 = arith.mulf %50, %48 : vector<8x32xf32>
    %52 = arith.mulf %42, %23 : vector<8x32xf32>
    %53 = arith.addf %51, %52 : vector<8x32xf32>
    %54 = vector.extract_strided_slice %27 {offsets = [0, 96], sizes = [8, 96], strides = [1, 1]} : vector<8x192xf32> to vector<8x96xf32>
    %55 = vector.extract_strided_slice %31 {offsets = [0, 0], sizes = [8, 64], strides = [1, 1]} : vector<8x96xf32> to vector<8x64xf32>
    %56 = vector.extract_strided_slice %54 {offsets = [0, 0], sizes = [8, 64], strides = [1, 1]} : vector<8x96xf32> to vector<8x64xf32>
    %57 = arith.addf %55, %56 : vector<8x64xf32>
    %58 = arith.negf %57 : vector<8x64xf32>
    %59 = math.exp %58 : vector<8x64xf32>
    %cst_23 = arith.constant 1.000000e+00 : f32
    %60 = vector.broadcast %cst_23 : f32 to vector<8x64xf32>
    %61 = arith.addf %60, %59 : vector<8x64xf32>
    %62 = arith.divf %60, %61 : vector<8x64xf32>
    %63 = vector.extract_strided_slice %62 {offsets = [0, 0], sizes = [8, 32], strides = [1, 1]} : vector<8x64xf32> to vector<8x32xf32>
    %64 = vector.extract_strided_slice %62 {offsets = [0, 32], sizes = [8, 32], strides = [1, 1]} : vector<8x64xf32> to vector<8x32xf32>
    %65 = vector.extract_strided_slice %31 {offsets = [0, 64], sizes = [8, 32], strides = [1, 1]} : vector<8x96xf32> to vector<8x32xf32>
    %66 = vector.extract_strided_slice %54 {offsets = [0, 64], sizes = [8, 32], strides = [1, 1]} : vector<8x96xf32> to vector<8x32xf32>
    %67 = arith.addf %66, %14 : vector<8x32xf32>
    %68 = arith.mulf %63, %67 : vector<8x32xf32>
    %69 = arith.addf %65, %68 : vector<8x32xf32>
    %70 = math.tanh %69 : vector<8x32xf32>
    %cst_24 = arith.constant 1.000000e+00 : f32
    %71 = vector.broadcast %cst_24 : f32 to vector<8x32xf32>
    %72 = arith.subf %71, %64 : vector<8x32xf32>
    %73 = arith.mulf %72, %70 : vector<8x32xf32>
    %74 = arith.mulf %64, %24 : vector<8x32xf32>
    %75 = arith.addf %73, %74 : vector<8x32xf32>
    %76 = vector.broadcast %c0_i32 : i32 to vector<8x1xi32>
    %77 = arith.cmpi sgt, %7, %76 : vector<8x1xi32>
    %78 = vector.broadcast %17 : i32 to vector<8x1xi32>
    %79 = arith.cmpi sgt, %7, %78 : vector<8x1xi32>
    %cst_25 = arith.constant 0.000000e+00 : f32
    %80 = vector.shape_cast %77 : vector<8x1xi1> to vector<8x1xi1>
    %81 = vector.broadcast %80 : vector<8x1xi1> to vector<8x32xi1>
    %82 = vector.broadcast %cst_25 : f32 to vector<8x32xf32>
    %83 = arith.select %81, %53, %82 : vector<8x32xi1>, vector<8x32xf32>
    %cst_26 = arith.constant 0.000000e+00 : f32
    %84 = vector.shape_cast %79 : vector<8x1xi1> to vector<8x1xi1>
    %85 = vector.broadcast %84 : vector<8x1xi1> to vector<8x32xi1>
    %86 = vector.broadcast %cst_26 : f32 to vector<8x32xf32>
    %87 = arith.select %85, %75, %86 : vector<8x32xi1>, vector<8x32xf32>
    %88 = arith.index_cast %19 : i32 to index
    %c0_27 = arith.constant 0 : index
    %89 = vector.load %arg8[%88, %c0_27] : memref<64x64xf32, #tpu.memory_space<vmem>>, vector<8x32xf32>
    tpu.vector_store %arg8[%88, %c0_27], %83 {strides = array<i32>} : memref<64x64xf32, #tpu.memory_space<vmem>>, vector<8x32xf32>,
    %90 = arith.index_cast %21 : i32 to index
    %c32 = arith.constant 32 : index
    %91 = vector.load %arg8[%90, %c32] : memref<64x64xf32, #tpu.memory_space<vmem>>, vector<8x32xf32>
    tpu.vector_store %arg8[%90, %c32], %87 {strides = array<i32>} : memref<64x64xf32, #tpu.memory_space<vmem>>, vector<8x32xf32>,
    %92 = vector.shape_cast %77 : vector<8x1xi1> to vector<8x1xi1>
    %93 = vector.broadcast %92 : vector<8x1xi1> to vector<8x32xi1>
    %94 = arith.select %93, %53, %23 : vector<8x32xi1>, vector<8x32xf32>
    %c0_28 = arith.constant 0 : index
    %c0_29 = arith.constant 0 : index
    %95 = vector.load %arg11[%c0_28, %c0_29] : memref<8x64xf32, #tpu.memory_space<vmem>>, vector<8x32xf32>
    tpu.vector_store %arg11[%c0_28, %c0_29], %94 {strides = array<i32>} : memref<8x64xf32, #tpu.memory_space<vmem>>, vector<8x32xf32>,
    %96 = vector.shape_cast %79 : vector<8x1xi1> to vector<8x1xi1>
    %97 = vector.broadcast %96 : vector<8x1xi1> to vector<8x32xi1>
    %98 = arith.select %97, %75, %24 : vector<8x32xi1>, vector<8x32xf32>
    %c0_30 = arith.constant 0 : index
    %c32_31 = arith.constant 32 : index
    %99 = vector.load %arg11[%c0_30, %c32_31] : memref<8x64xf32, #tpu.memory_space<vmem>>, vector<8x32xf32>
    tpu.vector_store %arg11[%c0_30, %c32_31], %98 {strides = array<i32>} : memref<8x64xf32, #tpu.memory_space<vmem>>, vector<8x32xf32>,
    %c1_i32 = arith.constant 1 : i32
    %c7_i32_32 = arith.constant 7 : i32
    %100 = arith.subi %c7_i32_32, %c1_i32 : i32
    %c8_i32_33 = arith.constant 8 : i32
    %101 = arith.muli %c1_i32, %c8_i32_33 : i32
    %102 = tpu.assume_multiple %101, 8 : i32
    %c8_i32_34 = arith.constant 8 : i32
    %103 = arith.muli %100, %c8_i32_34 : i32
    %104 = tpu.assume_multiple %103, 8 : i32
    %c0_35 = arith.constant 0 : index
    %c0_36 = arith.constant 0 : index
    %105 = vector.load %arg11[%c0_35, %c0_36] : memref<8x64xf32, #tpu.memory_space<vmem>>, vector<8x64xf32>
    %106 = vector.extract_strided_slice %105 {offsets = [0, 0], sizes = [8, 32], strides = [1, 1]} : vector<8x64xf32> to vector<8x32xf32>
    %107 = vector.extract_strided_slice %105 {offsets = [0, 32], sizes = [8, 32], strides = [1, 1]} : vector<8x64xf32> to vector<8x32xf32>
    %108 = arith.truncf %105 : vector<8x64xf32> to vector<8x64xbf16>
    %c0_37 = arith.constant 0 : index
    %c0_38 = arith.constant 0 : index
    %109 = vector.load %arg4[%c0_37, %c0_38] : memref<64x192xbf16, #tpu.memory_space<vmem>>, vector<64x192xbf16>
    %cst_39 = arith.constant dense<0.000000e+00> : vector<8x192xf32>
    %110 = tpu.matmul %108, %109, %cst_39 {dimension_numbers = #tpu.dot_dimension_numbers<[1], [0], [0], [1], [0, 0, 1, 1], [], []>} : vector<8x64xbf16>, vector<64x192xbf16>, vector<8x192xf32> -> vector<8x192xf32>
    %111 = arith.index_cast %102 : i32 to index
    %c0_40 = arith.constant 0 : index
    %112 = vector.load %arg10[%111, %c0_40] : memref<64x192xf32, #tpu.memory_space<vmem>>, vector<8x96xf32>
    %113 = arith.index_cast %104 : i32 to index
    %c96_41 = arith.constant 96 : index
    %114 = vector.load %arg10[%113, %c96_41] : memref<64x192xf32, #tpu.memory_space<vmem>>, vector<8x96xf32>
    %115 = vector.extract_strided_slice %110 {offsets = [0, 0], sizes = [8, 96], strides = [1, 1]} : vector<8x192xf32> to vector<8x96xf32>
    %116 = vector.extract_strided_slice %112 {offsets = [0, 0], sizes = [8, 64], strides = [1, 1]} : vector<8x96xf32> to vector<8x64xf32>
    %117 = vector.extract_strided_slice %115 {offsets = [0, 0], sizes = [8, 64], strides = [1, 1]} : vector<8x96xf32> to vector<8x64xf32>
    %118 = arith.addf %116, %117 : vector<8x64xf32>
    %119 = arith.negf %118 : vector<8x64xf32>
    %120 = math.exp %119 : vector<8x64xf32>
    %cst_42 = arith.constant 1.000000e+00 : f32
    %121 = vector.broadcast %cst_42 : f32 to vector<8x64xf32>
    %122 = arith.addf %121, %120 : vector<8x64xf32>
    %123 = arith.divf %121, %122 : vector<8x64xf32>
    %124 = vector.extract_strided_slice %123 {offsets = [0, 0], sizes = [8, 32], strides = [1, 1]} : vector<8x64xf32> to vector<8x32xf32>
    %125 = vector.extract_strided_slice %123 {offsets = [0, 32], sizes = [8, 32], strides = [1, 1]} : vector<8x64xf32> to vector<8x32xf32>
    %126 = vector.extract_strided_slice %112 {offsets = [0, 64], sizes = [8, 32], strides = [1, 1]} : vector<8x96xf32> to vector<8x32xf32>
    %127 = vector.extract_strided_slice %115 {offsets = [0, 64], sizes = [8, 32], strides = [1, 1]} : vector<8x96xf32> to vector<8x32xf32>
    %128 = arith.addf %127, %11 : vector<8x32xf32>
    %129 = arith.mulf %124, %128 : vector<8x32xf32>
    %130 = arith.addf %126, %129 : vector<8x32xf32>
    %131 = math.tanh %130 : vector<8x32xf32>
    %cst_43 = arith.constant 1.000000e+00 : f32
    %132 = vector.broadcast %cst_43 : f32 to vector<8x32xf32>
    %133 = arith.subf %132, %125 : vector<8x32xf32>
    %134 = arith.mulf %133, %131 : vector<8x32xf32>
    %135 = arith.mulf %125, %106 : vector<8x32xf32>
    %136 = arith.addf %134, %135 : vector<8x32xf32>
    %137 = vector.extract_strided_slice %110 {offsets = [0, 96], sizes = [8, 96], strides = [1, 1]} : vector<8x192xf32> to vector<8x96xf32>
    %138 = vector.extract_strided_slice %114 {offsets = [0, 0], sizes = [8, 64], strides = [1, 1]} : vector<8x96xf32> to vector<8x64xf32>
    %139 = vector.extract_strided_slice %137 {offsets = [0, 0], sizes = [8, 64], strides = [1, 1]} : vector<8x96xf32> to vector<8x64xf32>
    %140 = arith.addf %138, %139 : vector<8x64xf32>
    %141 = arith.negf %140 : vector<8x64xf32>
    %142 = math.exp %141 : vector<8x64xf32>
    %cst_44 = arith.constant 1.000000e+00 : f32
    %143 = vector.broadcast %cst_44 : f32 to vector<8x64xf32>
    %144 = arith.addf %143, %142 : vector<8x64xf32>
    %145 = arith.divf %143, %144 : vector<8x64xf32>
    %146 = vector.extract_strided_slice %145 {offsets = [0, 0], sizes = [8, 32], strides = [1, 1]} : vector<8x64xf32> to vector<8x32xf32>
    %147 = vector.extract_strided_slice %145 {offsets = [0, 32], sizes = [8, 32], strides = [1, 1]} : vector<8x64xf32> to vector<8x32xf32>
    %148 = vector.extract_strided_slice %114 {offsets = [0, 64], sizes = [8, 32], strides = [1, 1]} : vector<8x96xf32> to vector<8x32xf32>
    %149 = vector.extract_strided_slice %137 {offsets = [0, 64], sizes = [8, 32], strides = [1, 1]} : vector<8x96xf32> to vector<8x32xf32>
    %150 = arith.addf %149, %14 : vector<8x32xf32>
    %151 = arith.mulf %146, %150 : vector<8x32xf32>
    %152 = arith.addf %148, %151 : vector<8x32xf32>
    %153 = math.tanh %152 : vector<8x32xf32>
    %cst_45 = arith.constant 1.000000e+00 : f32
    %154 = vector.broadcast %cst_45 : f32 to vector<8x32xf32>
    %155 = arith.subf %154, %147 : vector<8x32xf32>
    %156 = arith.mulf %155, %153 : vector<8x32xf32>
    %157 = arith.mulf %147, %107 : vector<8x32xf32>
    %158 = arith.addf %156, %157 : vector<8x32xf32>
    %159 = vector.broadcast %c1_i32 : i32 to vector<8x1xi32>
    %160 = arith.cmpi sgt, %7, %159 : vector<8x1xi32>
    %161 = vector.broadcast %100 : i32 to vector<8x1xi32>
    %162 = arith.cmpi sgt, %7, %161 : vector<8x1xi32>
    %cst_46 = arith.constant 0.000000e+00 : f32
    %163 = vector.shape_cast %160 : vector<8x1xi1> to vector<8x1xi1>
    %164 = vector.broadcast %163 : vector<8x1xi1> to vector<8x32xi1>
    %165 = vector.broadcast %cst_46 : f32 to vector<8x32xf32>
    %166 = arith.select %164, %136, %165 : vector<8x32xi1>, vector<8x32xf32>
    %cst_47 = arith.constant 0.000000e+00 : f32
    %167 = vector.shape_cast %162 : vector<8x1xi1> to vector<8x1xi1>
    %168 = vector.broadcast %167 : vector<8x1xi1> to vector<8x32xi1>
    %169 = vector.broadcast %cst_47 : f32 to vector<8x32xf32>
    %170 = arith.select %168, %158, %169 : vector<8x32xi1>, vector<8x32xf32>
    %171 = arith.index_cast %102 : i32 to index
    %c0_48 = arith.constant 0 : index
    %172 = vector.load %arg8[%171, %c0_48] : memref<64x64xf32, #tpu.memory_space<vmem>>, vector<8x32xf32>
    tpu.vector_store %arg8[%171, %c0_48], %166 {strides = array<i32>} : memref<64x64xf32, #tpu.memory_space<vmem>>, vector<8x32xf32>,
    %173 = arith.index_cast %104 : i32 to index
    %c32_49 = arith.constant 32 : index
    %174 = vector.load %arg8[%173, %c32_49] : memref<64x64xf32, #tpu.memory_space<vmem>>, vector<8x32xf32>
    tpu.vector_store %arg8[%173, %c32_49], %170 {strides = array<i32>} : memref<64x64xf32, #tpu.memory_space<vmem>>, vector<8x32xf32>,
    %175 = vector.shape_cast %160 : vector<8x1xi1> to vector<8x1xi1>
    %176 = vector.broadcast %175 : vector<8x1xi1> to vector<8x32xi1>
    %177 = arith.select %176, %136, %106 : vector<8x32xi1>, vector<8x32xf32>
    %c0_50 = arith.constant 0 : index
    %c0_51 = arith.constant 0 : index
    %178 = vector.load %arg11[%c0_50, %c0_51] : memref<8x64xf32, #tpu.memory_space<vmem>>, vector<8x32xf32>
    tpu.vector_store %arg11[%c0_50, %c0_51], %177 {strides = array<i32>} : memref<8x64xf32, #tpu.memory_space<vmem>>, vector<8x32xf32>,
    %179 = vector.shape_cast %162 : vector<8x1xi1> to vector<8x1xi1>
    %180 = vector.broadcast %179 : vector<8x1xi1> to vector<8x32xi1>
    %181 = arith.select %180, %158, %107 : vector<8x32xi1>, vector<8x32xf32>
    %c0_52 = arith.constant 0 : index
    %c32_53 = arith.constant 32 : index
    %182 = vector.load %arg11[%c0_52, %c32_53] : memref<8x64xf32, #tpu.memory_space<vmem>>, vector<8x32xf32>
    tpu.vector_store %arg11[%c0_52, %c32_53], %181 {strides = array<i32>} : memref<8x64xf32, #tpu.memory_space<vmem>>, vector<8x32xf32>,
    %c2_i32 = arith.constant 2 : i32
    %c7_i32_54 = arith.constant 7 : i32
    %183 = arith.subi %c7_i32_54, %c2_i32 : i32
    %c8_i32_55 = arith.constant 8 : i32
    %184 = arith.muli %c2_i32, %c8_i32_55 : i32
    %185 = tpu.assume_multiple %184, 8 : i32
    %c8_i32_56 = arith.constant 8 : i32
    %186 = arith.muli %183, %c8_i32_56 : i32
    %187 = tpu.assume_multiple %186, 8 : i32
    %c0_57 = arith.constant 0 : index
    %c0_58 = arith.constant 0 : index
    %188 = vector.load %arg11[%c0_57, %c0_58] : memref<8x64xf32, #tpu.memory_space<vmem>>, vector<8x64xf32>
    %189 = vector.extract_strided_slice %188 {offsets = [0, 0], sizes = [8, 32], strides = [1, 1]} : vector<8x64xf32> to vector<8x32xf32>
    %190 = vector.extract_strided_slice %188 {offsets = [0, 32], sizes = [8, 32], strides = [1, 1]} : vector<8x64xf32> to vector<8x32xf32>
    %191 = arith.truncf %188 : vector<8x64xf32> to vector<8x64xbf16>
    %c0_59 = arith.constant 0 : index
    %c0_60 = arith.constant 0 : index
    %192 = vector.load %arg4[%c0_59, %c0_60] : memref<64x192xbf16, #tpu.memory_space<vmem>>, vector<64x192xbf16>
    %cst_61 = arith.constant dense<0.000000e+00> : vector<8x192xf32>
    %193 = tpu.matmul %191, %192, %cst_61 {dimension_numbers = #tpu.dot_dimension_numbers<[1], [0], [0], [1], [0, 0, 1, 1], [], []>} : vector<8x64xbf16>, vector<64x192xbf16>, vector<8x192xf32> -> vector<8x192xf32>
    %194 = arith.index_cast %185 : i32 to index
    %c0_62 = arith.constant 0 : index
    %195 = vector.load %arg10[%194, %c0_62] : memref<64x192xf32, #tpu.memory_space<vmem>>, vector<8x96xf32>
    %196 = arith.index_cast %187 : i32 to index
    %c96_63 = arith.constant 96 : index
    %197 = vector.load %arg10[%196, %c96_63] : memref<64x192xf32, #tpu.memory_space<vmem>>, vector<8x96xf32>
    %198 = vector.extract_strided_slice %193 {offsets = [0, 0], sizes = [8, 96], strides = [1, 1]} : vector<8x192xf32> to vector<8x96xf32>
    %199 = vector.extract_strided_slice %195 {offsets = [0, 0], sizes = [8, 64], strides = [1, 1]} : vector<8x96xf32> to vector<8x64xf32>
    %200 = vector.extract_strided_slice %198 {offsets = [0, 0], sizes = [8, 64], strides = [1, 1]} : vector<8x96xf32> to vector<8x64xf32>
    %201 = arith.addf %199, %200 : vector<8x64xf32>
    %202 = arith.negf %201 : vector<8x64xf32>
    %203 = math.exp %202 : vector<8x64xf32>
    %cst_64 = arith.constant 1.000000e+00 : f32
    %204 = vector.broadcast %cst_64 : f32 to vector<8x64xf32>
    %205 = arith.addf %204, %203 : vector<8x64xf32>
    %206 = arith.divf %204, %205 : vector<8x64xf32>
    %207 = vector.extract_strided_slice %206 {offsets = [0, 0], sizes = [8, 32], strides = [1, 1]} : vector<8x64xf32> to vector<8x32xf32>
    %208 = vector.extract_strided_slice %206 {offsets = [0, 32], sizes = [8, 32], strides = [1, 1]} : vector<8x64xf32> to vector<8x32xf32>
    %209 = vector.extract_strided_slice %195 {offsets = [0, 64], sizes = [8, 32], strides = [1, 1]} : vector<8x96xf32> to vector<8x32xf32>
    %210 = vector.extract_strided_slice %198 {offsets = [0, 64], sizes = [8, 32], strides = [1, 1]} : vector<8x96xf32> to vector<8x32xf32>
    %211 = arith.addf %210, %11 : vector<8x32xf32>
    %212 = arith.mulf %207, %211 : vector<8x32xf32>
    %213 = arith.addf %209, %212 : vector<8x32xf32>
    %214 = math.tanh %213 : vector<8x32xf32>
    %cst_65 = arith.constant 1.000000e+00 : f32
    %215 = vector.broadcast %cst_65 : f32 to vector<8x32xf32>
    %216 = arith.subf %215, %208 : vector<8x32xf32>
    %217 = arith.mulf %216, %214 : vector<8x32xf32>
    %218 = arith.mulf %208, %189 : vector<8x32xf32>
    %219 = arith.addf %217, %218 : vector<8x32xf32>
    %220 = vector.extract_strided_slice %193 {offsets = [0, 96], sizes = [8, 96], strides = [1, 1]} : vector<8x192xf32> to vector<8x96xf32>
    %221 = vector.extract_strided_slice %197 {offsets = [0, 0], sizes = [8, 64], strides = [1, 1]} : vector<8x96xf32> to vector<8x64xf32>
    %222 = vector.extract_strided_slice %220 {offsets = [0, 0], sizes = [8, 64], strides = [1, 1]} : vector<8x96xf32> to vector<8x64xf32>
    %223 = arith.addf %221, %222 : vector<8x64xf32>
    %224 = arith.negf %223 : vector<8x64xf32>
    %225 = math.exp %224 : vector<8x64xf32>
    %cst_66 = arith.constant 1.000000e+00 : f32
    %226 = vector.broadcast %cst_66 : f32 to vector<8x64xf32>
    %227 = arith.addf %226, %225 : vector<8x64xf32>
    %228 = arith.divf %226, %227 : vector<8x64xf32>
    %229 = vector.extract_strided_slice %228 {offsets = [0, 0], sizes = [8, 32], strides = [1, 1]} : vector<8x64xf32> to vector<8x32xf32>
    %230 = vector.extract_strided_slice %228 {offsets = [0, 32], sizes = [8, 32], strides = [1, 1]} : vector<8x64xf32> to vector<8x32xf32>
    %231 = vector.extract_strided_slice %197 {offsets = [0, 64], sizes = [8, 32], strides = [1, 1]} : vector<8x96xf32> to vector<8x32xf32>
    %232 = vector.extract_strided_slice %220 {offsets = [0, 64], sizes = [8, 32], strides = [1, 1]} : vector<8x96xf32> to vector<8x32xf32>
    %233 = arith.addf %232, %14 : vector<8x32xf32>
    %234 = arith.mulf %229, %233 : vector<8x32xf32>
    %235 = arith.addf %231, %234 : vector<8x32xf32>
    %236 = math.tanh %235 : vector<8x32xf32>
    %cst_67 = arith.constant 1.000000e+00 : f32
    %237 = vector.broadcast %cst_67 : f32 to vector<8x32xf32>
    %238 = arith.subf %237, %230 : vector<8x32xf32>
    %239 = arith.mulf %238, %236 : vector<8x32xf32>
    %240 = arith.mulf %230, %190 : vector<8x32xf32>
    %241 = arith.addf %239, %240 : vector<8x32xf32>
    %242 = vector.broadcast %c2_i32 : i32 to vector<8x1xi32>
    %243 = arith.cmpi sgt, %7, %242 : vector<8x1xi32>
    %244 = vector.broadcast %183 : i32 to vector<8x1xi32>
    %245 = arith.cmpi sgt, %7, %244 : vector<8x1xi32>
    %cst_68 = arith.constant 0.000000e+00 : f32
    %246 = vector.shape_cast %243 : vector<8x1xi1> to vector<8x1xi1>
    %247 = vector.broadcast %246 : vector<8x1xi1> to vector<8x32xi1>
    %248 = vector.broadcast %cst_68 : f32 to vector<8x32xf32>
    %249 = arith.select %247, %219, %248 : vector<8x32xi1>, vector<8x32xf32>
    %cst_69 = arith.constant 0.000000e+00 : f32
    %250 = vector.shape_cast %245 : vector<8x1xi1> to vector<8x1xi1>
    %251 = vector.broadcast %250 : vector<8x1xi1> to vector<8x32xi1>
    %252 = vector.broadcast %cst_69 : f32 to vector<8x32xf32>
    %253 = arith.select %251, %241, %252 : vector<8x32xi1>, vector<8x32xf32>
    %254 = arith.index_cast %185 : i32 to index
    %c0_70 = arith.constant 0 : index
    %255 = vector.load %arg8[%254, %c0_70] : memref<64x64xf32, #tpu.memory_space<vmem>>, vector<8x32xf32>
    tpu.vector_store %arg8[%254, %c0_70], %249 {strides = array<i32>} : memref<64x64xf32, #tpu.memory_space<vmem>>, vector<8x32xf32>,
    %256 = arith.index_cast %187 : i32 to index
    %c32_71 = arith.constant 32 : index
    %257 = vector.load %arg8[%256, %c32_71] : memref<64x64xf32, #tpu.memory_space<vmem>>, vector<8x32xf32>
    tpu.vector_store %arg8[%256, %c32_71], %253 {strides = array<i32>} : memref<64x64xf32, #tpu.memory_space<vmem>>, vector<8x32xf32>,
    %258 = vector.shape_cast %243 : vector<8x1xi1> to vector<8x1xi1>
    %259 = vector.broadcast %258 : vector<8x1xi1> to vector<8x32xi1>
    %260 = arith.select %259, %219, %189 : vector<8x32xi1>, vector<8x32xf32>
    %c0_72 = arith.constant 0 : index
    %c0_73 = arith.constant 0 : index
    %261 = vector.load %arg11[%c0_72, %c0_73] : memref<8x64xf32, #tpu.memory_space<vmem>>, vector<8x32xf32>
    tpu.vector_store %arg11[%c0_72, %c0_73], %260 {strides = array<i32>} : memref<8x64xf32, #tpu.memory_space<vmem>>, vector<8x32xf32>,
    %262 = vector.shape_cast %245 : vector<8x1xi1> to vector<8x1xi1>
    %263 = vector.broadcast %262 : vector<8x1xi1> to vector<8x32xi1>
    %264 = arith.select %263, %241, %190 : vector<8x32xi1>, vector<8x32xf32>
    %c0_74 = arith.constant 0 : index
    %c32_75 = arith.constant 32 : index
    %265 = vector.load %arg11[%c0_74, %c32_75] : memref<8x64xf32, #tpu.memory_space<vmem>>, vector<8x32xf32>
    tpu.vector_store %arg11[%c0_74, %c32_75], %264 {strides = array<i32>} : memref<8x64xf32, #tpu.memory_space<vmem>>, vector<8x32xf32>,
    %c3_i32 = arith.constant 3 : i32
    %c7_i32_76 = arith.constant 7 : i32
    %266 = arith.subi %c7_i32_76, %c3_i32 : i32
    %c8_i32_77 = arith.constant 8 : i32
    %267 = arith.muli %c3_i32, %c8_i32_77 : i32
    %268 = tpu.assume_multiple %267, 8 : i32
    %c8_i32_78 = arith.constant 8 : i32
    %269 = arith.muli %266, %c8_i32_78 : i32
    %270 = tpu.assume_multiple %269, 8 : i32
    %c0_79 = arith.constant 0 : index
    %c0_80 = arith.constant 0 : index
    %271 = vector.load %arg11[%c0_79, %c0_80] : memref<8x64xf32, #tpu.memory_space<vmem>>, vector<8x64xf32>
    %272 = vector.extract_strided_slice %271 {offsets = [0, 0], sizes = [8, 32], strides = [1, 1]} : vector<8x64xf32> to vector<8x32xf32>
    %273 = vector.extract_strided_slice %271 {offsets = [0, 32], sizes = [8, 32], strides = [1, 1]} : vector<8x64xf32> to vector<8x32xf32>
    %274 = arith.truncf %271 : vector<8x64xf32> to vector<8x64xbf16>
    %c0_81 = arith.constant 0 : index
    %c0_82 = arith.constant 0 : index
    %275 = vector.load %arg4[%c0_81, %c0_82] : memref<64x192xbf16, #tpu.memory_space<vmem>>, vector<64x192xbf16>
    %cst_83 = arith.constant dense<0.000000e+00> : vector<8x192xf32>
    %276 = tpu.matmul %274, %275, %cst_83 {dimension_numbers = #tpu.dot_dimension_numbers<[1], [0], [0], [1], [0, 0, 1, 1], [], []>} : vector<8x64xbf16>, vector<64x192xbf16>, vector<8x192xf32> -> vector<8x192xf32>
    %277 = arith.index_cast %268 : i32 to index
    %c0_84 = arith.constant 0 : index
    %278 = vector.load %arg10[%277, %c0_84] : memref<64x192xf32, #tpu.memory_space<vmem>>, vector<8x96xf32>
    %279 = arith.index_cast %270 : i32 to index
    %c96_85 = arith.constant 96 : index
    %280 = vector.load %arg10[%279, %c96_85] : memref<64x192xf32, #tpu.memory_space<vmem>>, vector<8x96xf32>
    %281 = vector.extract_strided_slice %276 {offsets = [0, 0], sizes = [8, 96], strides = [1, 1]} : vector<8x192xf32> to vector<8x96xf32>
    %282 = vector.extract_strided_slice %278 {offsets = [0, 0], sizes = [8, 64], strides = [1, 1]} : vector<8x96xf32> to vector<8x64xf32>
    %283 = vector.extract_strided_slice %281 {offsets = [0, 0], sizes = [8, 64], strides = [1, 1]} : vector<8x96xf32> to vector<8x64xf32>
    %284 = arith.addf %282, %283 : vector<8x64xf32>
    %285 = arith.negf %284 : vector<8x64xf32>
    %286 = math.exp %285 : vector<8x64xf32>
    %cst_86 = arith.constant 1.000000e+00 : f32
    %287 = vector.broadcast %cst_86 : f32 to vector<8x64xf32>
    %288 = arith.addf %287, %286 : vector<8x64xf32>
    %289 = arith.divf %287, %288 : vector<8x64xf32>
    %290 = vector.extract_strided_slice %289 {offsets = [0, 0], sizes = [8, 32], strides = [1, 1]} : vector<8x64xf32> to vector<8x32xf32>
    %291 = vector.extract_strided_slice %289 {offsets = [0, 32], sizes = [8, 32], strides = [1, 1]} : vector<8x64xf32> to vector<8x32xf32>
    %292 = vector.extract_strided_slice %278 {offsets = [0, 64], sizes = [8, 32], strides = [1, 1]} : vector<8x96xf32> to vector<8x32xf32>
    %293 = vector.extract_strided_slice %281 {offsets = [0, 64], sizes = [8, 32], strides = [1, 1]} : vector<8x96xf32> to vector<8x32xf32>
    %294 = arith.addf %293, %11 : vector<8x32xf32>
    %295 = arith.mulf %290, %294 : vector<8x32xf32>
    %296 = arith.addf %292, %295 : vector<8x32xf32>
    %297 = math.tanh %296 : vector<8x32xf32>
    %cst_87 = arith.constant 1.000000e+00 : f32
    %298 = vector.broadcast %cst_87 : f32 to vector<8x32xf32>
    %299 = arith.subf %298, %291 : vector<8x32xf32>
    %300 = arith.mulf %299, %297 : vector<8x32xf32>
    %301 = arith.mulf %291, %272 : vector<8x32xf32>
    %302 = arith.addf %300, %301 : vector<8x32xf32>
    %303 = vector.extract_strided_slice %276 {offsets = [0, 96], sizes = [8, 96], strides = [1, 1]} : vector<8x192xf32> to vector<8x96xf32>
    %304 = vector.extract_strided_slice %280 {offsets = [0, 0], sizes = [8, 64], strides = [1, 1]} : vector<8x96xf32> to vector<8x64xf32>
    %305 = vector.extract_strided_slice %303 {offsets = [0, 0], sizes = [8, 64], strides = [1, 1]} : vector<8x96xf32> to vector<8x64xf32>
    %306 = arith.addf %304, %305 : vector<8x64xf32>
    %307 = arith.negf %306 : vector<8x64xf32>
    %308 = math.exp %307 : vector<8x64xf32>
    %cst_88 = arith.constant 1.000000e+00 : f32
    %309 = vector.broadcast %cst_88 : f32 to vector<8x64xf32>
    %310 = arith.addf %309, %308 : vector<8x64xf32>
    %311 = arith.divf %309, %310 : vector<8x64xf32>
    %312 = vector.extract_strided_slice %311 {offsets = [0, 0], sizes = [8, 32], strides = [1, 1]} : vector<8x64xf32> to vector<8x32xf32>
    %313 = vector.extract_strided_slice %311 {offsets = [0, 32], sizes = [8, 32], strides = [1, 1]} : vector<8x64xf32> to vector<8x32xf32>
    %314 = vector.extract_strided_slice %280 {offsets = [0, 64], sizes = [8, 32], strides = [1, 1]} : vector<8x96xf32> to vector<8x32xf32>
    %315 = vector.extract_strided_slice %303 {offsets = [0, 64], sizes = [8, 32], strides = [1, 1]} : vector<8x96xf32> to vector<8x32xf32>
    %316 = arith.addf %315, %14 : vector<8x32xf32>
    %317 = arith.mulf %312, %316 : vector<8x32xf32>
    %318 = arith.addf %314, %317 : vector<8x32xf32>
    %319 = math.tanh %318 : vector<8x32xf32>
    %cst_89 = arith.constant 1.000000e+00 : f32
    %320 = vector.broadcast %cst_89 : f32 to vector<8x32xf32>
    %321 = arith.subf %320, %313 : vector<8x32xf32>
    %322 = arith.mulf %321, %319 : vector<8x32xf32>
    %323 = arith.mulf %313, %273 : vector<8x32xf32>
    %324 = arith.addf %322, %323 : vector<8x32xf32>
    %325 = vector.broadcast %c3_i32 : i32 to vector<8x1xi32>
    %326 = arith.cmpi sgt, %7, %325 : vector<8x1xi32>
    %327 = vector.broadcast %266 : i32 to vector<8x1xi32>
    %328 = arith.cmpi sgt, %7, %327 : vector<8x1xi32>
    %cst_90 = arith.constant 0.000000e+00 : f32
    %329 = vector.shape_cast %326 : vector<8x1xi1> to vector<8x1xi1>
    %330 = vector.broadcast %329 : vector<8x1xi1> to vector<8x32xi1>
    %331 = vector.broadcast %cst_90 : f32 to vector<8x32xf32>
    %332 = arith.select %330, %302, %331 : vector<8x32xi1>, vector<8x32xf32>
    %cst_91 = arith.constant 0.000000e+00 : f32
    %333 = vector.shape_cast %328 : vector<8x1xi1> to vector<8x1xi1>
    %334 = vector.broadcast %333 : vector<8x1xi1> to vector<8x32xi1>
    %335 = vector.broadcast %cst_91 : f32 to vector<8x32xf32>
    %336 = arith.select %334, %324, %335 : vector<8x32xi1>, vector<8x32xf32>
    %337 = arith.index_cast %268 : i32 to index
    %c0_92 = arith.constant 0 : index
    %338 = vector.load %arg8[%337, %c0_92] : memref<64x64xf32, #tpu.memory_space<vmem>>, vector<8x32xf32>
    tpu.vector_store %arg8[%337, %c0_92], %332 {strides = array<i32>} : memref<64x64xf32, #tpu.memory_space<vmem>>, vector<8x32xf32>,
    %339 = arith.index_cast %270 : i32 to index
    %c32_93 = arith.constant 32 : index
    %340 = vector.load %arg8[%339, %c32_93] : memref<64x64xf32, #tpu.memory_space<vmem>>, vector<8x32xf32>
    tpu.vector_store %arg8[%339, %c32_93], %336 {strides = array<i32>} : memref<64x64xf32, #tpu.memory_space<vmem>>, vector<8x32xf32>,
    %341 = vector.shape_cast %326 : vector<8x1xi1> to vector<8x1xi1>
    %342 = vector.broadcast %341 : vector<8x1xi1> to vector<8x32xi1>
    %343 = arith.select %342, %302, %272 : vector<8x32xi1>, vector<8x32xf32>
    %c0_94 = arith.constant 0 : index
    %c0_95 = arith.constant 0 : index
    %344 = vector.load %arg11[%c0_94, %c0_95] : memref<8x64xf32, #tpu.memory_space<vmem>>, vector<8x32xf32>
    tpu.vector_store %arg11[%c0_94, %c0_95], %343 {strides = array<i32>} : memref<8x64xf32, #tpu.memory_space<vmem>>, vector<8x32xf32>,
    %345 = vector.shape_cast %328 : vector<8x1xi1> to vector<8x1xi1>
    %346 = vector.broadcast %345 : vector<8x1xi1> to vector<8x32xi1>
    %347 = arith.select %346, %324, %273 : vector<8x32xi1>, vector<8x32xf32>
    %c0_96 = arith.constant 0 : index
    %c32_97 = arith.constant 32 : index
    %348 = vector.load %arg11[%c0_96, %c32_97] : memref<8x64xf32, #tpu.memory_space<vmem>>, vector<8x32xf32>
    tpu.vector_store %arg11[%c0_96, %c32_97], %347 {strides = array<i32>} : memref<8x64xf32, #tpu.memory_space<vmem>>, vector<8x32xf32>,
    %c4_i32 = arith.constant 4 : i32
    %c7_i32_98 = arith.constant 7 : i32
    %349 = arith.subi %c7_i32_98, %c4_i32 : i32
    %c8_i32_99 = arith.constant 8 : i32
    %350 = arith.muli %c4_i32, %c8_i32_99 : i32
    %351 = tpu.assume_multiple %350, 8 : i32
    %c8_i32_100 = arith.constant 8 : i32
    %352 = arith.muli %349, %c8_i32_100 : i32
    %353 = tpu.assume_multiple %352, 8 : i32
    %c0_101 = arith.constant 0 : index
    %c0_102 = arith.constant 0 : index
    %354 = vector.load %arg11[%c0_101, %c0_102] : memref<8x64xf32, #tpu.memory_space<vmem>>, vector<8x64xf32>
    %355 = vector.extract_strided_slice %354 {offsets = [0, 0], sizes = [8, 32], strides = [1, 1]} : vector<8x64xf32> to vector<8x32xf32>
    %356 = vector.extract_strided_slice %354 {offsets = [0, 32], sizes = [8, 32], strides = [1, 1]} : vector<8x64xf32> to vector<8x32xf32>
    %357 = arith.truncf %354 : vector<8x64xf32> to vector<8x64xbf16>
    %c0_103 = arith.constant 0 : index
    %c0_104 = arith.constant 0 : index
    %358 = vector.load %arg4[%c0_103, %c0_104] : memref<64x192xbf16, #tpu.memory_space<vmem>>, vector<64x192xbf16>
    %cst_105 = arith.constant dense<0.000000e+00> : vector<8x192xf32>
    %359 = tpu.matmul %357, %358, %cst_105 {dimension_numbers = #tpu.dot_dimension_numbers<[1], [0], [0], [1], [0, 0, 1, 1], [], []>} : vector<8x64xbf16>, vector<64x192xbf16>, vector<8x192xf32> -> vector<8x192xf32>
    %360 = arith.index_cast %351 : i32 to index
    %c0_106 = arith.constant 0 : index
    %361 = vector.load %arg10[%360, %c0_106] : memref<64x192xf32, #tpu.memory_space<vmem>>, vector<8x96xf32>
    %362 = arith.index_cast %353 : i32 to index
    %c96_107 = arith.constant 96 : index
    %363 = vector.load %arg10[%362, %c96_107] : memref<64x192xf32, #tpu.memory_space<vmem>>, vector<8x96xf32>
    %364 = vector.extract_strided_slice %359 {offsets = [0, 0], sizes = [8, 96], strides = [1, 1]} : vector<8x192xf32> to vector<8x96xf32>
    %365 = vector.extract_strided_slice %361 {offsets = [0, 0], sizes = [8, 64], strides = [1, 1]} : vector<8x96xf32> to vector<8x64xf32>
    %366 = vector.extract_strided_slice %364 {offsets = [0, 0], sizes = [8, 64], strides = [1, 1]} : vector<8x96xf32> to vector<8x64xf32>
    %367 = arith.addf %365, %366 : vector<8x64xf32>
    %368 = arith.negf %367 : vector<8x64xf32>
    %369 = math.exp %368 : vector<8x64xf32>
    %cst_108 = arith.constant 1.000000e+00 : f32
    %370 = vector.broadcast %cst_108 : f32 to vector<8x64xf32>
    %371 = arith.addf %370, %369 : vector<8x64xf32>
    %372 = arith.divf %370, %371 : vector<8x64xf32>
    %373 = vector.extract_strided_slice %372 {offsets = [0, 0], sizes = [8, 32], strides = [1, 1]} : vector<8x64xf32> to vector<8x32xf32>
    %374 = vector.extract_strided_slice %372 {offsets = [0, 32], sizes = [8, 32], strides = [1, 1]} : vector<8x64xf32> to vector<8x32xf32>
    %375 = vector.extract_strided_slice %361 {offsets = [0, 64], sizes = [8, 32], strides = [1, 1]} : vector<8x96xf32> to vector<8x32xf32>
    %376 = vector.extract_strided_slice %364 {offsets = [0, 64], sizes = [8, 32], strides = [1, 1]} : vector<8x96xf32> to vector<8x32xf32>
    %377 = arith.addf %376, %11 : vector<8x32xf32>
    %378 = arith.mulf %373, %377 : vector<8x32xf32>
    %379 = arith.addf %375, %378 : vector<8x32xf32>
    %380 = math.tanh %379 : vector<8x32xf32>
    %cst_109 = arith.constant 1.000000e+00 : f32
    %381 = vector.broadcast %cst_109 : f32 to vector<8x32xf32>
    %382 = arith.subf %381, %374 : vector<8x32xf32>
    %383 = arith.mulf %382, %380 : vector<8x32xf32>
    %384 = arith.mulf %374, %355 : vector<8x32xf32>
    %385 = arith.addf %383, %384 : vector<8x32xf32>
    %386 = vector.extract_strided_slice %359 {offsets = [0, 96], sizes = [8, 96], strides = [1, 1]} : vector<8x192xf32> to vector<8x96xf32>
    %387 = vector.extract_strided_slice %363 {offsets = [0, 0], sizes = [8, 64], strides = [1, 1]} : vector<8x96xf32> to vector<8x64xf32>
    %388 = vector.extract_strided_slice %386 {offsets = [0, 0], sizes = [8, 64], strides = [1, 1]} : vector<8x96xf32> to vector<8x64xf32>
    %389 = arith.addf %387, %388 : vector<8x64xf32>
    %390 = arith.negf %389 : vector<8x64xf32>
    %391 = math.exp %390 : vector<8x64xf32>
    %cst_110 = arith.constant 1.000000e+00 : f32
    %392 = vector.broadcast %cst_110 : f32 to vector<8x64xf32>
    %393 = arith.addf %392, %391 : vector<8x64xf32>
    %394 = arith.divf %392, %393 : vector<8x64xf32>
    %395 = vector.extract_strided_slice %394 {offsets = [0, 0], sizes = [8, 32], strides = [1, 1]} : vector<8x64xf32> to vector<8x32xf32>
    %396 = vector.extract_strided_slice %394 {offsets = [0, 32], sizes = [8, 32], strides = [1, 1]} : vector<8x64xf32> to vector<8x32xf32>
    %397 = vector.extract_strided_slice %363 {offsets = [0, 64], sizes = [8, 32], strides = [1, 1]} : vector<8x96xf32> to vector<8x32xf32>
    %398 = vector.extract_strided_slice %386 {offsets = [0, 64], sizes = [8, 32], strides = [1, 1]} : vector<8x96xf32> to vector<8x32xf32>
    %399 = arith.addf %398, %14 : vector<8x32xf32>
    %400 = arith.mulf %395, %399 : vector<8x32xf32>
    %401 = arith.addf %397, %400 : vector<8x32xf32>
    %402 = math.tanh %401 : vector<8x32xf32>
    %cst_111 = arith.constant 1.000000e+00 : f32
    %403 = vector.broadcast %cst_111 : f32 to vector<8x32xf32>
    %404 = arith.subf %403, %396 : vector<8x32xf32>
    %405 = arith.mulf %404, %402 : vector<8x32xf32>
    %406 = arith.mulf %396, %356 : vector<8x32xf32>
    %407 = arith.addf %405, %406 : vector<8x32xf32>
    %408 = vector.broadcast %c4_i32 : i32 to vector<8x1xi32>
    %409 = arith.cmpi sgt, %7, %408 : vector<8x1xi32>
    %410 = vector.broadcast %349 : i32 to vector<8x1xi32>
    %411 = arith.cmpi sgt, %7, %410 : vector<8x1xi32>
    %cst_112 = arith.constant 0.000000e+00 : f32
    %412 = vector.shape_cast %409 : vector<8x1xi1> to vector<8x1xi1>
    %413 = vector.broadcast %412 : vector<8x1xi1> to vector<8x32xi1>
    %414 = vector.broadcast %cst_112 : f32 to vector<8x32xf32>
    %415 = arith.select %413, %385, %414 : vector<8x32xi1>, vector<8x32xf32>
    %cst_113 = arith.constant 0.000000e+00 : f32
    %416 = vector.shape_cast %411 : vector<8x1xi1> to vector<8x1xi1>
    %417 = vector.broadcast %416 : vector<8x1xi1> to vector<8x32xi1>
    %418 = vector.broadcast %cst_113 : f32 to vector<8x32xf32>
    %419 = arith.select %417, %407, %418 : vector<8x32xi1>, vector<8x32xf32>
    %420 = arith.index_cast %351 : i32 to index
    %c0_114 = arith.constant 0 : index
    %421 = vector.load %arg8[%420, %c0_114] : memref<64x64xf32, #tpu.memory_space<vmem>>, vector<8x32xf32>
    tpu.vector_store %arg8[%420, %c0_114], %415 {strides = array<i32>} : memref<64x64xf32, #tpu.memory_space<vmem>>, vector<8x32xf32>,
    %422 = arith.index_cast %353 : i32 to index
    %c32_115 = arith.constant 32 : index
    %423 = vector.load %arg8[%422, %c32_115] : memref<64x64xf32, #tpu.memory_space<vmem>>, vector<8x32xf32>
    tpu.vector_store %arg8[%422, %c32_115], %419 {strides = array<i32>} : memref<64x64xf32, #tpu.memory_space<vmem>>, vector<8x32xf32>,
    %424 = vector.shape_cast %409 : vector<8x1xi1> to vector<8x1xi1>
    %425 = vector.broadcast %424 : vector<8x1xi1> to vector<8x32xi1>
    %426 = arith.select %425, %385, %355 : vector<8x32xi1>, vector<8x32xf32>
    %c0_116 = arith.constant 0 : index
    %c0_117 = arith.constant 0 : index
    %427 = vector.load %arg11[%c0_116, %c0_117] : memref<8x64xf32, #tpu.memory_space<vmem>>, vector<8x32xf32>
    tpu.vector_store %arg11[%c0_116, %c0_117], %426 {strides = array<i32>} : memref<8x64xf32, #tpu.memory_space<vmem>>, vector<8x32xf32>,
    %428 = vector.shape_cast %411 : vector<8x1xi1> to vector<8x1xi1>
    %429 = vector.broadcast %428 : vector<8x1xi1> to vector<8x32xi1>
    %430 = arith.select %429, %407, %356 : vector<8x32xi1>, vector<8x32xf32>
    %c0_118 = arith.constant 0 : index
    %c32_119 = arith.constant 32 : index
    %431 = vector.load %arg11[%c0_118, %c32_119] : memref<8x64xf32, #tpu.memory_space<vmem>>, vector<8x32xf32>
    tpu.vector_store %arg11[%c0_118, %c32_119], %430 {strides = array<i32>} : memref<8x64xf32, #tpu.memory_space<vmem>>, vector<8x32xf32>,
    %c5_i32 = arith.constant 5 : i32
    %c7_i32_120 = arith.constant 7 : i32
    %432 = arith.subi %c7_i32_120, %c5_i32 : i32
    %c8_i32_121 = arith.constant 8 : i32
    %433 = arith.muli %c5_i32, %c8_i32_121 : i32
    %434 = tpu.assume_multiple %433, 8 : i32
    %c8_i32_122 = arith.constant 8 : i32
    %435 = arith.muli %432, %c8_i32_122 : i32
    %436 = tpu.assume_multiple %435, 8 : i32
    %c0_123 = arith.constant 0 : index
    %c0_124 = arith.constant 0 : index
    %437 = vector.load %arg11[%c0_123, %c0_124] : memref<8x64xf32, #tpu.memory_space<vmem>>, vector<8x64xf32>
    %438 = vector.extract_strided_slice %437 {offsets = [0, 0], sizes = [8, 32], strides = [1, 1]} : vector<8x64xf32> to vector<8x32xf32>
    %439 = vector.extract_strided_slice %437 {offsets = [0, 32], sizes = [8, 32], strides = [1, 1]} : vector<8x64xf32> to vector<8x32xf32>
    %440 = arith.truncf %437 : vector<8x64xf32> to vector<8x64xbf16>
    %c0_125 = arith.constant 0 : index
    %c0_126 = arith.constant 0 : index
    %441 = vector.load %arg4[%c0_125, %c0_126] : memref<64x192xbf16, #tpu.memory_space<vmem>>, vector<64x192xbf16>
    %cst_127 = arith.constant dense<0.000000e+00> : vector<8x192xf32>
    %442 = tpu.matmul %440, %441, %cst_127 {dimension_numbers = #tpu.dot_dimension_numbers<[1], [0], [0], [1], [0, 0, 1, 1], [], []>} : vector<8x64xbf16>, vector<64x192xbf16>, vector<8x192xf32> -> vector<8x192xf32>
    %443 = arith.index_cast %434 : i32 to index
    %c0_128 = arith.constant 0 : index
    %444 = vector.load %arg10[%443, %c0_128] : memref<64x192xf32, #tpu.memory_space<vmem>>, vector<8x96xf32>
    %445 = arith.index_cast %436 : i32 to index
    %c96_129 = arith.constant 96 : index
    %446 = vector.load %arg10[%445, %c96_129] : memref<64x192xf32, #tpu.memory_space<vmem>>, vector<8x96xf32>
    %447 = vector.extract_strided_slice %442 {offsets = [0, 0], sizes = [8, 96], strides = [1, 1]} : vector<8x192xf32> to vector<8x96xf32>
    %448 = vector.extract_strided_slice %444 {offsets = [0, 0], sizes = [8, 64], strides = [1, 1]} : vector<8x96xf32> to vector<8x64xf32>
    %449 = vector.extract_strided_slice %447 {offsets = [0, 0], sizes = [8, 64], strides = [1, 1]} : vector<8x96xf32> to vector<8x64xf32>
    %450 = arith.addf %448, %449 : vector<8x64xf32>
    %451 = arith.negf %450 : vector<8x64xf32>
    %452 = math.exp %451 : vector<8x64xf32>
    %cst_130 = arith.constant 1.000000e+00 : f32
    %453 = vector.broadcast %cst_130 : f32 to vector<8x64xf32>
    %454 = arith.addf %453, %452 : vector<8x64xf32>
    %455 = arith.divf %453, %454 : vector<8x64xf32>
    %456 = vector.extract_strided_slice %455 {offsets = [0, 0], sizes = [8, 32], strides = [1, 1]} : vector<8x64xf32> to vector<8x32xf32>
    %457 = vector.extract_strided_slice %455 {offsets = [0, 32], sizes = [8, 32], strides = [1, 1]} : vector<8x64xf32> to vector<8x32xf32>
    %458 = vector.extract_strided_slice %444 {offsets = [0, 64], sizes = [8, 32], strides = [1, 1]} : vector<8x96xf32> to vector<8x32xf32>
    %459 = vector.extract_strided_slice %447 {offsets = [0, 64], sizes = [8, 32], strides = [1, 1]} : vector<8x96xf32> to vector<8x32xf32>
    %460 = arith.addf %459, %11 : vector<8x32xf32>
    %461 = arith.mulf %456, %460 : vector<8x32xf32>
    %462 = arith.addf %458, %461 : vector<8x32xf32>
    %463 = math.tanh %462 : vector<8x32xf32>
    %cst_131 = arith.constant 1.000000e+00 : f32
    %464 = vector.broadcast %cst_131 : f32 to vector<8x32xf32>
    %465 = arith.subf %464, %457 : vector<8x32xf32>
    %466 = arith.mulf %465, %463 : vector<8x32xf32>
    %467 = arith.mulf %457, %438 : vector<8x32xf32>
    %468 = arith.addf %466, %467 : vector<8x32xf32>
    %469 = vector.extract_strided_slice %442 {offsets = [0, 96], sizes = [8, 96], strides = [1, 1]} : vector<8x192xf32> to vector<8x96xf32>
    %470 = vector.extract_strided_slice %446 {offsets = [0, 0], sizes = [8, 64], strides = [1, 1]} : vector<8x96xf32> to vector<8x64xf32>
    %471 = vector.extract_strided_slice %469 {offsets = [0, 0], sizes = [8, 64], strides = [1, 1]} : vector<8x96xf32> to vector<8x64xf32>
    %472 = arith.addf %470, %471 : vector<8x64xf32>
    %473 = arith.negf %472 : vector<8x64xf32>
    %474 = math.exp %473 : vector<8x64xf32>
    %cst_132 = arith.constant 1.000000e+00 : f32
    %475 = vector.broadcast %cst_132 : f32 to vector<8x64xf32>
    %476 = arith.addf %475, %474 : vector<8x64xf32>
    %477 = arith.divf %475, %476 : vector<8x64xf32>
    %478 = vector.extract_strided_slice %477 {offsets = [0, 0], sizes = [8, 32], strides = [1, 1]} : vector<8x64xf32> to vector<8x32xf32>
    %479 = vector.extract_strided_slice %477 {offsets = [0, 32], sizes = [8, 32], strides = [1, 1]} : vector<8x64xf32> to vector<8x32xf32>
    %480 = vector.extract_strided_slice %446 {offsets = [0, 64], sizes = [8, 32], strides = [1, 1]} : vector<8x96xf32> to vector<8x32xf32>
    %481 = vector.extract_strided_slice %469 {offsets = [0, 64], sizes = [8, 32], strides = [1, 1]} : vector<8x96xf32> to vector<8x32xf32>
    %482 = arith.addf %481, %14 : vector<8x32xf32>
    %483 = arith.mulf %478, %482 : vector<8x32xf32>
    %484 = arith.addf %480, %483 : vector<8x32xf32>
    %485 = math.tanh %484 : vector<8x32xf32>
    %cst_133 = arith.constant 1.000000e+00 : f32
    %486 = vector.broadcast %cst_133 : f32 to vector<8x32xf32>
    %487 = arith.subf %486, %479 : vector<8x32xf32>
    %488 = arith.mulf %487, %485 : vector<8x32xf32>
    %489 = arith.mulf %479, %439 : vector<8x32xf32>
    %490 = arith.addf %488, %489 : vector<8x32xf32>
    %491 = vector.broadcast %c5_i32 : i32 to vector<8x1xi32>
    %492 = arith.cmpi sgt, %7, %491 : vector<8x1xi32>
    %493 = vector.broadcast %432 : i32 to vector<8x1xi32>
    %494 = arith.cmpi sgt, %7, %493 : vector<8x1xi32>
    %cst_134 = arith.constant 0.000000e+00 : f32
    %495 = vector.shape_cast %492 : vector<8x1xi1> to vector<8x1xi1>
    %496 = vector.broadcast %495 : vector<8x1xi1> to vector<8x32xi1>
    %497 = vector.broadcast %cst_134 : f32 to vector<8x32xf32>
    %498 = arith.select %496, %468, %497 : vector<8x32xi1>, vector<8x32xf32>
    %cst_135 = arith.constant 0.000000e+00 : f32
    %499 = vector.shape_cast %494 : vector<8x1xi1> to vector<8x1xi1>
    %500 = vector.broadcast %499 : vector<8x1xi1> to vector<8x32xi1>
    %501 = vector.broadcast %cst_135 : f32 to vector<8x32xf32>
    %502 = arith.select %500, %490, %501 : vector<8x32xi1>, vector<8x32xf32>
    %503 = arith.index_cast %434 : i32 to index
    %c0_136 = arith.constant 0 : index
    %504 = vector.load %arg8[%503, %c0_136] : memref<64x64xf32, #tpu.memory_space<vmem>>, vector<8x32xf32>
    tpu.vector_store %arg8[%503, %c0_136], %498 {strides = array<i32>} : memref<64x64xf32, #tpu.memory_space<vmem>>, vector<8x32xf32>,
    %505 = arith.index_cast %436 : i32 to index
    %c32_137 = arith.constant 32 : index
    %506 = vector.load %arg8[%505, %c32_137] : memref<64x64xf32, #tpu.memory_space<vmem>>, vector<8x32xf32>
    tpu.vector_store %arg8[%505, %c32_137], %502 {strides = array<i32>} : memref<64x64xf32, #tpu.memory_space<vmem>>, vector<8x32xf32>,
    %507 = vector.shape_cast %492 : vector<8x1xi1> to vector<8x1xi1>
    %508 = vector.broadcast %507 : vector<8x1xi1> to vector<8x32xi1>
    %509 = arith.select %508, %468, %438 : vector<8x32xi1>, vector<8x32xf32>
    %c0_138 = arith.constant 0 : index
    %c0_139 = arith.constant 0 : index
    %510 = vector.load %arg11[%c0_138, %c0_139] : memref<8x64xf32, #tpu.memory_space<vmem>>, vector<8x32xf32>
    tpu.vector_store %arg11[%c0_138, %c0_139], %509 {strides = array<i32>} : memref<8x64xf32, #tpu.memory_space<vmem>>, vector<8x32xf32>,
    %511 = vector.shape_cast %494 : vector<8x1xi1> to vector<8x1xi1>
    %512 = vector.broadcast %511 : vector<8x1xi1> to vector<8x32xi1>
    %513 = arith.select %512, %490, %439 : vector<8x32xi1>, vector<8x32xf32>
    %c0_140 = arith.constant 0 : index
    %c32_141 = arith.constant 32 : index
    %514 = vector.load %arg11[%c0_140, %c32_141] : memref<8x64xf32, #tpu.memory_space<vmem>>, vector<8x32xf32>
    tpu.vector_store %arg11[%c0_140, %c32_141], %513 {strides = array<i32>} : memref<8x64xf32, #tpu.memory_space<vmem>>, vector<8x32xf32>,
    %c6_i32 = arith.constant 6 : i32
    %c7_i32_142 = arith.constant 7 : i32
    %515 = arith.subi %c7_i32_142, %c6_i32 : i32
    %c8_i32_143 = arith.constant 8 : i32
    %516 = arith.muli %c6_i32, %c8_i32_143 : i32
    %517 = tpu.assume_multiple %516, 8 : i32
    %c8_i32_144 = arith.constant 8 : i32
    %518 = arith.muli %515, %c8_i32_144 : i32
    %519 = tpu.assume_multiple %518, 8 : i32
    %c0_145 = arith.constant 0 : index
    %c0_146 = arith.constant 0 : index
    %520 = vector.load %arg11[%c0_145, %c0_146] : memref<8x64xf32, #tpu.memory_space<vmem>>, vector<8x64xf32>
    %521 = vector.extract_strided_slice %520 {offsets = [0, 0], sizes = [8, 32], strides = [1, 1]} : vector<8x64xf32> to vector<8x32xf32>
    %522 = vector.extract_strided_slice %520 {offsets = [0, 32], sizes = [8, 32], strides = [1, 1]} : vector<8x64xf32> to vector<8x32xf32>
    %523 = arith.truncf %520 : vector<8x64xf32> to vector<8x64xbf16>
    %c0_147 = arith.constant 0 : index
    %c0_148 = arith.constant 0 : index
    %524 = vector.load %arg4[%c0_147, %c0_148] : memref<64x192xbf16, #tpu.memory_space<vmem>>, vector<64x192xbf16>
    %cst_149 = arith.constant dense<0.000000e+00> : vector<8x192xf32>
    %525 = tpu.matmul %523, %524, %cst_149 {dimension_numbers = #tpu.dot_dimension_numbers<[1], [0], [0], [1], [0, 0, 1, 1], [], []>} : vector<8x64xbf16>, vector<64x192xbf16>, vector<8x192xf32> -> vector<8x192xf32>
    %526 = arith.index_cast %517 : i32 to index
    %c0_150 = arith.constant 0 : index
    %527 = vector.load %arg10[%526, %c0_150] : memref<64x192xf32, #tpu.memory_space<vmem>>, vector<8x96xf32>
    %528 = arith.index_cast %519 : i32 to index
    %c96_151 = arith.constant 96 : index
    %529 = vector.load %arg10[%528, %c96_151] : memref<64x192xf32, #tpu.memory_space<vmem>>, vector<8x96xf32>
    %530 = vector.extract_strided_slice %525 {offsets = [0, 0], sizes = [8, 96], strides = [1, 1]} : vector<8x192xf32> to vector<8x96xf32>
    %531 = vector.extract_strided_slice %527 {offsets = [0, 0], sizes = [8, 64], strides = [1, 1]} : vector<8x96xf32> to vector<8x64xf32>
    %532 = vector.extract_strided_slice %530 {offsets = [0, 0], sizes = [8, 64], strides = [1, 1]} : vector<8x96xf32> to vector<8x64xf32>
    %533 = arith.addf %531, %532 : vector<8x64xf32>
    %534 = arith.negf %533 : vector<8x64xf32>
    %535 = math.exp %534 : vector<8x64xf32>
    %cst_152 = arith.constant 1.000000e+00 : f32
    %536 = vector.broadcast %cst_152 : f32 to vector<8x64xf32>
    %537 = arith.addf %536, %535 : vector<8x64xf32>
    %538 = arith.divf %536, %537 : vector<8x64xf32>
    %539 = vector.extract_strided_slice %538 {offsets = [0, 0], sizes = [8, 32], strides = [1, 1]} : vector<8x64xf32> to vector<8x32xf32>
    %540 = vector.extract_strided_slice %538 {offsets = [0, 32], sizes = [8, 32], strides = [1, 1]} : vector<8x64xf32> to vector<8x32xf32>
    %541 = vector.extract_strided_slice %527 {offsets = [0, 64], sizes = [8, 32], strides = [1, 1]} : vector<8x96xf32> to vector<8x32xf32>
    %542 = vector.extract_strided_slice %530 {offsets = [0, 64], sizes = [8, 32], strides = [1, 1]} : vector<8x96xf32> to vector<8x32xf32>
    %543 = arith.addf %542, %11 : vector<8x32xf32>
    %544 = arith.mulf %539, %543 : vector<8x32xf32>
    %545 = arith.addf %541, %544 : vector<8x32xf32>
    %546 = math.tanh %545 : vector<8x32xf32>
    %cst_153 = arith.constant 1.000000e+00 : f32
    %547 = vector.broadcast %cst_153 : f32 to vector<8x32xf32>
    %548 = arith.subf %547, %540 : vector<8x32xf32>
    %549 = arith.mulf %548, %546 : vector<8x32xf32>
    %550 = arith.mulf %540, %521 : vector<8x32xf32>
    %551 = arith.addf %549, %550 : vector<8x32xf32>
    %552 = vector.extract_strided_slice %525 {offsets = [0, 96], sizes = [8, 96], strides = [1, 1]} : vector<8x192xf32> to vector<8x96xf32>
    %553 = vector.extract_strided_slice %529 {offsets = [0, 0], sizes = [8, 64], strides = [1, 1]} : vector<8x96xf32> to vector<8x64xf32>
    %554 = vector.extract_strided_slice %552 {offsets = [0, 0], sizes = [8, 64], strides = [1, 1]} : vector<8x96xf32> to vector<8x64xf32>
    %555 = arith.addf %553, %554 : vector<8x64xf32>
    %556 = arith.negf %555 : vector<8x64xf32>
    %557 = math.exp %556 : vector<8x64xf32>
    %cst_154 = arith.constant 1.000000e+00 : f32
    %558 = vector.broadcast %cst_154 : f32 to vector<8x64xf32>
    %559 = arith.addf %558, %557 : vector<8x64xf32>
    %560 = arith.divf %558, %559 : vector<8x64xf32>
    %561 = vector.extract_strided_slice %560 {offsets = [0, 0], sizes = [8, 32], strides = [1, 1]} : vector<8x64xf32> to vector<8x32xf32>
    %562 = vector.extract_strided_slice %560 {offsets = [0, 32], sizes = [8, 32], strides = [1, 1]} : vector<8x64xf32> to vector<8x32xf32>
    %563 = vector.extract_strided_slice %529 {offsets = [0, 64], sizes = [8, 32], strides = [1, 1]} : vector<8x96xf32> to vector<8x32xf32>
    %564 = vector.extract_strided_slice %552 {offsets = [0, 64], sizes = [8, 32], strides = [1, 1]} : vector<8x96xf32> to vector<8x32xf32>
    %565 = arith.addf %564, %14 : vector<8x32xf32>
    %566 = arith.mulf %561, %565 : vector<8x32xf32>
    %567 = arith.addf %563, %566 : vector<8x32xf32>
    %568 = math.tanh %567 : vector<8x32xf32>
    %cst_155 = arith.constant 1.000000e+00 : f32
    %569 = vector.broadcast %cst_155 : f32 to vector<8x32xf32>
    %570 = arith.subf %569, %562 : vector<8x32xf32>
    %571 = arith.mulf %570, %568 : vector<8x32xf32>
    %572 = arith.mulf %562, %522 : vector<8x32xf32>
    %573 = arith.addf %571, %572 : vector<8x32xf32>
    %574 = vector.broadcast %c6_i32 : i32 to vector<8x1xi32>
    %575 = arith.cmpi sgt, %7, %574 : vector<8x1xi32>
    %576 = vector.broadcast %515 : i32 to vector<8x1xi32>
    %577 = arith.cmpi sgt, %7, %576 : vector<8x1xi32>
    %cst_156 = arith.constant 0.000000e+00 : f32
    %578 = vector.shape_cast %575 : vector<8x1xi1> to vector<8x1xi1>
    %579 = vector.broadcast %578 : vector<8x1xi1> to vector<8x32xi1>
    %580 = vector.broadcast %cst_156 : f32 to vector<8x32xf32>
    %581 = arith.select %579, %551, %580 : vector<8x32xi1>, vector<8x32xf32>
    %cst_157 = arith.constant 0.000000e+00 : f32
    %582 = vector.shape_cast %577 : vector<8x1xi1> to vector<8x1xi1>
    %583 = vector.broadcast %582 : vector<8x1xi1> to vector<8x32xi1>
    %584 = vector.broadcast %cst_157 : f32 to vector<8x32xf32>
    %585 = arith.select %583, %573, %584 : vector<8x32xi1>, vector<8x32xf32>
    %586 = arith.index_cast %517 : i32 to index
    %c0_158 = arith.constant 0 : index
    %587 = vector.load %arg8[%586, %c0_158] : memref<64x64xf32, #tpu.memory_space<vmem>>, vector<8x32xf32>
    tpu.vector_store %arg8[%586, %c0_158], %581 {strides = array<i32>} : memref<64x64xf32, #tpu.memory_space<vmem>>, vector<8x32xf32>,
    %588 = arith.index_cast %519 : i32 to index
    %c32_159 = arith.constant 32 : index
    %589 = vector.load %arg8[%588, %c32_159] : memref<64x64xf32, #tpu.memory_space<vmem>>, vector<8x32xf32>
    tpu.vector_store %arg8[%588, %c32_159], %585 {strides = array<i32>} : memref<64x64xf32, #tpu.memory_space<vmem>>, vector<8x32xf32>,
    %590 = vector.shape_cast %575 : vector<8x1xi1> to vector<8x1xi1>
    %591 = vector.broadcast %590 : vector<8x1xi1> to vector<8x32xi1>
    %592 = arith.select %591, %551, %521 : vector<8x32xi1>, vector<8x32xf32>
    %c0_160 = arith.constant 0 : index
    %c0_161 = arith.constant 0 : index
    %593 = vector.load %arg11[%c0_160, %c0_161] : memref<8x64xf32, #tpu.memory_space<vmem>>, vector<8x32xf32>
    tpu.vector_store %arg11[%c0_160, %c0_161], %592 {strides = array<i32>} : memref<8x64xf32, #tpu.memory_space<vmem>>, vector<8x32xf32>,
    %594 = vector.shape_cast %577 : vector<8x1xi1> to vector<8x1xi1>
    %595 = vector.broadcast %594 : vector<8x1xi1> to vector<8x32xi1>
    %596 = arith.select %595, %573, %522 : vector<8x32xi1>, vector<8x32xf32>
    %c0_162 = arith.constant 0 : index
    %c32_163 = arith.constant 32 : index
    %597 = vector.load %arg11[%c0_162, %c32_163] : memref<8x64xf32, #tpu.memory_space<vmem>>, vector<8x32xf32>
    tpu.vector_store %arg11[%c0_162, %c32_163], %596 {strides = array<i32>} : memref<8x64xf32, #tpu.memory_space<vmem>>, vector<8x32xf32>,
    %c7_i32_164 = arith.constant 7 : i32
    %c7_i32_165 = arith.constant 7 : i32
    %598 = arith.subi %c7_i32_165, %c7_i32_164 : i32
    %c8_i32_166 = arith.constant 8 : i32
    %599 = arith.muli %c7_i32_164, %c8_i32_166 : i32
    %600 = tpu.assume_multiple %599, 8 : i32
    %c8_i32_167 = arith.constant 8 : i32
    %601 = arith.muli %598, %c8_i32_167 : i32
    %602 = tpu.assume_multiple %601, 8 : i32
    %c0_168 = arith.constant 0 : index
    %c0_169 = arith.constant 0 : index
    %603 = vector.load %arg11[%c0_168, %c0_169] : memref<8x64xf32, #tpu.memory_space<vmem>>, vector<8x64xf32>
    %604 = vector.extract_strided_slice %603 {offsets = [0, 0], sizes = [8, 32], strides = [1, 1]} : vector<8x64xf32> to vector<8x32xf32>
    %605 = vector.extract_strided_slice %603 {offsets = [0, 32], sizes = [8, 32], strides = [1, 1]} : vector<8x64xf32> to vector<8x32xf32>
    %606 = arith.truncf %603 : vector<8x64xf32> to vector<8x64xbf16>
    %c0_170 = arith.constant 0 : index
    %c0_171 = arith.constant 0 : index
    %607 = vector.load %arg4[%c0_170, %c0_171] : memref<64x192xbf16, #tpu.memory_space<vmem>>, vector<64x192xbf16>
    %cst_172 = arith.constant dense<0.000000e+00> : vector<8x192xf32>
    %608 = tpu.matmul %606, %607, %cst_172 {dimension_numbers = #tpu.dot_dimension_numbers<[1], [0], [0], [1], [0, 0, 1, 1], [], []>} : vector<8x64xbf16>, vector<64x192xbf16>, vector<8x192xf32> -> vector<8x192xf32>
    %609 = arith.index_cast %600 : i32 to index
    %c0_173 = arith.constant 0 : index
    %610 = vector.load %arg10[%609, %c0_173] : memref<64x192xf32, #tpu.memory_space<vmem>>, vector<8x96xf32>
    %611 = arith.index_cast %602 : i32 to index
    %c96_174 = arith.constant 96 : index
    %612 = vector.load %arg10[%611, %c96_174] : memref<64x192xf32, #tpu.memory_space<vmem>>, vector<8x96xf32>
    %613 = vector.extract_strided_slice %608 {offsets = [0, 0], sizes = [8, 96], strides = [1, 1]} : vector<8x192xf32> to vector<8x96xf32>
    %614 = vector.extract_strided_slice %610 {offsets = [0, 0], sizes = [8, 64], strides = [1, 1]} : vector<8x96xf32> to vector<8x64xf32>
    %615 = vector.extract_strided_slice %613 {offsets = [0, 0], sizes = [8, 64], strides = [1, 1]} : vector<8x96xf32> to vector<8x64xf32>
    %616 = arith.addf %614, %615 : vector<8x64xf32>
    %617 = arith.negf %616 : vector<8x64xf32>
    %618 = math.exp %617 : vector<8x64xf32>
    %cst_175 = arith.constant 1.000000e+00 : f32
    %619 = vector.broadcast %cst_175 : f32 to vector<8x64xf32>
    %620 = arith.addf %619, %618 : vector<8x64xf32>
    %621 = arith.divf %619, %620 : vector<8x64xf32>
    %622 = vector.extract_strided_slice %621 {offsets = [0, 0], sizes = [8, 32], strides = [1, 1]} : vector<8x64xf32> to vector<8x32xf32>
    %623 = vector.extract_strided_slice %621 {offsets = [0, 32], sizes = [8, 32], strides = [1, 1]} : vector<8x64xf32> to vector<8x32xf32>
    %624 = vector.extract_strided_slice %610 {offsets = [0, 64], sizes = [8, 32], strides = [1, 1]} : vector<8x96xf32> to vector<8x32xf32>
    %625 = vector.extract_strided_slice %613 {offsets = [0, 64], sizes = [8, 32], strides = [1, 1]} : vector<8x96xf32> to vector<8x32xf32>
    %626 = arith.addf %625, %11 : vector<8x32xf32>
    %627 = arith.mulf %622, %626 : vector<8x32xf32>
    %628 = arith.addf %624, %627 : vector<8x32xf32>
    %629 = math.tanh %628 : vector<8x32xf32>
    %cst_176 = arith.constant 1.000000e+00 : f32
    %630 = vector.broadcast %cst_176 : f32 to vector<8x32xf32>
    %631 = arith.subf %630, %623 : vector<8x32xf32>
    %632 = arith.mulf %631, %629 : vector<8x32xf32>
    %633 = arith.mulf %623, %604 : vector<8x32xf32>
    %634 = arith.addf %632, %633 : vector<8x32xf32>
    %635 = vector.extract_strided_slice %608 {offsets = [0, 96], sizes = [8, 96], strides = [1, 1]} : vector<8x192xf32> to vector<8x96xf32>
    %636 = vector.extract_strided_slice %612 {offsets = [0, 0], sizes = [8, 64], strides = [1, 1]} : vector<8x96xf32> to vector<8x64xf32>
    %637 = vector.extract_strided_slice %635 {offsets = [0, 0], sizes = [8, 64], strides = [1, 1]} : vector<8x96xf32> to vector<8x64xf32>
    %638 = arith.addf %636, %637 : vector<8x64xf32>
    %639 = arith.negf %638 : vector<8x64xf32>
    %640 = math.exp %639 : vector<8x64xf32>
    %cst_177 = arith.constant 1.000000e+00 : f32
    %641 = vector.broadcast %cst_177 : f32 to vector<8x64xf32>
    %642 = arith.addf %641, %640 : vector<8x64xf32>
    %643 = arith.divf %641, %642 : vector<8x64xf32>
    %644 = vector.extract_strided_slice %643 {offsets = [0, 0], sizes = [8, 32], strides = [1, 1]} : vector<8x64xf32> to vector<8x32xf32>
    %645 = vector.extract_strided_slice %643 {offsets = [0, 32], sizes = [8, 32], strides = [1, 1]} : vector<8x64xf32> to vector<8x32xf32>
    %646 = vector.extract_strided_slice %612 {offsets = [0, 64], sizes = [8, 32], strides = [1, 1]} : vector<8x96xf32> to vector<8x32xf32>
    %647 = vector.extract_strided_slice %635 {offsets = [0, 64], sizes = [8, 32], strides = [1, 1]} : vector<8x96xf32> to vector<8x32xf32>
    %648 = arith.addf %647, %14 : vector<8x32xf32>
    %649 = arith.mulf %644, %648 : vector<8x32xf32>
    %650 = arith.addf %646, %649 : vector<8x32xf32>
    %651 = math.tanh %650 : vector<8x32xf32>
    %cst_178 = arith.constant 1.000000e+00 : f32
    %652 = vector.broadcast %cst_178 : f32 to vector<8x32xf32>
    %653 = arith.subf %652, %645 : vector<8x32xf32>
    %654 = arith.mulf %653, %651 : vector<8x32xf32>
    %655 = arith.mulf %645, %605 : vector<8x32xf32>
    %656 = arith.addf %654, %655 : vector<8x32xf32>
    %657 = vector.broadcast %c7_i32_164 : i32 to vector<8x1xi32>
    %658 = arith.cmpi sgt, %7, %657 : vector<8x1xi32>
    %659 = vector.broadcast %598 : i32 to vector<8x1xi32>
    %660 = arith.cmpi sgt, %7, %659 : vector<8x1xi32>
    %cst_179 = arith.constant 0.000000e+00 : f32
    %661 = vector.shape_cast %658 : vector<8x1xi1> to vector<8x1xi1>
    %662 = vector.broadcast %661 : vector<8x1xi1> to vector<8x32xi1>
    %663 = vector.broadcast %cst_179 : f32 to vector<8x32xf32>
    %664 = arith.select %662, %634, %663 : vector<8x32xi1>, vector<8x32xf32>
    %cst_180 = arith.constant 0.000000e+00 : f32
    %665 = vector.shape_cast %660 : vector<8x1xi1> to vector<8x1xi1>
    %666 = vector.broadcast %665 : vector<8x1xi1> to vector<8x32xi1>
    %667 = vector.broadcast %cst_180 : f32 to vector<8x32xf32>
    %668 = arith.select %666, %656, %667 : vector<8x32xi1>, vector<8x32xf32>
    %669 = arith.index_cast %600 : i32 to index
    %c0_181 = arith.constant 0 : index
    %670 = vector.load %arg8[%669, %c0_181] : memref<64x64xf32, #tpu.memory_space<vmem>>, vector<8x32xf32>
    tpu.vector_store %arg8[%669, %c0_181], %664 {strides = array<i32>} : memref<64x64xf32, #tpu.memory_space<vmem>>, vector<8x32xf32>,
    %671 = arith.index_cast %602 : i32 to index
    %c32_182 = arith.constant 32 : index
    %672 = vector.load %arg8[%671, %c32_182] : memref<64x64xf32, #tpu.memory_space<vmem>>, vector<8x32xf32>
    tpu.vector_store %arg8[%671, %c32_182], %668 {strides = array<i32>} : memref<64x64xf32, #tpu.memory_space<vmem>>, vector<8x32xf32>,
    %673 = vector.shape_cast %658 : vector<8x1xi1> to vector<8x1xi1>
    %674 = vector.broadcast %673 : vector<8x1xi1> to vector<8x32xi1>
    %675 = arith.select %674, %634, %604 : vector<8x32xi1>, vector<8x32xf32>
    %c0_183 = arith.constant 0 : index
    %c0_184 = arith.constant 0 : index
    %676 = vector.load %arg11[%c0_183, %c0_184] : memref<8x64xf32, #tpu.memory_space<vmem>>, vector<8x32xf32>
    tpu.vector_store %arg11[%c0_183, %c0_184], %675 {strides = array<i32>} : memref<8x64xf32, #tpu.memory_space<vmem>>, vector<8x32xf32>,
    %677 = vector.shape_cast %660 : vector<8x1xi1> to vector<8x1xi1>
    %678 = vector.broadcast %677 : vector<8x1xi1> to vector<8x32xi1>
    %679 = arith.select %678, %656, %605 : vector<8x32xi1>, vector<8x32xf32>
    %c0_185 = arith.constant 0 : index
    %c32_186 = arith.constant 32 : index
    %680 = vector.load %arg11[%c0_185, %c32_186] : memref<8x64xf32, #tpu.memory_space<vmem>>, vector<8x32xf32>
    tpu.vector_store %arg11[%c0_185, %c32_186], %679 {strides = array<i32>} : memref<8x64xf32, #tpu.memory_space<vmem>>, vector<8x32xf32>,
    %c8_i32_187 = arith.constant 8 : i32
    %c0_188 = arith.constant 0 : index
    %c32_189 = arith.constant 32 : index
    %681 = vector.load %arg11[%c0_188, %c32_189] : memref<8x64xf32, #tpu.memory_space<vmem>>, vector<8x32xf32>
    %c0_190 = arith.constant 0 : index
    %c0_191 = arith.constant 0 : index
    %682 = vector.load %arg6[%c0_190, %c0_191] : memref<32x32xf32, #tpu.memory_space<vmem>>, vector<32x32xf32>
    %cst_192 = arith.constant dense<0.000000e+00> : vector<8x32xf32>
    %683 = tpu.matmul %681, %682, %cst_192 {dimension_numbers = #tpu.dot_dimension_numbers<[1], [0], [0], [1], [0, 0, 1, 1], [], []>} : vector<8x32xf32>, vector<32x32xf32>, vector<8x32xf32> -> vector<8x32xf32>
    %c0_193 = arith.constant 0 : index
    %c0_194 = arith.constant 0 : index
    %684 = vector.load %arg7[%c0_193, %c0_194] : memref<1x32xf32, #tpu.memory_space<vmem>>, vector<1x32xf32>
    %685 = vector.broadcast %684 : vector<1x32xf32> to vector<8x32xf32>
    %686 = arith.addf %683, %685 : vector<8x32xf32>
    %687 = math.tanh %686 : vector<8x32xf32>
    %c0_195 = arith.constant 0 : index
    %c0_196 = arith.constant 0 : index
    %688 = vector.load %arg9[%c0_195, %c0_196] : memref<8x32xf32, #tpu.memory_space<vmem>>, vector<8x32xf32>
    tpu.vector_store %arg9[%c0_195, %c0_196], %687 {strides = array<i32>} : memref<8x32xf32, #tpu.memory_space<vmem>>, vector<8x32xf32>,
    return
  }
}

</mosaic_0001>

<llo_original>
// kernel: tpu_custom_call.1
$region0: #{tpu_custom_call.1}
  #allocation0 [shape = 'u32[]', space=smem, size = 0x4, offset = 0x4, fixed_abs, tag = 'smem constant byte address 0x4 - core index']
  #allocation1 [shape = 'u32[144,128]{1,0:T(1,128)}', space=vmem, size = 0x12000, scoped, tag = 'internal scratch']
  #allocation2 [shape = 'f32[64,192]{1,0:T(8,128)}', space=vmem, size = 0x10000, scoped, tag = 'scratch operand']
  #allocation3 [shape = 'f32[8,64]{1,0:T(8,128)}', space=vmem, size = 0x1000, scoped, tag = 'scratch operand']
  %s0 = inlined_call_operand.vmem [shape: bf16[64,32], index: 0, kind: input, shape index: {}]
  %s1 = inlined_call_operand.vmem [shape: s32[8,1], index: 1, kind: input, shape index: {}]
  %s2 = inlined_call_operand.hbm [shape: bf16[32,192], index: 2, kind: input, shape index: {}]
  %s3 = inlined_call_operand.vmem [shape: f32[1,192], index: 3, kind: input, shape index: {}]
  %s4 = inlined_call_operand.vmem [shape: bf16[64,192], index: 4, kind: input, shape index: {}]
  %s5 = inlined_call_operand.vmem [shape: f32[1,64], index: 5, kind: input, shape index: {}]
  %s6 = inlined_call_operand.hbm [shape: f32[32,32], index: 6, kind: input, shape index: {}]
  %s7 = inlined_call_operand.vmem [shape: f32[1,32], index: 7, kind: input, shape index: {}]
  %s8 = inlined_call_operand.hbm [shape: f32[64,64], index: 8, kind: output, shape index: {0}]
  %s9 = inlined_call_operand.hbm [shape: f32[8,32], index: 9, kind: output, shape index: {1}]
  %10 = xla_tuple %s8, %s9
  %s11 = sld [smem:[#allocation0]]
  $region58: #{tpu_custom_call.1} parent=0
    _
  %s13 = ssub.s32 1, %s11
  %s14 = scalar_select 0, %s13, %s11
  $region1: #{tpu_custom_call.1} parent=0
    #allocation4 [shape = 'u8[16384]{0}', space=vmem, size = 0x4000, scoped, tag = 'input window, operand 2, single buffered']
    #allocation5 [shape = 's32[1]{0}', space=sflag, size = 0x4, scoped, tag = 'scoped memory for tpu_custom_call.1']
    #allocation6 [shape = 's32[1]{0}', space=sflag, size = 0x4, scoped, tag = 'scoped memory for tpu_custom_call.1']
    #allocation7 [shape = 'u8[16384]{0}', space=vmem, size = 0x4000, scoped, tag = 'input window, operand 6, single buffered']
    #allocation8 [shape = 's32[1]{0}', space=sflag, size = 0x4, scoped, tag = 'scoped memory for tpu_custom_call.1']
    #allocation9 [shape = 'u8[32768]{0}', space=vmem, size = 0x8000, scoped, tag = 'output window, operand 0, single buffered']
    #allocation10 [shape = 'u8[4096]{0}', space=vmem, size = 0x1000, scoped, tag = 'output window, operand 1, single buffered']
    #allocation11 [shape = 's32[1]{0}', space=sflag, size = 0x4, scoped, tag = 'scoped memory for tpu_custom_call.1']
    %15 = vsyncpa [#allocation5], 0
    %16 = vsyncpa [#allocation8], 0
    %17 = vsyncpa [#allocation6], 0
    %18 = vsyncpa [#allocation11], 0
    // Predicated region
    $region2: #{tpu_custom_call.1} parent=1 // pred_check
      _
    $region3: #{tpu_custom_call.1} parent=1 // pred_check_branch
      %20 = sbr.rel (0) target = $region5
    $region4: #{tpu_custom_call.1} parent=1 // pred_region
      _
    $region5: #{tpu_custom_call.1} parent=1 // pred_fallthru
      _
    // Predicated region
    $region6: #{tpu_custom_call.1} parent=1 // pred_check
      _
    $region7: #{tpu_custom_call.1} parent=1 // pred_check_branch
      %22 = sbr.rel (0) target = $region9
    $region8: #{tpu_custom_call.1} parent=1 // pred_region
      _
    $region9: #{tpu_custom_call.1} parent=1 // pred_fallthru
      _
    // Predicated region
    $region10: #{tpu_custom_call.1} parent=1 // pred_check
      _
    $region11: #{tpu_custom_call.1} parent=1 // pred_check_branch
      %24 = sbr.rel (0) target = $region13
    $region12: #{tpu_custom_call.1} parent=1 // pred_region
      %s26 = ssub.s32 512, 512
      %27 = vsyncadd [#allocation5], %s26
      %s28 = sshll.u32 [#allocation4], 4
      %s29 = int_to_ptr.vmem [resolvable:$true] %s28
      %34 = dma.hbm_to_vmem [thread:$0]  %s2, 512, %s29, [#allocation5], 128, 128, 8
    $region13: #{tpu_custom_call.1} parent=1 // pred_fallthru
      _
    // Predicated region
    $region14: #{tpu_custom_call.1} parent=1 // pred_check
      _
    $region15: #{tpu_custom_call.1} parent=1 // pred_check_branch
      %36 = sbr.rel (0) target = $region17
    $region16: #{tpu_custom_call.1} parent=1 // pred_region
      _
    $region17: #{tpu_custom_call.1} parent=1 // pred_fallthru
      _
    // Predicated region
    $region18: #{tpu_custom_call.1} parent=1 // pred_check
      _
    $region19: #{tpu_custom_call.1} parent=1 // pred_check_branch
      %38 = sbr.rel (0) target = $region21
    $region20: #{tpu_custom_call.1} parent=1 // pred_region
      _
    $region21: #{tpu_custom_call.1} parent=1 // pred_fallthru
      _
    // Predicated region
    $region22: #{tpu_custom_call.1} parent=1 // pred_check
      _
    $region23: #{tpu_custom_call.1} parent=1 // pred_check_branch
      %40 = sbr.rel (0) target = $region25
    $region24: #{tpu_custom_call.1} parent=1 // pred_region
      _
    $region25: #{tpu_custom_call.1} parent=1 // pred_fallthru
      _
    // Predicated region
    $region26: #{tpu_custom_call.1} parent=1 // pred_check
      _
    $region27: #{tpu_custom_call.1} parent=1 // pred_check_branch
      %42 = sbr.rel (0) target = $region29
    $region28: #{tpu_custom_call.1} parent=1 // pred_region
      %s44 = ssub.s32 512, 512
      %45 = vsyncadd [#allocation8], %s44
      %s46 = sshll.u32 [#allocation7], 4
      %s47 = int_to_ptr.vmem [resolvable:$true] %s46
      %52 = dma.hbm_to_vmem [thread:$0]  %s6, 512, %s47, [#allocation8], 128, 128, 8
    $region29: #{tpu_custom_call.1} parent=1 // pred_fallthru
      _
    // Predicated region
    $region30: #{tpu_custom_call.1} parent=1 // pred_check
      _
    $region31: #{tpu_custom_call.1} parent=1 // pred_check_branch
      %54 = sbr.rel (0) target = $region33
    $region32: #{tpu_custom_call.1} parent=1 // pred_region
      _
    $region33: #{tpu_custom_call.1} parent=1 // pred_fallthru
      _
    // Predicated region
    $region34: #{tpu_custom_call.1} parent=1 // pred_check
      _
    $region35: #{tpu_custom_call.1} parent=1 // pred_check_branch
      %56 = sbr.rel (0) target = $region37
    $region36: #{tpu_custom_call.1} parent=1 // pred_region
      %57 = dma.done [#allocation5], 512
    $region37: #{tpu_custom_call.1} parent=1 // pred_fallthru
      _
    // Predicated region
    $region38: #{tpu_custom_call.1} parent=1 // pred_check
      _
    $region39: #{tpu_custom_call.1} parent=1 // pred_check_branch
      %59 = sbr.rel (0) target = $region41
    $region40: #{tpu_custom_call.1} parent=1 // pred_region
      %60 = dma.done [#allocation8], 512
    $region41: #{tpu_custom_call.1} parent=1 // pred_fallthru
      _
    %v62 = vld [vmem:[%s0] sm:$0xf]
    %v63 = vld [vmem:[%s0 + $0x4] sm:$0xf]
    %v64 = vld [vmem:[%s0 + $0x8] sm:$0xf]
    %v65 = vld [vmem:[%s0 + $0xc] sm:$0xf]
    %v66 = vld [vmem:[%s0 + $0x10] sm:$0xf]
    %v67 = vld [vmem:[%s0 + $0x14] sm:$0xf]
    %v68 = vld [vmem:[%s0 + $0x18] sm:$0xf]
    %v69 = vld [vmem:[%s0 + $0x1c] sm:$0xf]
    %v70 = vld [vmem:[#allocation4] sm:$0xff]
    %v71 = vld [vmem:[#allocation4 + $0x8] sm:$0xff]
    %v72 = vld [vmem:[#allocation4 + $0x10] sm:$0xff]
    %v73 = vld [vmem:[#allocation4 + $0x18] sm:$0xff]
    %v74 = vld [vmem:[%s3] sm:$0x3]
    %v76 = vlaneseq
    %v77 = vshrl.u32 %v76, 7
    %v78 = vsub.s32 0, %v77
    %v79 = vrot.slane %v74, %v78
    %v80 = vlaneseq
    %v81 = vshrl.u32 %v80, 7
    %v82 = vsub.s32 1, %v81
    %v83 = vrot.slane %v74, %v82
    %v94 = vunpack.c.l.b16 %v62
    %v95 = vunpack.c.l.b16 %v63
    %v96 = vunpack.c.l.b16 %v64
    %v97 = vunpack.c.l.b16 %v65
    %v98 = vunpack.c.l.b16 %v66
    %v99 = vunpack.c.l.b16 %v67
    %v100 = vunpack.c.l.b16 %v68
    %v101 = vunpack.c.l.b16 %v69
    %v102 = vpack.c.b16 %v95, %v94
    %v103 = vpack.c.b16 %v97, %v96
    %v104 = vpack.c.b16 %v99, %v98
    %v105 = vpack.c.b16 %v101, %v100
    %v110 = vunpack.c.l.b16 %v70
    %v111 = vunpack.c.h.b16 %v70
    %v112 = vunpack.c.l.b16 %v71
    %v113 = vunpack.c.h.b16 %v71
    %v114 = vunpack.c.l.b16 %v72
    %v115 = vunpack.c.h.b16 %v72
    %v116 = vunpack.c.l.b16 %v73
    %v117 = vunpack.c.h.b16 %v73
    %v118 = vpack.c.b16 %v112, %v110
    %v119 = vpack.c.b16 %v113, %v111
    %v120 = vpack.c.b16 %v116, %v114
    %v121 = vpack.c.b16 %v117, %v115
    %vm126 = vcmask 261120
    %v128 = vsel %vm126, %v102, 0
    %v131 = vsel %vm126, %v103, 0
    %v134 = vsel %vm126, %v104, 0
    %v137 = vsel %vm126, %v105, 0
    %139 = vmatprep.subr.bf16.mxu0 %v119
    %140 = vmatpush1.bf16.msra.mxu0 %v118
    %141 = vmatprep.subr.bf16.mxu0 %v121
    %142 = vmatpush1.bf16.msra.mxu0 %v120
    %143 = vmatprep.subr.bf16.mxu0 0
    %144 = vmatpush1.bf16.msra.mxu0 0
    %145 = vmatprep.subr.bf16.mxu0 0
    %146 = vmatpush1.bf16.msra.mxu0 0
    %147 = vmatprep.subr.bf16.mxu0 0
    %148 = vmatpush1.bf16.msra.mxu0 0
    %149 = vmatprep.subr.bf16.mxu0 0
    %150 = vmatpush1.bf16.msra.mxu0 0
    %151 = vmatprep.subr.bf16.mxu0 0
    %152 = vmatpush1.bf16.msra.mxu0 0
    %153 = vmatprep.subr.bf16.mxu0 0
    %154 = vmatpush1.bf16.msra.mxu0 0
    %155 = vmatprep.subr.bf16.mxu0 0
    %156 = vmatpush1.bf16.msra.mxu0 0
    %157 = vmatprep.subr.bf16.mxu0 0
    %158 = vmatpush1.bf16.msra.mxu0 0
    %159 = vmatprep.subr.bf16.mxu0 0
    %160 = vmatpush1.bf16.msra.mxu0 0
    %161 = vmatprep.subr.bf16.mxu0 0
    %162 = vmatpush1.bf16.msra.mxu0 0
    %163 = vmatprep.subr.bf16.mxu0 0
    %164 = vmatpush1.bf16.msra.mxu0 0
    %165 = vmatprep.subr.bf16.mxu0 0
    %166 = vmatpush1.bf16.msra.mxu0 0
    %167 = vmatprep.subr.bf16.mxu0 0
    %168 = vmatpush1.bf16.msra.mxu0 0
    %169 = vmatprep.subr.bf16.mxu0 0
    %170 = vmatpush1.bf16.msra.mxu0 0
    %171 = vmatprep.mubr.bf16.mxu0 0
    %172 = vmatmul.mubr.bf16.gmra.mrb[0].mxu0 %v128
    %v173 = vpop.f32.mrb[0].mxu0
    %v174 = vadd.f32 %v79, %v173
    %v175 = vpop.f32.mrb[0].mxu0
    %v176 = vadd.f32 %v83, %v175
    %v177 = vpop.f32.mrb[0].mxu0
    %v178 = vadd.f32 %v79, %v177
    %v179 = vpop.f32.mrb[0].mxu0
    %v180 = vadd.f32 %v83, %v179
    %181 = vmatprep.mubr.bf16.mxu0 0
    %182 = vmatmul.mubr.bf16.gmra.mrb[0].mxu0 %v131
    %v183 = vpop.f32.mrb[0].mxu0
    %v184 = vadd.f32 %v79, %v183
    %v185 = vpop.f32.mrb[0].mxu0
    %v186 = vadd.f32 %v83, %v185
    %v187 = vpop.f32.mrb[0].mxu0
    %v188 = vadd.f32 %v79, %v187
    %v189 = vpop.f32.mrb[0].mxu0
    %v190 = vadd.f32 %v83, %v189
    %191 = vmatprep.mubr.bf16.mxu0 0
    %192 = vmatmul.mubr.bf16.gmra.mrb[0].mxu0 %v134
    %v193 = vpop.f32.mrb[0].mxu0
    %v194 = vadd.f32 %v79, %v193
    %v195 = vpop.f32.mrb[0].mxu0
    %v196 = vadd.f32 %v83, %v195
    %v197 = vpop.f32.mrb[0].mxu0
    %v198 = vadd.f32 %v79, %v197
    %v199 = vpop.f32.mrb[0].mxu0
    %v200 = vadd.f32 %v83, %v199
    %201 = vmatprep.mubr.bf16.mxu0 0
    %202 = vmatmul.mubr.bf16.gmra.mrb[0].mxu0 %v137
    %v203 = vpop.f32.mrb[0].mxu0
    %v204 = vadd.f32 %v79, %v203
    %v205 = vpop.f32.mrb[0].mxu0
    %v206 = vadd.f32 %v83, %v205
    %v207 = vpop.f32.mrb[0].mxu0
    %v208 = vadd.f32 %v79, %v207
    %v209 = vpop.f32.mrb[0].mxu0
    %v210 = vadd.f32 %v83, %v209
    %211 = vdwg.mxu0
    %212 = vst [vmem:[#allocation2] sm:$0xff] %v174
    %vm213 = vcmask 523264
    %214 = vst.msk [vmem:[#allocation2 + $0x8] sm:$0xff] %vm213, %v176
    %215 = vst [vmem:[#allocation2 + $0x10] sm:$0xff] %v178
    %216 = vst.msk [vmem:[#allocation2 + $0x18] sm:$0xff] %vm213, %v180
    %217 = vst [vmem:[#allocation2 + $0x20] sm:$0xff] %v184
    %218 = vst.msk [vmem:[#allocation2 + $0x28] sm:$0xff] %vm213, %v186
    %219 = vst [vmem:[#allocation2 + $0x30] sm:$0xff] %v188
    %220 = vst.msk [vmem:[#allocation2 + $0x38] sm:$0xff] %vm213, %v190
    %221 = vst [vmem:[#allocation2 + $0x40] sm:$0xff] %v194
    %222 = vst.msk [vmem:[#allocation2 + $0x48] sm:$0xff] %vm213, %v196
    %223 = vst [vmem:[#allocation2 + $0x50] sm:$0xff] %v198
    %224 = vst.msk [vmem:[#allocation2 + $0x58] sm:$0xff] %vm213, %v200
    %225 = vst [vmem:[#allocation2 + $0x60] sm:$0xff] %v204
    %226 = vst.msk [vmem:[#allocation2 + $0x68] sm:$0xff] %vm213, %v206
    %227 = vst [vmem:[#allocation2 + $0x70] sm:$0xff] %v208
    %228 = vst.msk [vmem:[#allocation2 + $0x78] sm:$0xff] %vm213, %v210
    %v229 = vld [vmem:[%s1] sm:$0xff]
    %v230 = vld [vmem:[%s5] sm:$0x1]
    %v232 = vlaneseq
    %v233 = vshrl.u32 %v232, 7
    %v234 = vsub.s32 0, %v233
    %v235 = vrot.slane %v230, %v234
    %237 = vst.msk [vmem:[#allocation3] sm:$0xff] %vm213, 0.0
    %v238 = vld [vmem:[#allocation3] sm:$0xff]
    %v239 = vpack.c.bf16 %v238, %v238
    %v240 = vld [vmem:[%s4] sm:$0xff]
    %v241 = vld [vmem:[%s4 + $0x8] sm:$0xff]
    %v242 = vld [vmem:[%s4 + $0x10] sm:$0xff]
    %v243 = vld [vmem:[%s4 + $0x18] sm:$0xff]
    %v244 = vld [vmem:[%s4 + $0x20] sm:$0xff]
    %v245 = vld [vmem:[%s4 + $0x28] sm:$0xff]
    %v246 = vld [vmem:[%s4 + $0x30] sm:$0xff]
    %v247 = vld [vmem:[%s4 + $0x38] sm:$0xff]
    %v256 = vunpack.c.l.b16 %v240
    %v257 = vunpack.c.h.b16 %v240
    %v258 = vunpack.c.l.b16 %v241
    %v259 = vunpack.c.h.b16 %v241
    %v260 = vunpack.c.l.b16 %v242
    %v261 = vunpack.c.h.b16 %v242
    %v262 = vunpack.c.l.b16 %v243
    %v263 = vunpack.c.h.b16 %v243
    %v264 = vunpack.c.l.b16 %v244
    %v265 = vunpack.c.h.b16 %v244
    %v266 = vunpack.c.l.b16 %v245
    %v267 = vunpack.c.h.b16 %v245
    %v268 = vunpack.c.l.b16 %v246
    %v269 = vunpack.c.h.b16 %v246
    %v270 = vunpack.c.l.b16 %v247
    %v271 = vunpack.c.h.b16 %v247
    %v272 = vpack.c.b16 %v258, %v256
    %v273 = vpack.c.b16 %v259, %v257
    %v274 = vpack.c.b16 %v262, %v260
    %v275 = vpack.c.b16 %v263, %v261
    %v276 = vpack.c.b16 %v266, %v264
    %v277 = vpack.c.b16 %v267, %v265
    %v278 = vpack.c.b16 %v270, %v268
    %v279 = vpack.c.b16 %v271, %v269
    %v289 = vsel %vm213, %v239, 0
    %291 = vmatprep.subr.bf16.mxu0 %v273
    %292 = vmatpush1.bf16.msra.mxu0 %v272
    %293 = vmatprep.subr.bf16.mxu0 %v275
    %294 = vmatpush1.bf16.msra.mxu0 %v274
    %295 = vmatprep.subr.bf16.mxu0 %v277
    %296 = vmatpush1.bf16.msra.mxu0 %v276
    %297 = vmatprep.subr.bf16.mxu0 %v279
    %298 = vmatpush1.bf16.msra.mxu0 %v278
    %299 = vmatprep.subr.bf16.mxu0 0
    %300 = vmatpush1.bf16.msra.mxu0 0
    %301 = vmatprep.subr.bf16.mxu0 0
    %302 = vmatpush1.bf16.msra.mxu0 0
    %303 = vmatprep.subr.bf16.mxu0 0
    %304 = vmatpush1.bf16.msra.mxu0 0
    %305 = vmatprep.subr.bf16.mxu0 0
    %306 = vmatpush1.bf16.msra.mxu0 0
    %307 = vmatprep.subr.bf16.mxu0 0
    %308 = vmatpush1.bf16.msra.mxu0 0
    %309 = vmatprep.subr.bf16.mxu0 0
    %310 = vmatpush1.bf16.msra.mxu0 0
    %311 = vmatprep.subr.bf16.mxu0 0
    %312 = vmatpush1.bf16.msra.mxu0 0
    %313 = vmatprep.subr.bf16.mxu0 0
    %314 = vmatpush1.bf16.msra.mxu0 0
    %315 = vmatprep.subr.bf16.mxu0 0
    %316 = vmatpush1.bf16.msra.mxu0 0
    %317 = vmatprep.subr.bf16.mxu0 0
    %318 = vmatpush1.bf16.msra.mxu0 0
    %319 = vmatprep.subr.bf16.mxu0 0
    %320 = vmatpush1.bf16.msra.mxu0 0
    %321 = vmatprep.subr.bf16.mxu0 0
    %322 = vmatpush1.bf16.msra.mxu0 0
    %323 = vmatprep.mubr.bf16.mxu0 0
    %324 = vmatmul.mubr.bf16.gmra.mrb[0].mxu0 %v289
    %v325 = vpop.f32.mrb[0].mxu0
    %v326 = vadd.f32 0.0, %v325
    %v327 = vpop.f32.mrb[0].mxu0
    %v328 = vadd.f32 0.0, %v327
    %v329 = vpop.f32.mrb[0].mxu0
    %v330 = vpop.f32.mrb[0].mxu0
    %331 = vdwg.mxu0
    %s332 = smul.u32 0, 2
    %s333 = smul.addr %s332, 8
    %s334 = scalar_lea.vmem [#allocation2], %s333
    %v335 = vld [vmem:[%s334] sm:$0xff]
    %s336 = smul.u32 7, 2
    %s337 = smul.addr %s336, 8
    %s338 = scalar_lea.vmem [#allocation2], %s337
    %v339 = vld [vmem:[%s338] sm:$0xff]
    %v340 = vld [vmem:[%s338 + $0x8] sm:$0xff]
    %v341 = vadd.f32 %v335, %v326
    %v342 = vxor.u32 %v341, 2147483648
    %v343 = vmul.f32 %v342, 1.442695
    %v344 = vpow.pop %v343
    %v345 = vadd.f32 %v344, 1.0
    %v346 = vrcp.pop %v345
    %v347 = vmul.f32 1.0, %v346
    %348 = vrot.lane.b32.xlu0 %v235, 64
    %v349 = vpop.permute.xlu0 %348
    %v351 = vadd.f32 %v326, %v349
    %353 = vrot.lane.b32.xlu0 %v351, 64
    %v354 = vpop.permute.xlu0 %353
    %v356 = vmul.f32 %v347, %v354
    %358 = vrot.lane.b32.xlu0 %v356, 64
    %v359 = vpop.permute.xlu0 %358
    %v361 = vadd.f32 %v335, %v359
    %v362 = vtanh.pop %v361
    %v363 = vsub.f32 1.0, %v347
    %365 = vrot.lane.b32.xlu0 %v362, 96
    %v366 = vpop.permute.xlu0 %365
    %v368 = vmul.f32 %v363, %v366
    %370 = vrot.lane.b32.xlu0 %v238, 32
    %v371 = vpop.permute.xlu0 %370
    %v373 = vmul.f32 %v347, %v371
    %v374 = vadd.f32 %v368, %v373
    %v375 = vadd.f32 %v339, %v326
    %v376 = vadd.f32 %v340, %v328
    %v377 = vxor.u32 %v375, 2147483648
    %v378 = vxor.u32 %v376, 2147483648
    %v379 = vmul.f32 %v377, 1.442695
    %v380 = vpow.pop %v379
    %v381 = vmul.f32 %v378, 1.442695
    %v382 = vpow.pop %v381
    %v383 = vadd.f32 %v380, 1.0
    %v384 = vadd.f32 %v382, 1.0
    %v385 = vrcp.pop %v383
    %v386 = vmul.f32 1.0, %v385
    %v387 = vrcp.pop %v384
    %v388 = vmul.f32 1.0, %v387
    %v389 = vadd.f32 %v328, %v235
    %391 = vrot.lane.b32.xlu0 %v389, 64
    %v392 = vpop.permute.xlu0 %391
    %v394 = vmul.f32 %v386, %v392
    %396 = vrot.lane.b32.xlu0 %v394, 64
    %v397 = vpop.permute.xlu0 %396
    %v399 = vadd.f32 %v340, %v397
    %v400 = vtanh.pop %v399
    %v401 = vsub.f32 1.0, %v388
    %403 = vrot.lane.b32.xlu0 %v400, 96
    %v404 = vpop.permute.xlu0 %403
    %v406 = vmul.f32 %v401, %v404
    %407 = vrot.lane.b32.xlu0 %v238, 96
    %v408 = vpop.permute.xlu0 %407
    %v410 = vmul.f32 %v388, %v408
    %v411 = vadd.f32 %v406, %v410
    %vm412 = vcmp.gt.s32.totalorder %v229, 0
    %vm413 = vcmp.gt.s32.totalorder %v229, 7
    %v414 = vsel %vm412, 1, 0
    %415 = vset.pattern.permute.xlu0 0
    %416 = vperm.xlu0 %415, %v414
    %v417 = vpop.permute.xlu0 %416
    %vm418 = vcmp.eq.s32.totalorder %v417, 1
    %v419 = vsel %vm418, %v374, 0.0
    %v420 = vsel %vm413, 1, 0
    %421 = vset.pattern.permute.xlu0 0
    %422 = vperm.xlu0 %421, %v420
    %v423 = vpop.permute.xlu0 %422
    %vm424 = vcmp.eq.s32.totalorder %v423, 1
    %v425 = vsel %vm424, %v411, 0.0
    %427 = vrot.lane.b32.xlu0 %v419, 96
    %v428 = vpop.permute.xlu0 %427
    %430 = vst.msk [vmem:[#allocation9] sm:$0xff] %vm126, %v428
    %432 = vrot.lane.b32.xlu0 %v425, 32
    %v433 = vpop.permute.xlu0 %432
    %s435 = scalar_lea.vmem [#allocation9], 56
    %vm436 = vcmask 523520
    %437 = vst.msk [vmem:[%s435] sm:$0xff] %vm436, %v433
    %v438 = vsel %vm418, %v374, %v371
    %440 = vrot.lane.b32.xlu0 %v438, 96
    %v441 = vpop.permute.xlu0 %440
    %443 = vst.msk [vmem:[#allocation3] sm:$0xff] %vm126, %v441
    %v444 = vsel %vm424, %v411, %v408
    %446 = vrot.lane.b32.xlu0 %v444, 32
    %v447 = vpop.permute.xlu0 %446
    %449 = vst.msk [vmem:[#allocation3] sm:$0xff] %vm436, %v447
    %v450 = vld [vmem:[#allocation3] sm:$0xff]
    %v451 = vpack.c.bf16 %v450, %v450
    %v452 = vld [vmem:[%s4] sm:$0xff]
    %v453 = vld [vmem:[%s4 + $0x8] sm:$0xff]
    %v454 = vld [vmem:[%s4 + $0x10] sm:$0xff]
    %v455 = vld [vmem:[%s4 + $0x18] sm:$0xff]
    %v456 = vld [vmem:[%s4 + $0x20] sm:$0xff]
    %v457 = vld [vmem:[%s4 + $0x28] sm:$0xff]
    %v458 = vld [vmem:[%s4 + $0x30] sm:$0xff]
    %v459 = vld [vmem:[%s4 + $0x38] sm:$0xff]
    %v468 = vunpack.c.l.b16 %v452
    %v469 = vunpack.c.h.b16 %v452
    %v470 = vunpack.c.l.b16 %v453
    %v471 = vunpack.c.h.b16 %v453
    %v472 = vunpack.c.l.b16 %v454
    %v473 = vunpack.c.h.b16 %v454
    %v474 = vunpack.c.l.b16 %v455
    %v475 = vunpack.c.h.b16 %v455
    %v476 = vunpack.c.l.b16 %v456
    %v477 = vunpack.c.h.b16 %v456
    %v478 = vunpack.c.l.b16 %v457
    %v479 = vunpack.c.h.b16 %v457
    %v480 = vunpack.c.l.b16 %v458
    %v481 = vunpack.c.h.b16 %v458
    %v482 = vunpack.c.l.b16 %v459
    %v483 = vunpack.c.h.b16 %v459
    %v484 = vpack.c.b16 %v470, %v468
    %v485 = vpack.c.b16 %v471, %v469
    %v486 = vpack.c.b16 %v474, %v472
    %v487 = vpack.c.b16 %v475, %v473
    %v488 = vpack.c.b16 %v478, %v476
    %v489 = vpack.c.b16 %v479, %v477
    %v490 = vpack.c.b16 %v482, %v480
    %v491 = vpack.c.b16 %v483, %v481
    %v501 = vsel %vm213, %v451, 0
    %503 = vmatprep.subr.bf16.mxu0 %v485
    %504 = vmatpush1.bf16.msra.mxu0 %v484
    %505 = vmatprep.subr.bf16.mxu0 %v487
    %506 = vmatpush1.bf16.msra.mxu0 %v486
    %507 = vmatprep.subr.bf16.mxu0 %v489
    %508 = vmatpush1.bf16.msra.mxu0 %v488
    %509 = vmatprep.subr.bf16.mxu0 %v491
    %510 = vmatpush1.bf16.msra.mxu0 %v490
    %511 = vmatprep.subr.bf16.mxu0 0
    %512 = vmatpush1.bf16.msra.mxu0 0
    %513 = vmatprep.subr.bf16.mxu0 0
    %514 = vmatpush1.bf16.msra.mxu0 0
    %515 = vmatprep.subr.bf16.mxu0 0
    %516 = vmatpush1.bf16.msra.mxu0 0
    %517 = vmatprep.subr.bf16.mxu0 0
    %518 = vmatpush1.bf16.msra.mxu0 0
    %519 = vmatprep.subr.bf16.mxu0 0
    %520 = vmatpush1.bf16.msra.mxu0 0
    %521 = vmatprep.subr.bf16.mxu0 0
    %522 = vmatpush1.bf16.msra.mxu0 0
    %523 = vmatprep.subr.bf16.mxu0 0
    %524 = vmatpush1.bf16.msra.mxu0 0
    %525 = vmatprep.subr.bf16.mxu0 0
    %526 = vmatpush1.bf16.msra.mxu0 0
    %527 = vmatprep.subr.bf16.mxu0 0
    %528 = vmatpush1.bf16.msra.mxu0 0
    %529 = vmatprep.subr.bf16.mxu0 0
    %530 = vmatpush1.bf16.msra.mxu0 0
    %531 = vmatprep.subr.bf16.mxu0 0
    %532 = vmatpush1.bf16.msra.mxu0 0
    %533 = vmatprep.subr.bf16.mxu0 0
    %534 = vmatpush1.bf16.msra.mxu0 0
    %535 = vmatprep.mubr.bf16.mxu0 0
    %536 = vmatmul.mubr.bf16.gmra.mrb[0].mxu0 %v501
    %v537 = vpop.f32.mrb[0].mxu0
    %v538 = vadd.f32 0.0, %v537
    %v539 = vpop.f32.mrb[0].mxu0
    %v540 = vadd.f32 0.0, %v539
    %v541 = vpop.f32.mrb[0].mxu0
    %v542 = vpop.f32.mrb[0].mxu0
    %543 = vdwg.mxu0
    %s544 = smul.u32 1, 2
    %s545 = smul.addr %s544, 8
    %s546 = scalar_lea.vmem [#allocation2], %s545
    %v547 = vld [vmem:[%s546] sm:$0xff]
    %s548 = smul.u32 6, 2
    %s549 = smul.addr %s548, 8
    %s550 = scalar_lea.vmem [#allocation2], %s549
    %v551 = vld [vmem:[%s550] sm:$0xff]
    %v552 = vld [vmem:[%s550 + $0x8] sm:$0xff]
    %v553 = vadd.f32 %v547, %v538
    %v554 = vxor.u32 %v553, 2147483648
    %v555 = vmul.f32 %v554, 1.442695
    %v556 = vpow.pop %v555
    %v557 = vadd.f32 %v556, 1.0
    %v558 = vrcp.pop %v557
    %v559 = vmul.f32 1.0, %v558
    %v560 = vadd.f32 %v538, %v349
    %562 = vrot.lane.b32.xlu0 %v560, 64
    %v563 = vpop.permute.xlu0 %562
    %v565 = vmul.f32 %v559, %v563
    %567 = vrot.lane.b32.xlu0 %v565, 64
    %v568 = vpop.permute.xlu0 %567
    %v570 = vadd.f32 %v547, %v568
    %v571 = vtanh.pop %v570
    %v572 = vsub.f32 1.0, %v559
    %574 = vrot.lane.b32.xlu0 %v571, 96
    %v575 = vpop.permute.xlu0 %574
    %v577 = vmul.f32 %v572, %v575
    %579 = vrot.lane.b32.xlu0 %v450, 32
    %v580 = vpop.permute.xlu0 %579
    %v582 = vmul.f32 %v559, %v580
    %v583 = vadd.f32 %v577, %v582
    %v584 = vadd.f32 %v551, %v538
    %v585 = vadd.f32 %v552, %v540
    %v586 = vxor.u32 %v584, 2147483648
    %v587 = vxor.u32 %v585, 2147483648
    %v588 = vmul.f32 %v586, 1.442695
    %v589 = vpow.pop %v588
    %v590 = vmul.f32 %v587, 1.442695
    %v591 = vpow.pop %v590
    %v592 = vadd.f32 %v589, 1.0
    %v593 = vadd.f32 %v591, 1.0
    %v594 = vrcp.pop %v592
    %v595 = vmul.f32 1.0, %v594
    %v596 = vrcp.pop %v593
    %v597 = vmul.f32 1.0, %v596
    %v598 = vadd.f32 %v540, %v235
    %600 = vrot.lane.b32.xlu0 %v598, 64
    %v601 = vpop.permute.xlu0 %600
    %v603 = vmul.f32 %v595, %v601
    %605 = vrot.lane.b32.xlu0 %v603, 64
    %v606 = vpop.permute.xlu0 %605
    %v608 = vadd.f32 %v552, %v606
    %v609 = vtanh.pop %v608
    %v610 = vsub.f32 1.0, %v597
    %612 = vrot.lane.b32.xlu0 %v609, 96
    %v613 = vpop.permute.xlu0 %612
    %v615 = vmul.f32 %v610, %v613
    %616 = vrot.lane.b32.xlu0 %v450, 96
    %v617 = vpop.permute.xlu0 %616
    %v619 = vmul.f32 %v597, %v617
    %v620 = vadd.f32 %v615, %v619
    %vm621 = vcmp.gt.s32.totalorder %v229, 1
    %vm622 = vcmp.gt.s32.totalorder %v229, 6
    %v623 = vsel %vm621, 1, 0
    %624 = vset.pattern.permute.xlu0 0
    %625 = vperm.xlu0 %624, %v623
    %v626 = vpop.permute.xlu0 %625
    %vm627 = vcmp.eq.s32.totalorder %v626, 1
    %v628 = vsel %vm627, %v583, 0.0
    %v629 = vsel %vm622, 1, 0
    %630 = vset.pattern.permute.xlu0 0
    %631 = vperm.xlu0 %630, %v629
    %v632 = vpop.permute.xlu0 %631
    %vm633 = vcmp.eq.s32.totalorder %v632, 1
    %v634 = vsel %vm633, %v620, 0.0
    %636 = vrot.lane.b32.xlu0 %v628, 96
    %v637 = vpop.permute.xlu0 %636
    %s639 = scalar_lea.vmem [#allocation9], 8
    %640 = vst.msk [vmem:[%s639] sm:$0xff] %vm126, %v637
    %642 = vrot.lane.b32.xlu0 %v634, 32
    %v643 = vpop.permute.xlu0 %642
    %s645 = scalar_lea.vmem [#allocation9], 48
    %646 = vst.msk [vmem:[%s645] sm:$0xff] %vm436, %v643
    %v647 = vsel %vm627, %v583, %v580
    %649 = vrot.lane.b32.xlu0 %v647, 96
    %v650 = vpop.permute.xlu0 %649
    %652 = vst.msk [vmem:[#allocation3] sm:$0xff] %vm126, %v650
    %v653 = vsel %vm633, %v620, %v617
    %655 = vrot.lane.b32.xlu0 %v653, 32
    %v656 = vpop.permute.xlu0 %655
    %658 = vst.msk [vmem:[#allocation3] sm:$0xff] %vm436, %v656
    %v659 = vld [vmem:[#allocation3] sm:$0xff]
    %v660 = vpack.c.bf16 %v659, %v659
    %v661 = vld [vmem:[%s4] sm:$0xff]
    %v662 = vld [vmem:[%s4 + $0x8] sm:$0xff]
    %v663 = vld [vmem:[%s4 + $0x10] sm:$0xff]
    %v664 = vld [vmem:[%s4 + $0x18] sm:$0xff]
    %v665 = vld [vmem:[%s4 + $0x20] sm:$0xff]
    %v666 = vld [vmem:[%s4 + $0x28] sm:$0xff]
    %v667 = vld [vmem:[%s4 + $0x30] sm:$0xff]
    %v668 = vld [vmem:[%s4 + $0x38] sm:$0xff]
    %v677 = vunpack.c.l.b16 %v661
    %v678 = vunpack.c.h.b16 %v661
    %v679 = vunpack.c.l.b16 %v662
    %v680 = vunpack.c.h.b16 %v662
    %v681 = vunpack.c.l.b16 %v663
    %v682 = vunpack.c.h.b16 %v663
    %v683 = vunpack.c.l.b16 %v664
    %v684 = vunpack.c.h.b16 %v664
    %v685 = vunpack.c.l.b16 %v665
    %v686 = vunpack.c.h.b16 %v665
    %v687 = vunpack.c.l.b16 %v666
    %v688 = vunpack.c.h.b16 %v666
    %v689 = vunpack.c.l.b16 %v667
    %v690 = vunpack.c.h.b16 %v667
    %v691 = vunpack.c.l.b16 %v668
    %v692 = vunpack.c.h.b16 %v668
    %v693 = vpack.c.b16 %v679, %v677
    %v694 = vpack.c.b16 %v680, %v678
    %v695 = vpack.c.b16 %v683, %v681
    %v696 = vpack.c.b16 %v684, %v682
    %v697 = vpack.c.b16 %v687, %v685
    %v698 = vpack.c.b16 %v688, %v686
    %v699 = vpack.c.b16 %v691, %v689
    %v700 = vpack.c.b16 %v692, %v690
    %v710 = vsel %vm213, %v660, 0
    %712 = vmatprep.subr.bf16.mxu0 %v694
    %713 = vmatpush1.bf16.msra.mxu0 %v693
    %714 = vmatprep.subr.bf16.mxu0 %v696
    %715 = vmatpush1.bf16.msra.mxu0 %v695
    %716 = vmatprep.subr.bf16.mxu0 %v698
    %717 = vmatpush1.bf16.msra.mxu0 %v697
    %718 = vmatprep.subr.bf16.mxu0 %v700
    %719 = vmatpush1.bf16.msra.mxu0 %v699
    %720 = vmatprep.subr.bf16.mxu0 0
    %721 = vmatpush1.bf16.msra.mxu0 0
    %722 = vmatprep.subr.bf16.mxu0 0
    %723 = vmatpush1.bf16.msra.mxu0 0
    %724 = vmatprep.subr.bf16.mxu0 0
    %725 = vmatpush1.bf16.msra.mxu0 0
    %726 = vmatprep.subr.bf16.mxu0 0
    %727 = vmatpush1.bf16.msra.mxu0 0
    %728 = vmatprep.subr.bf16.mxu0 0
    %729 = vmatpush1.bf16.msra.mxu0 0
    %730 = vmatprep.subr.bf16.mxu0 0
    %731 = vmatpush1.bf16.msra.mxu0 0
    %732 = vmatprep.subr.bf16.mxu0 0
    %733 = vmatpush1.bf16.msra.mxu0 0
    %734 = vmatprep.subr.bf16.mxu0 0
    %735 = vmatpush1.bf16.msra.mxu0 0
    %736 = vmatprep.subr.bf16.mxu0 0
    %737 = vmatpush1.bf16.msra.mxu0 0
    %738 = vmatprep.subr.bf16.mxu0 0
    %739 = vmatpush1.bf16.msra.mxu0 0
    %740 = vmatprep.subr.bf16.mxu0 0
    %741 = vmatpush1.bf16.msra.mxu0 0
    %742 = vmatprep.subr.bf16.mxu0 0
    %743 = vmatpush1.bf16.msra.mxu0 0
    %744 = vmatprep.mubr.bf16.mxu0 0
    %745 = vmatmul.mubr.bf16.gmra.mrb[0].mxu0 %v710
    %v746 = vpop.f32.mrb[0].mxu0
    %v747 = vadd.f32 0.0, %v746
    %v748 = vpop.f32.mrb[0].mxu0
    %v749 = vadd.f32 0.0, %v748
    %v750 = vpop.f32.mrb[0].mxu0
    %v751 = vpop.f32.mrb[0].mxu0
    %752 = vdwg.mxu0
    %s753 = smul.u32 2, 2
    %s754 = smul.addr %s753, 8
    %s755 = scalar_lea.vmem [#allocation2], %s754
    %v756 = vld [vmem:[%s755] sm:$0xff]
    %s757 = smul.u32 5, 2
    %s758 = smul.addr %s757, 8
    %s759 = scalar_lea.vmem [#allocation2], %s758
    %v760 = vld [vmem:[%s759] sm:$0xff]
    %v761 = vld [vmem:[%s759 + $0x8] sm:$0xff]
    %v762 = vadd.f32 %v756, %v747
    %v763 = vxor.u32 %v762, 2147483648
    %v764 = vmul.f32 %v763, 1.442695
    %v765 = vpow.pop %v764
    %v766 = vadd.f32 %v765, 1.0
    %v767 = vrcp.pop %v766
    %v768 = vmul.f32 1.0, %v767
    %v769 = vadd.f32 %v747, %v349
    %771 = vrot.lane.b32.xlu0 %v769, 64
    %v772 = vpop.permute.xlu0 %771
    %v774 = vmul.f32 %v768, %v772
    %776 = vrot.lane.b32.xlu0 %v774, 64
    %v777 = vpop.permute.xlu0 %776
    %v779 = vadd.f32 %v756, %v777
    %v780 = vtanh.pop %v779
    %v781 = vsub.f32 1.0, %v768
    %783 = vrot.lane.b32.xlu0 %v780, 96
    %v784 = vpop.permute.xlu0 %783
    %v786 = vmul.f32 %v781, %v784
    %788 = vrot.lane.b32.xlu0 %v659, 32
    %v789 = vpop.permute.xlu0 %788
    %v791 = vmul.f32 %v768, %v789
    %v792 = vadd.f32 %v786, %v791
    %v793 = vadd.f32 %v760, %v747
    %v794 = vadd.f32 %v761, %v749
    %v795 = vxor.u32 %v793, 2147483648
    %v796 = vxor.u32 %v794, 2147483648
    %v797 = vmul.f32 %v795, 1.442695
    %v798 = vpow.pop %v797
    %v799 = vmul.f32 %v796, 1.442695
    %v800 = vpow.pop %v799
    %v801 = vadd.f32 %v798, 1.0
    %v802 = vadd.f32 %v800, 1.0
    %v803 = vrcp.pop %v801
    %v804 = vmul.f32 1.0, %v803
    %v805 = vrcp.pop %v802
    %v806 = vmul.f32 1.0, %v805
    %v807 = vadd.f32 %v749, %v235
    %809 = vrot.lane.b32.xlu0 %v807, 64
    %v810 = vpop.permute.xlu0 %809
    %v812 = vmul.f32 %v804, %v810
    %814 = vrot.lane.b32.xlu0 %v812, 64
    %v815 = vpop.permute.xlu0 %814
    %v817 = vadd.f32 %v761, %v815
    %v818 = vtanh.pop %v817
    %v819 = vsub.f32 1.0, %v806
    %821 = vrot.lane.b32.xlu0 %v818, 96
    %v822 = vpop.permute.xlu0 %821
    %v824 = vmul.f32 %v819, %v822
    %825 = vrot.lane.b32.xlu0 %v659, 96
    %v826 = vpop.permute.xlu0 %825
    %v828 = vmul.f32 %v806, %v826
    %v829 = vadd.f32 %v824, %v828
    %vm830 = vcmp.gt.s32.totalorder %v229, 2
    %vm831 = vcmp.gt.s32.totalorder %v229, 5
    %v832 = vsel %vm830, 1, 0
    %833 = vset.pattern.permute.xlu0 0
    %834 = vperm.xlu0 %833, %v832
    %v835 = vpop.permute.xlu0 %834
    %vm836 = vcmp.eq.s32.totalorder %v835, 1
    %v837 = vsel %vm836, %v792, 0.0
    %v838 = vsel %vm831, 1, 0
    %839 = vset.pattern.permute.xlu0 0
    %840 = vperm.xlu0 %839, %v838
    %v841 = vpop.permute.xlu0 %840
    %vm842 = vcmp.eq.s32.totalorder %v841, 1
    %v843 = vsel %vm842, %v829, 0.0
    %845 = vrot.lane.b32.xlu0 %v837, 96
    %v846 = vpop.permute.xlu0 %845
    %s848 = scalar_lea.vmem [#allocation9], 16
    %849 = vst.msk [vmem:[%s848] sm:$0xff] %vm126, %v846
    %851 = vrot.lane.b32.xlu0 %v843, 32
    %v852 = vpop.permute.xlu0 %851
    %s854 = scalar_lea.vmem [#allocation9], 40
    %855 = vst.msk [vmem:[%s854] sm:$0xff] %vm436, %v852
    %v856 = vsel %vm836, %v792, %v789
    %858 = vrot.lane.b32.xlu0 %v856, 96
    %v859 = vpop.permute.xlu0 %858
    %861 = vst.msk [vmem:[#allocation3] sm:$0xff] %vm126, %v859
    %v862 = vsel %vm842, %v829, %v826
    %864 = vrot.lane.b32.xlu0 %v862, 32
    %v865 = vpop.permute.xlu0 %864
    %867 = vst.msk [vmem:[#allocation3] sm:$0xff] %vm436, %v865
    %v868 = vld [vmem:[#allocation3] sm:$0xff]
    %v869 = vpack.c.bf16 %v868, %v868
    %v870 = vld [vmem:[%s4] sm:$0xff]
    %v871 = vld [vmem:[%s4 + $0x8] sm:$0xff]
    %v872 = vld [vmem:[%s4 + $0x10] sm:$0xff]
    %v873 = vld [vmem:[%s4 + $0x18] sm:$0xff]
    %v874 = vld [vmem:[%s4 + $0x20] sm:$0xff]
    %v875 = vld [vmem:[%s4 + $0x28] sm:$0xff]
    %v876 = vld [vmem:[%s4 + $0x30] sm:$0xff]
    %v877 = vld [vmem:[%s4 + $0x38] sm:$0xff]
    %v886 = vunpack.c.l.b16 %v870
    %v887 = vunpack.c.h.b16 %v870
    %v888 = vunpack.c.l.b16 %v871
    %v889 = vunpack.c.h.b16 %v871
    %v890 = vunpack.c.l.b16 %v872
    %v891 = vunpack.c.h.b16 %v872
    %v892 = vunpack.c.l.b16 %v873
    %v893 = vunpack.c.h.b16 %v873
    %v894 = vunpack.c.l.b16 %v874
    %v895 = vunpack.c.h.b16 %v874
    %v896 = vunpack.c.l.b16 %v875
    %v897 = vunpack.c.h.b16 %v875
    %v898 = vunpack.c.l.b16 %v876
    %v899 = vunpack.c.h.b16 %v876
    %v900 = vunpack.c.l.b16 %v877
    %v901 = vunpack.c.h.b16 %v877
    %v902 = vpack.c.b16 %v888, %v886
    %v903 = vpack.c.b16 %v889, %v887
    %v904 = vpack.c.b16 %v892, %v890
    %v905 = vpack.c.b16 %v893, %v891
    %v906 = vpack.c.b16 %v896, %v894
    %v907 = vpack.c.b16 %v897, %v895
    %v908 = vpack.c.b16 %v900, %v898
    %v909 = vpack.c.b16 %v901, %v899
    %v919 = vsel %vm213, %v869, 0
    %921 = vmatprep.subr.bf16.mxu0 %v903
    %922 = vmatpush1.bf16.msra.mxu0 %v902
    %923 = vmatprep.subr.bf16.mxu0 %v905
    %924 = vmatpush1.bf16.msra.mxu0 %v904
    %925 = vmatprep.subr.bf16.mxu0 %v907
    %926 = vmatpush1.bf16.msra.mxu0 %v906
    %927 = vmatprep.subr.bf16.mxu0 %v909
    %928 = vmatpush1.bf16.msra.mxu0 %v908
    %929 = vmatprep.subr.bf16.mxu0 0
    %930 = vmatpush1.bf16.msra.mxu0 0
    %931 = vmatprep.subr.bf16.mxu0 0
    %932 = vmatpush1.bf16.msra.mxu0 0
    %933 = vmatprep.subr.bf16.mxu0 0
    %934 = vmatpush1.bf16.msra.mxu0 0
    %935 = vmatprep.subr.bf16.mxu0 0
    %936 = vmatpush1.bf16.msra.mxu0 0
    %937 = vmatprep.subr.bf16.mxu0 0
    %938 = vmatpush1.bf16.msra.mxu0 0
    %939 = vmatprep.subr.bf16.mxu0 0
    %940 = vmatpush1.bf16.msra.mxu0 0
    %941 = vmatprep.subr.bf16.mxu0 0
    %942 = vmatpush1.bf16.msra.mxu0 0
    %943 = vmatprep.subr.bf16.mxu0 0
    %944 = vmatpush1.bf16.msra.mxu0 0
    %945 = vmatprep.subr.bf16.mxu0 0
    %946 = vmatpush1.bf16.msra.mxu0 0
    %947 = vmatprep.subr.bf16.mxu0 0
    %948 = vmatpush1.bf16.msra.mxu0 0
    %949 = vmatprep.subr.bf16.mxu0 0
    %950 = vmatpush1.bf16.msra.mxu0 0
    %951 = vmatprep.subr.bf16.mxu0 0
    %952 = vmatpush1.bf16.msra.mxu0 0
    %953 = vmatprep.mubr.bf16.mxu0 0
    %954 = vmatmul.mubr.bf16.gmra.mrb[0].mxu0 %v919
    %v955 = vpop.f32.mrb[0].mxu0
    %v956 = vadd.f32 0.0, %v955
    %v957 = vpop.f32.mrb[0].mxu0
    %v958 = vadd.f32 0.0, %v957
    %v959 = vpop.f32.mrb[0].mxu0
    %v960 = vpop.f32.mrb[0].mxu0
    %961 = vdwg.mxu0
    %s962 = smul.u32 3, 2
    %s963 = smul.addr %s962, 8
    %s964 = scalar_lea.vmem [#allocation2], %s963
    %v965 = vld [vmem:[%s964] sm:$0xff]
    %s966 = smul.u32 4, 2
    %s967 = smul.addr %s966, 8
    %s968 = scalar_lea.vmem [#allocation2], %s967
    %v969 = vld [vmem:[%s968] sm:$0xff]
    %v970 = vld [vmem:[%s968 + $0x8] sm:$0xff]
    %v971 = vadd.f32 %v965, %v956
    %v972 = vxor.u32 %v971, 2147483648
    %v973 = vmul.f32 %v972, 1.442695
    %v974 = vpow.pop %v973
    %v975 = vadd.f32 %v974, 1.0
    %v976 = vrcp.pop %v975
    %v977 = vmul.f32 1.0, %v976
    %v978 = vadd.f32 %v956, %v349
    %980 = vrot.lane.b32.xlu0 %v978, 64
    %v981 = vpop.permute.xlu0 %980
    %v983 = vmul.f32 %v977, %v981
    %985 = vrot.lane.b32.xlu0 %v983, 64
    %v986 = vpop.permute.xlu0 %985
    %v988 = vadd.f32 %v965, %v986
    %v989 = vtanh.pop %v988
    %v990 = vsub.f32 1.0, %v977
    %992 = vrot.lane.b32.xlu0 %v989, 96
    %v993 = vpop.permute.xlu0 %992
    %v995 = vmul.f32 %v990, %v993
    %997 = vrot.lane.b32.xlu0 %v868, 32
    %v998 = vpop.permute.xlu0 %997
    %v1000 = vmul.f32 %v977, %v998
    %v1001 = vadd.f32 %v995, %v1000
    %v1002 = vadd.f32 %v969, %v956
    %v1003 = vadd.f32 %v970, %v958
    %v1004 = vxor.u32 %v1002, 2147483648
    %v1005 = vxor.u32 %v1003, 2147483648
    %v1006 = vmul.f32 %v1004, 1.442695
    %v1007 = vpow.pop %v1006
    %v1008 = vmul.f32 %v1005, 1.442695
    %v1009 = vpow.pop %v1008
    %v1010 = vadd.f32 %v1007, 1.0
    %v1011 = vadd.f32 %v1009, 1.0
    %v1012 = vrcp.pop %v1010
    %v1013 = vmul.f32 1.0, %v1012
    %v1014 = vrcp.pop %v1011
    %v1015 = vmul.f32 1.0, %v1014
    %v1016 = vadd.f32 %v958, %v235
    %1018 = vrot.lane.b32.xlu0 %v1016, 64
    %v1019 = vpop.permute.xlu0 %1018
    %v1021 = vmul.f32 %v1013, %v1019
    %1023 = vrot.lane.b32.xlu0 %v1021, 64
    %v1024 = vpop.permute.xlu0 %1023
    %v1026 = vadd.f32 %v970, %v1024
    %v1027 = vtanh.pop %v1026
    %v1028 = vsub.f32 1.0, %v1015
    %1030 = vrot.lane.b32.xlu0 %v1027, 96
    %v1031 = vpop.permute.xlu0 %1030
    %v1033 = vmul.f32 %v1028, %v1031
    %1034 = vrot.lane.b32.xlu0 %v868, 96
    %v1035 = vpop.permute.xlu0 %1034
    %v1037 = vmul.f32 %v1015, %v1035
    %v1038 = vadd.f32 %v1033, %v1037
    %vm1039 = vcmp.gt.s32.totalorder %v229, 3
    %vm1040 = vcmp.gt.s32.totalorder %v229, 4
    %v1041 = vsel %vm1039, 1, 0
    %1042 = vset.pattern.permute.xlu0 0
    %1043 = vperm.xlu0 %1042, %v1041
    %v1044 = vpop.permute.xlu0 %1043
    %vm1045 = vcmp.eq.s32.totalorder %v1044, 1
    %v1046 = vsel %vm1045, %v1001, 0.0
    %v1047 = vsel %vm1040, 1, 0
    %1048 = vset.pattern.permute.xlu0 0
    %1049 = vperm.xlu0 %1048, %v1047
    %v1050 = vpop.permute.xlu0 %1049
    %vm1051 = vcmp.eq.s32.totalorder %v1050, 1
    %v1052 = vsel %vm1051, %v1038, 0.0
    %1054 = vrot.lane.b32.xlu0 %v1046, 96
    %v1055 = vpop.permute.xlu0 %1054
    %s1057 = scalar_lea.vmem [#allocation9], 24
    %1058 = vst.msk [vmem:[%s1057] sm:$0xff] %vm126, %v1055
    %1060 = vrot.lane.b32.xlu0 %v1052, 32
    %v1061 = vpop.permute.xlu0 %1060
    %s1063 = scalar_lea.vmem [#allocation9], 32
    %1064 = vst.msk [vmem:[%s1063] sm:$0xff] %vm436, %v1061
    %v1065 = vsel %vm1045, %v1001, %v998
    %1067 = vrot.lane.b32.xlu0 %v1065, 96
    %v1068 = vpop.permute.xlu0 %1067
    %1070 = vst.msk [vmem:[#allocation3] sm:$0xff] %vm126, %v1068
    %v1071 = vsel %vm1051, %v1038, %v1035
    %1073 = vrot.lane.b32.xlu0 %v1071, 32
    %v1074 = vpop.permute.xlu0 %1073
    %1076 = vst.msk [vmem:[#allocation3] sm:$0xff] %vm436, %v1074
    %v1077 = vld [vmem:[#allocation3] sm:$0xff]
    %v1078 = vpack.c.bf16 %v1077, %v1077
    %v1079 = vld [vmem:[%s4] sm:$0xff]
    %v1080 = vld [vmem:[%s4 + $0x8] sm:$0xff]
    %v1081 = vld [vmem:[%s4 + $0x10] sm:$0xff]
    %v1082 = vld [vmem:[%s4 + $0x18] sm:$0xff]
    %v1083 = vld [vmem:[%s4 + $0x20] sm:$0xff]
    %v1084 = vld [vmem:[%s4 + $0x28] sm:$0xff]
    %v1085 = vld [vmem:[%s4 + $0x30] sm:$0xff]
    %v1086 = vld [vmem:[%s4 + $0x38] sm:$0xff]
    %v1095 = vunpack.c.l.b16 %v1079
    %v1096 = vunpack.c.h.b16 %v1079
    %v1097 = vunpack.c.l.b16 %v1080
    %v1098 = vunpack.c.h.b16 %v1080
    %v1099 = vunpack.c.l.b16 %v1081
    %v1100 = vunpack.c.h.b16 %v1081
    %v1101 = vunpack.c.l.b16 %v1082
    %v1102 = vunpack.c.h.b16 %v1082
    %v1103 = vunpack.c.l.b16 %v1083
    %v1104 = vunpack.c.h.b16 %v1083
    %v1105 = vunpack.c.l.b16 %v1084
    %v1106 = vunpack.c.h.b16 %v1084
    %v1107 = vunpack.c.l.b16 %v1085
    %v1108 = vunpack.c.h.b16 %v1085
    %v1109 = vunpack.c.l.b16 %v1086
    %v1110 = vunpack.c.h.b16 %v1086
    %v1111 = vpack.c.b16 %v1097, %v1095
    %v1112 = vpack.c.b16 %v1098, %v1096
    %v1113 = vpack.c.b16 %v1101, %v1099
    %v1114 = vpack.c.b16 %v1102, %v1100
    %v1115 = vpack.c.b16 %v1105, %v1103
    %v1116 = vpack.c.b16 %v1106, %v1104
    %v1117 = vpack.c.b16 %v1109, %v1107
    %v1118 = vpack.c.b16 %v1110, %v1108
    %v1128 = vsel %vm213, %v1078, 0
    %1130 = vmatprep.subr.bf16.mxu0 %v1112
    %1131 = vmatpush1.bf16.msra.mxu0 %v1111
    %1132 = vmatprep.subr.bf16.mxu0 %v1114
    %1133 = vmatpush1.bf16.msra.mxu0 %v1113
    %1134 = vmatprep.subr.bf16.mxu0 %v1116
    %1135 = vmatpush1.bf16.msra.mxu0 %v1115
    %1136 = vmatprep.subr.bf16.mxu0 %v1118
    %1137 = vmatpush1.bf16.msra.mxu0 %v1117
    %1138 = vmatprep.subr.bf16.mxu0 0
    %1139 = vmatpush1.bf16.msra.mxu0 0
    %1140 = vmatprep.subr.bf16.mxu0 0
    %1141 = vmatpush1.bf16.msra.mxu0 0
    %1142 = vmatprep.subr.bf16.mxu0 0
    %1143 = vmatpush1.bf16.msra.mxu0 0
    %1144 = vmatprep.subr.bf16.mxu0 0
    %1145 = vmatpush1.bf16.msra.mxu0 0
    %1146 = vmatprep.subr.bf16.mxu0 0
    %1147 = vmatpush1.bf16.msra.mxu0 0
    %1148 = vmatprep.subr.bf16.mxu0 0
    %1149 = vmatpush1.bf16.msra.mxu0 0
    %1150 = vmatprep.subr.bf16.mxu0 0
    %1151 = vmatpush1.bf16.msra.mxu0 0
    %1152 = vmatprep.subr.bf16.mxu0 0
    %1153 = vmatpush1.bf16.msra.mxu0 0
    %1154 = vmatprep.subr.bf16.mxu0 0
    %1155 = vmatpush1.bf16.msra.mxu0 0
    %1156 = vmatprep.subr.bf16.mxu0 0
    %1157 = vmatpush1.bf16.msra.mxu0 0
    %1158 = vmatprep.subr.bf16.mxu0 0
    %1159 = vmatpush1.bf16.msra.mxu0 0
    %1160 = vmatprep.subr.bf16.mxu0 0
    %1161 = vmatpush1.bf16.msra.mxu0 0
    %1162 = vmatprep.mubr.bf16.mxu0 0
    %1163 = vmatmul.mubr.bf16.gmra.mrb[0].mxu0 %v1128
    %v1164 = vpop.f32.mrb[0].mxu0
    %v1165 = vadd.f32 0.0, %v1164
    %v1166 = vpop.f32.mrb[0].mxu0
    %v1167 = vadd.f32 0.0, %v1166
    %v1168 = vpop.f32.mrb[0].mxu0
    %v1169 = vpop.f32.mrb[0].mxu0
    %1170 = vdwg.mxu0
    %v1171 = vld [vmem:[%s968] sm:$0xff]
    %v1172 = vld [vmem:[%s964] sm:$0xff]
    %v1173 = vld [vmem:[%s964 + $0x8] sm:$0xff]
    %v1174 = vadd.f32 %v1171, %v1165
    %v1175 = vxor.u32 %v1174, 2147483648
    %v1176 = vmul.f32 %v1175, 1.442695
    %v1177 = vpow.pop %v1176
    %v1178 = vadd.f32 %v1177, 1.0
    %v1179 = vrcp.pop %v1178
    %v1180 = vmul.f32 1.0, %v1179
    %v1181 = vadd.f32 %v1165, %v349
    %1183 = vrot.lane.b32.xlu0 %v1181, 64
    %v1184 = vpop.permute.xlu0 %1183
    %v1186 = vmul.f32 %v1180, %v1184
    %1188 = vrot.lane.b32.xlu0 %v1186, 64
    %v1189 = vpop.permute.xlu0 %1188
    %v1191 = vadd.f32 %v1171, %v1189
    %v1192 = vtanh.pop %v1191
    %v1193 = vsub.f32 1.0, %v1180
    %1195 = vrot.lane.b32.xlu0 %v1192, 96
    %v1196 = vpop.permute.xlu0 %1195
    %v1198 = vmul.f32 %v1193, %v1196
    %1200 = vrot.lane.b32.xlu0 %v1077, 32
    %v1201 = vpop.permute.xlu0 %1200
    %v1203 = vmul.f32 %v1180, %v1201
    %v1204 = vadd.f32 %v1198, %v1203
    %v1205 = vadd.f32 %v1172, %v1165
    %v1206 = vadd.f32 %v1173, %v1167
    %v1207 = vxor.u32 %v1205, 2147483648
    %v1208 = vxor.u32 %v1206, 2147483648
    %v1209 = vmul.f32 %v1207, 1.442695
    %v1210 = vpow.pop %v1209
    %v1211 = vmul.f32 %v1208, 1.442695
    %v1212 = vpow.pop %v1211
    %v1213 = vadd.f32 %v1210, 1.0
    %v1214 = vadd.f32 %v1212, 1.0
    %v1215 = vrcp.pop %v1213
    %v1216 = vmul.f32 1.0, %v1215
    %v1217 = vrcp.pop %v1214
    %v1218 = vmul.f32 1.0, %v1217
    %v1219 = vadd.f32 %v1167, %v235
    %1221 = vrot.lane.b32.xlu0 %v1219, 64
    %v1222 = vpop.permute.xlu0 %1221
    %v1224 = vmul.f32 %v1216, %v1222
    %1226 = vrot.lane.b32.xlu0 %v1224, 64
    %v1227 = vpop.permute.xlu0 %1226
    %v1229 = vadd.f32 %v1173, %v1227
    %v1230 = vtanh.pop %v1229
    %v1231 = vsub.f32 1.0, %v1218
    %1233 = vrot.lane.b32.xlu0 %v1230, 96
    %v1234 = vpop.permute.xlu0 %1233
    %v1236 = vmul.f32 %v1231, %v1234
    %1237 = vrot.lane.b32.xlu0 %v1077, 96
    %v1238 = vpop.permute.xlu0 %1237
    %v1240 = vmul.f32 %v1218, %v1238
    %v1241 = vadd.f32 %v1236, %v1240
    %v1242 = vsel %vm1051, %v1204, 0.0
    %v1243 = vsel %vm1045, %v1241, 0.0
    %1245 = vrot.lane.b32.xlu0 %v1242, 96
    %v1246 = vpop.permute.xlu0 %1245
    %1248 = vst.msk [vmem:[%s1063] sm:$0xff] %vm126, %v1246
    %1250 = vrot.lane.b32.xlu0 %v1243, 32
    %v1251 = vpop.permute.xlu0 %1250
    %1253 = vst.msk [vmem:[%s1057] sm:$0xff] %vm436, %v1251
    %v1254 = vsel %vm1051, %v1204, %v1201
    %1256 = vrot.lane.b32.xlu0 %v1254, 96
    %v1257 = vpop.permute.xlu0 %1256
    %1259 = vst.msk [vmem:[#allocation3] sm:$0xff] %vm126, %v1257
    %v1260 = vsel %vm1045, %v1241, %v1238
    %1262 = vrot.lane.b32.xlu0 %v1260, 32
    %v1263 = vpop.permute.xlu0 %1262
    %1265 = vst.msk [vmem:[#allocation3] sm:$0xff] %vm436, %v1263
    %v1266 = vld [vmem:[#allocation3] sm:$0xff]
    %v1267 = vpack.c.bf16 %v1266, %v1266
    %v1268 = vld [vmem:[%s4] sm:$0xff]
    %v1269 = vld [vmem:[%s4 + $0x8] sm:$0xff]
    %v1270 = vld [vmem:[%s4 + $0x10] sm:$0xff]
    %v1271 = vld [vmem:[%s4 + $0x18] sm:$0xff]
    %v1272 = vld [vmem:[%s4 + $0x20] sm:$0xff]
    %v1273 = vld [vmem:[%s4 + $0x28] sm:$0xff]
    %v1274 = vld [vmem:[%s4 + $0x30] sm:$0xff]
    %v1275 = vld [vmem:[%s4 + $0x38] sm:$0xff]
    %v1284 = vunpack.c.l.b16 %v1268
    %v1285 = vunpack.c.h.b16 %v1268
    %v1286 = vunpack.c.l.b16 %v1269
    %v1287 = vunpack.c.h.b16 %v1269
    %v1288 = vunpack.c.l.b16 %v1270
    %v1289 = vunpack.c.h.b16 %v1270
    %v1290 = vunpack.c.l.b16 %v1271
    %v1291 = vunpack.c.h.b16 %v1271
    %v1292 = vunpack.c.l.b16 %v1272
    %v1293 = vunpack.c.h.b16 %v1272
    %v1294 = vunpack.c.l.b16 %v1273
    %v1295 = vunpack.c.h.b16 %v1273
    %v1296 = vunpack.c.l.b16 %v1274
    %v1297 = vunpack.c.h.b16 %v1274
    %v1298 = vunpack.c.l.b16 %v1275
    %v1299 = vunpack.c.h.b16 %v1275
    %v1300 = vpack.c.b16 %v1286, %v1284
    %v1301 = vpack.c.b16 %v1287, %v1285
    %v1302 = vpack.c.b16 %v1290, %v1288
    %v1303 = vpack.c.b16 %v1291, %v1289
    %v1304 = vpack.c.b16 %v1294, %v1292
    %v1305 = vpack.c.b16 %v1295, %v1293
    %v1306 = vpack.c.b16 %v1298, %v1296
    %v1307 = vpack.c.b16 %v1299, %v1297
    %v1317 = vsel %vm213, %v1267, 0
    %1319 = vmatprep.subr.bf16.mxu0 %v1301
    %1320 = vmatpush1.bf16.msra.mxu0 %v1300
    %1321 = vmatprep.subr.bf16.mxu0 %v1303
    %1322 = vmatpush1.bf16.msra.mxu0 %v1302
    %1323 = vmatprep.subr.bf16.mxu0 %v1305
    %1324 = vmatpush1.bf16.msra.mxu0 %v1304
    %1325 = vmatprep.subr.bf16.mxu0 %v1307
    %1326 = vmatpush1.bf16.msra.mxu0 %v1306
    %1327 = vmatprep.subr.bf16.mxu0 0
    %1328 = vmatpush1.bf16.msra.mxu0 0
    %1329 = vmatprep.subr.bf16.mxu0 0
    %1330 = vmatpush1.bf16.msra.mxu0 0
    %1331 = vmatprep.subr.bf16.mxu0 0
    %1332 = vmatpush1.bf16.msra.mxu0 0
    %1333 = vmatprep.subr.bf16.mxu0 0
    %1334 = vmatpush1.bf16.msra.mxu0 0
    %1335 = vmatprep.subr.bf16.mxu0 0
    %1336 = vmatpush1.bf16.msra.mxu0 0
    %1337 = vmatprep.subr.bf16.mxu0 0
    %1338 = vmatpush1.bf16.msra.mxu0 0
    %1339 = vmatprep.subr.bf16.mxu0 0
    %1340 = vmatpush1.bf16.msra.mxu0 0
    %1341 = vmatprep.subr.bf16.mxu0 0
    %1342 = vmatpush1.bf16.msra.mxu0 0
    %1343 = vmatprep.subr.bf16.mxu0 0
    %1344 = vmatpush1.bf16.msra.mxu0 0
    %1345 = vmatprep.subr.bf16.mxu0 0
    %1346 = vmatpush1.bf16.msra.mxu0 0
    %1347 = vmatprep.subr.bf16.mxu0 0
    %1348 = vmatpush1.bf16.msra.mxu0 0
    %1349 = vmatprep.subr.bf16.mxu0 0
    %1350 = vmatpush1.bf16.msra.mxu0 0
    %1351 = vmatprep.mubr.bf16.mxu0 0
    %1352 = vmatmul.mubr.bf16.gmra.mrb[0].mxu0 %v1317
    %v1353 = vpop.f32.mrb[0].mxu0
    %v1354 = vadd.f32 0.0, %v1353
    %v1355 = vpop.f32.mrb[0].mxu0
    %v1356 = vadd.f32 0.0, %v1355
    %v1357 = vpop.f32.mrb[0].mxu0
    %v1358 = vpop.f32.mrb[0].mxu0
    %1359 = vdwg.mxu0
    %v1360 = vld [vmem:[%s759] sm:$0xff]
    %v1361 = vld [vmem:[%s755] sm:$0xff]
    %v1362 = vld [vmem:[%s755 + $0x8] sm:$0xff]
    %v1363 = vadd.f32 %v1360, %v1354
    %v1364 = vxor.u32 %v1363, 2147483648
    %v1365 = vmul.f32 %v1364, 1.442695
    %v1366 = vpow.pop %v1365
    %v1367 = vadd.f32 %v1366, 1.0
    %v1368 = vrcp.pop %v1367
    %v1369 = vmul.f32 1.0, %v1368
    %v1370 = vadd.f32 %v1354, %v349
    %1372 = vrot.lane.b32.xlu0 %v1370, 64
    %v1373 = vpop.permute.xlu0 %1372
    %v1375 = vmul.f32 %v1369, %v1373
    %1377 = vrot.lane.b32.xlu0 %v1375, 64
    %v1378 = vpop.permute.xlu0 %1377
    %v1380 = vadd.f32 %v1360, %v1378
    %v1381 = vtanh.pop %v1380
    %v1382 = vsub.f32 1.0, %v1369
    %1384 = vrot.lane.b32.xlu0 %v1381, 96
    %v1385 = vpop.permute.xlu0 %1384
    %v1387 = vmul.f32 %v1382, %v1385
    %1389 = vrot.lane.b32.xlu0 %v1266, 32
    %v1390 = vpop.permute.xlu0 %1389
    %v1392 = vmul.f32 %v1369, %v1390
    %v1393 = vadd.f32 %v1387, %v1392
    %v1394 = vadd.f32 %v1361, %v1354
    %v1395 = vadd.f32 %v1362, %v1356
    %v1396 = vxor.u32 %v1394, 2147483648
    %v1397 = vxor.u32 %v1395, 2147483648
    %v1398 = vmul.f32 %v1396, 1.442695
    %v1399 = vpow.pop %v1398
    %v1400 = vmul.f32 %v1397, 1.442695
    %v1401 = vpow.pop %v1400
    %v1402 = vadd.f32 %v1399, 1.0
    %v1403 = vadd.f32 %v1401, 1.0
    %v1404 = vrcp.pop %v1402
    %v1405 = vmul.f32 1.0, %v1404
    %v1406 = vrcp.pop %v1403
    %v1407 = vmul.f32 1.0, %v1406
    %v1408 = vadd.f32 %v1356, %v235
    %1410 = vrot.lane.b32.xlu0 %v1408, 64
    %v1411 = vpop.permute.xlu0 %1410
    %v1413 = vmul.f32 %v1405, %v1411
    %1415 = vrot.lane.b32.xlu0 %v1413, 64
    %v1416 = vpop.permute.xlu0 %1415
    %v1418 = vadd.f32 %v1362, %v1416
    %v1419 = vtanh.pop %v1418
    %v1420 = vsub.f32 1.0, %v1407
    %1422 = vrot.lane.b32.xlu0 %v1419, 96
    %v1423 = vpop.permute.xlu0 %1422
    %v1425 = vmul.f32 %v1420, %v1423
    %1426 = vrot.lane.b32.xlu0 %v1266, 96
    %v1427 = vpop.permute.xlu0 %1426
    %v1429 = vmul.f32 %v1407, %v1427
    %v1430 = vadd.f32 %v1425, %v1429
    %v1431 = vsel %vm842, %v1393, 0.0
    %v1432 = vsel %vm836, %v1430, 0.0
    %1434 = vrot.lane.b32.xlu0 %v1431, 96
    %v1435 = vpop.permute.xlu0 %1434
    %1437 = vst.msk [vmem:[%s854] sm:$0xff] %vm126, %v1435
    %1439 = vrot.lane.b32.xlu0 %v1432, 32
    %v1440 = vpop.permute.xlu0 %1439
    %1442 = vst.msk [vmem:[%s848] sm:$0xff] %vm436, %v1440
    %v1443 = vsel %vm842, %v1393, %v1390
    %1445 = vrot.lane.b32.xlu0 %v1443, 96
    %v1446 = vpop.permute.xlu0 %1445
    %1448 = vst.msk [vmem:[#allocation3] sm:$0xff] %vm126, %v1446
    %v1449 = vsel %vm836, %v1430, %v1427
    %1451 = vrot.lane.b32.xlu0 %v1449, 32
    %v1452 = vpop.permute.xlu0 %1451
    %1454 = vst.msk [vmem:[#allocation3] sm:$0xff] %vm436, %v1452
    %v1455 = vld [vmem:[#allocation3] sm:$0xff]
    %v1456 = vpack.c.bf16 %v1455, %v1455
    %v1457 = vld [vmem:[%s4] sm:$0xff]
    %v1458 = vld [vmem:[%s4 + $0x8] sm:$0xff]
    %v1459 = vld [vmem:[%s4 + $0x10] sm:$0xff]
    %v1460 = vld [vmem:[%s4 + $0x18] sm:$0xff]
    %v1461 = vld [vmem:[%s4 + $0x20] sm:$0xff]
    %v1462 = vld [vmem:[%s4 + $0x28] sm:$0xff]
    %v1463 = vld [vmem:[%s4 + $0x30] sm:$0xff]
    %v1464 = vld [vmem:[%s4 + $0x38] sm:$0xff]
    %v1473 = vunpack.c.l.b16 %v1457
    %v1474 = vunpack.c.h.b16 %v1457
    %v1475 = vunpack.c.l.b16 %v1458
    %v1476 = vunpack.c.h.b16 %v1458
    %v1477 = vunpack.c.l.b16 %v1459
    %v1478 = vunpack.c.h.b16 %v1459
    %v1479 = vunpack.c.l.b16 %v1460
    %v1480 = vunpack.c.h.b16 %v1460
    %v1481 = vunpack.c.l.b16 %v1461
    %v1482 = vunpack.c.h.b16 %v1461
    %v1483 = vunpack.c.l.b16 %v1462
    %v1484 = vunpack.c.h.b16 %v1462
    %v1485 = vunpack.c.l.b16 %v1463
    %v1486 = vunpack.c.h.b16 %v1463
    %v1487 = vunpack.c.l.b16 %v1464
    %v1488 = vunpack.c.h.b16 %v1464
    %v1489 = vpack.c.b16 %v1475, %v1473
    %v1490 = vpack.c.b16 %v1476, %v1474
    %v1491 = vpack.c.b16 %v1479, %v1477
    %v1492 = vpack.c.b16 %v1480, %v1478
    %v1493 = vpack.c.b16 %v1483, %v1481
    %v1494 = vpack.c.b16 %v1484, %v1482
    %v1495 = vpack.c.b16 %v1487, %v1485
    %v1496 = vpack.c.b16 %v1488, %v1486
    %v1506 = vsel %vm213, %v1456, 0
    %1508 = vmatprep.subr.bf16.mxu0 %v1490
    %1509 = vmatpush1.bf16.msra.mxu0 %v1489
    %1510 = vmatprep.subr.bf16.mxu0 %v1492
    %1511 = vmatpush1.bf16.msra.mxu0 %v1491
    %1512 = vmatprep.subr.bf16.mxu0 %v1494
    %1513 = vmatpush1.bf16.msra.mxu0 %v1493
    %1514 = vmatprep.subr.bf16.mxu0 %v1496
    %1515 = vmatpush1.bf16.msra.mxu0 %v1495
    %1516 = vmatprep.subr.bf16.mxu0 0
    %1517 = vmatpush1.bf16.msra.mxu0 0
    %1518 = vmatprep.subr.bf16.mxu0 0
    %1519 = vmatpush1.bf16.msra.mxu0 0
    %1520 = vmatprep.subr.bf16.mxu0 0
    %1521 = vmatpush1.bf16.msra.mxu0 0
    %1522 = vmatprep.subr.bf16.mxu0 0
    %1523 = vmatpush1.bf16.msra.mxu0 0
    %1524 = vmatprep.subr.bf16.mxu0 0
    %1525 = vmatpush1.bf16.msra.mxu0 0
    %1526 = vmatprep.subr.bf16.mxu0 0
    %1527 = vmatpush1.bf16.msra.mxu0 0
    %1528 = vmatprep.subr.bf16.mxu0 0
    %1529 = vmatpush1.bf16.msra.mxu0 0
    %1530 = vmatprep.subr.bf16.mxu0 0
    %1531 = vmatpush1.bf16.msra.mxu0 0
    %1532 = vmatprep.subr.bf16.mxu0 0
    %1533 = vmatpush1.bf16.msra.mxu0 0
    %1534 = vmatprep.subr.bf16.mxu0 0
    %1535 = vmatpush1.bf16.msra.mxu0 0
    %1536 = vmatprep.subr.bf16.mxu0 0
    %1537 = vmatpush1.bf16.msra.mxu0 0
    %1538 = vmatprep.subr.bf16.mxu0 0
    %1539 = vmatpush1.bf16.msra.mxu0 0
    %1540 = vmatprep.mubr.bf16.mxu0 0
    %1541 = vmatmul.mubr.bf16.gmra.mrb[0].mxu0 %v1506
    %v1542 = vpop.f32.mrb[0].mxu0
    %v1543 = vadd.f32 0.0, %v1542
    %v1544 = vpop.f32.mrb[0].mxu0
    %v1545 = vadd.f32 0.0, %v1544
    %v1546 = vpop.f32.mrb[0].mxu0
    %v1547 = vpop.f32.mrb[0].mxu0
    %1548 = vdwg.mxu0
    %v1549 = vld [vmem:[%s550] sm:$0xff]
    %v1550 = vld [vmem:[%s546] sm:$0xff]
    %v1551 = vld [vmem:[%s546 + $0x8] sm:$0xff]
    %v1552 = vadd.f32 %v1549, %v1543
    %v1553 = vxor.u32 %v1552, 2147483648
    %v1554 = vmul.f32 %v1553, 1.442695
    %v1555 = vpow.pop %v1554
    %v1556 = vadd.f32 %v1555, 1.0
    %v1557 = vrcp.pop %v1556
    %v1558 = vmul.f32 1.0, %v1557
    %v1559 = vadd.f32 %v1543, %v349
    %1561 = vrot.lane.b32.xlu0 %v1559, 64
    %v1562 = vpop.permute.xlu0 %1561
    %v1564 = vmul.f32 %v1558, %v1562
    %1566 = vrot.lane.b32.xlu0 %v1564, 64
    %v1567 = vpop.permute.xlu0 %1566
    %v1569 = vadd.f32 %v1549, %v1567
    %v1570 = vtanh.pop %v1569
    %v1571 = vsub.f32 1.0, %v1558
    %1573 = vrot.lane.b32.xlu0 %v1570, 96
    %v1574 = vpop.permute.xlu0 %1573
    %v1576 = vmul.f32 %v1571, %v1574
    %1578 = vrot.lane.b32.xlu0 %v1455, 32
    %v1579 = vpop.permute.xlu0 %1578
    %v1581 = vmul.f32 %v1558, %v1579
    %v1582 = vadd.f32 %v1576, %v1581
    %v1583 = vadd.f32 %v1550, %v1543
    %v1584 = vadd.f32 %v1551, %v1545
    %v1585 = vxor.u32 %v1583, 2147483648
    %v1586 = vxor.u32 %v1584, 2147483648
    %v1587 = vmul.f32 %v1585, 1.442695
    %v1588 = vpow.pop %v1587
    %v1589 = vmul.f32 %v1586, 1.442695
    %v1590 = vpow.pop %v1589
    %v1591 = vadd.f32 %v1588, 1.0
    %v1592 = vadd.f32 %v1590, 1.0
    %v1593 = vrcp.pop %v1591
    %v1594 = vmul.f32 1.0, %v1593
    %v1595 = vrcp.pop %v1592
    %v1596 = vmul.f32 1.0, %v1595
    %v1597 = vadd.f32 %v1545, %v235
    %1599 = vrot.lane.b32.xlu0 %v1597, 64
    %v1600 = vpop.permute.xlu0 %1599
    %v1602 = vmul.f32 %v1594, %v1600
    %1604 = vrot.lane.b32.xlu0 %v1602, 64
    %v1605 = vpop.permute.xlu0 %1604
    %v1607 = vadd.f32 %v1551, %v1605
    %v1608 = vtanh.pop %v1607
    %v1609 = vsub.f32 1.0, %v1596
    %1611 = vrot.lane.b32.xlu0 %v1608, 96
    %v1612 = vpop.permute.xlu0 %1611
    %v1614 = vmul.f32 %v1609, %v1612
    %1615 = vrot.lane.b32.xlu0 %v1455, 96
    %v1616 = vpop.permute.xlu0 %1615
    %v1618 = vmul.f32 %v1596, %v1616
    %v1619 = vadd.f32 %v1614, %v1618
    %v1620 = vsel %vm633, %v1582, 0.0
    %v1621 = vsel %vm627, %v1619, 0.0
    %1623 = vrot.lane.b32.xlu0 %v1620, 96
    %v1624 = vpop.permute.xlu0 %1623
    %1626 = vst.msk [vmem:[%s645] sm:$0xff] %vm126, %v1624
    %1628 = vrot.lane.b32.xlu0 %v1621, 32
    %v1629 = vpop.permute.xlu0 %1628
    %1631 = vst.msk [vmem:[%s639] sm:$0xff] %vm436, %v1629
    %v1632 = vsel %vm633, %v1582, %v1579
    %1634 = vrot.lane.b32.xlu0 %v1632, 96
    %v1635 = vpop.permute.xlu0 %1634
    %1637 = vst.msk [vmem:[#allocation3] sm:$0xff] %vm126, %v1635
    %v1638 = vsel %vm627, %v1619, %v1616
    %1640 = vrot.lane.b32.xlu0 %v1638, 32
    %v1641 = vpop.permute.xlu0 %1640
    %1643 = vst.msk [vmem:[#allocation3] sm:$0xff] %vm436, %v1641
    %v1644 = vld [vmem:[#allocation3] sm:$0xff]
    %v1645 = vpack.c.bf16 %v1644, %v1644
    %v1646 = vld [vmem:[%s4] sm:$0xff]
    %v1647 = vld [vmem:[%s4 + $0x8] sm:$0xff]
    %v1648 = vld [vmem:[%s4 + $0x10] sm:$0xff]
    %v1649 = vld [vmem:[%s4 + $0x18] sm:$0xff]
    %v1650 = vld [vmem:[%s4 + $0x20] sm:$0xff]
    %v1651 = vld [vmem:[%s4 + $0x28] sm:$0xff]
    %v1652 = vld [vmem:[%s4 + $0x30] sm:$0xff]
    %v1653 = vld [vmem:[%s4 + $0x38] sm:$0xff]
    %v1662 = vunpack.c.l.b16 %v1646
    %v1663 = vunpack.c.h.b16 %v1646
    %v1664 = vunpack.c.l.b16 %v1647
    %v1665 = vunpack.c.h.b16 %v1647
    %v1666 = vunpack.c.l.b16 %v1648
    %v1667 = vunpack.c.h.b16 %v1648
    %v1668 = vunpack.c.l.b16 %v1649
    %v1669 = vunpack.c.h.b16 %v1649
    %v1670 = vunpack.c.l.b16 %v1650
    %v1671 = vunpack.c.h.b16 %v1650
    %v1672 = vunpack.c.l.b16 %v1651
    %v1673 = vunpack.c.h.b16 %v1651
    %v1674 = vunpack.c.l.b16 %v1652
    %v1675 = vunpack.c.h.b16 %v1652
    %v1676 = vunpack.c.l.b16 %v1653
    %v1677 = vunpack.c.h.b16 %v1653
    %v1678 = vpack.c.b16 %v1664, %v1662
    %v1679 = vpack.c.b16 %v1665, %v1663
    %v1680 = vpack.c.b16 %v1668, %v1666
    %v1681 = vpack.c.b16 %v1669, %v1667
    %v1682 = vpack.c.b16 %v1672, %v1670
    %v1683 = vpack.c.b16 %v1673, %v1671
    %v1684 = vpack.c.b16 %v1676, %v1674
    %v1685 = vpack.c.b16 %v1677, %v1675
    %v1695 = vsel %vm213, %v1645, 0
    %1697 = vmatprep.subr.bf16.mxu0 %v1679
    %1698 = vmatpush1.bf16.msra.mxu0 %v1678
    %1699 = vmatprep.subr.bf16.mxu0 %v1681
    %1700 = vmatpush1.bf16.msra.mxu0 %v1680
    %1701 = vmatprep.subr.bf16.mxu0 %v1683
    %1702 = vmatpush1.bf16.msra.mxu0 %v1682
    %1703 = vmatprep.subr.bf16.mxu0 %v1685
    %1704 = vmatpush1.bf16.msra.mxu0 %v1684
    %1705 = vmatprep.subr.bf16.mxu0 0
    %1706 = vmatpush1.bf16.msra.mxu0 0
    %1707 = vmatprep.subr.bf16.mxu0 0
    %1708 = vmatpush1.bf16.msra.mxu0 0
    %1709 = vmatprep.subr.bf16.mxu0 0
    %1710 = vmatpush1.bf16.msra.mxu0 0
    %1711 = vmatprep.subr.bf16.mxu0 0
    %1712 = vmatpush1.bf16.msra.mxu0 0
    %1713 = vmatprep.subr.bf16.mxu0 0
    %1714 = vmatpush1.bf16.msra.mxu0 0
    %1715 = vmatprep.subr.bf16.mxu0 0
    %1716 = vmatpush1.bf16.msra.mxu0 0
    %1717 = vmatprep.subr.bf16.mxu0 0
    %1718 = vmatpush1.bf16.msra.mxu0 0
    %1719 = vmatprep.subr.bf16.mxu0 0
    %1720 = vmatpush1.bf16.msra.mxu0 0
    %1721 = vmatprep.subr.bf16.mxu0 0
    %1722 = vmatpush1.bf16.msra.mxu0 0
    %1723 = vmatprep.subr.bf16.mxu0 0
    %1724 = vmatpush1.bf16.msra.mxu0 0
    %1725 = vmatprep.subr.bf16.mxu0 0
    %1726 = vmatpush1.bf16.msra.mxu0 0
    %1727 = vmatprep.subr.bf16.mxu0 0
    %1728 = vmatpush1.bf16.msra.mxu0 0
    %1729 = vmatprep.mubr.bf16.mxu0 0
    %1730 = vmatmul.mubr.bf16.gmra.mrb[0].mxu0 %v1695
    %v1731 = vpop.f32.mrb[0].mxu0
    %v1732 = vadd.f32 0.0, %v1731
    %v1733 = vpop.f32.mrb[0].mxu0
    %v1734 = vadd.f32 0.0, %v1733
    %v1735 = vpop.f32.mrb[0].mxu0
    %v1736 = vpop.f32.mrb[0].mxu0
    %1737 = vdwg.mxu0
    %v1738 = vld [vmem:[%s338] sm:$0xff]
    %v1739 = vld [vmem:[%s334] sm:$0xff]
    %v1740 = vld [vmem:[%s334 + $0x8] sm:$0xff]
    %v1741 = vadd.f32 %v1738, %v1732
    %v1742 = vxor.u32 %v1741, 2147483648
    %v1743 = vmul.f32 %v1742, 1.442695
    %v1744 = vpow.pop %v1743
    %v1745 = vadd.f32 %v1744, 1.0
    %v1746 = vrcp.pop %v1745
    %v1747 = vmul.f32 1.0, %v1746
    %v1748 = vadd.f32 %v1732, %v349
    %1750 = vrot.lane.b32.xlu0 %v1748, 64
    %v1751 = vpop.permute.xlu0 %1750
    %v1753 = vmul.f32 %v1747, %v1751
    %1755 = vrot.lane.b32.xlu0 %v1753, 64
    %v1756 = vpop.permute.xlu0 %1755
    %v1758 = vadd.f32 %v1738, %v1756
    %v1759 = vtanh.pop %v1758
    %v1760 = vsub.f32 1.0, %v1747
    %1762 = vrot.lane.b32.xlu0 %v1759, 96
    %v1763 = vpop.permute.xlu0 %1762
    %v1765 = vmul.f32 %v1760, %v1763
    %1767 = vrot.lane.b32.xlu0 %v1644, 32
    %v1768 = vpop.permute.xlu0 %1767
    %v1770 = vmul.f32 %v1747, %v1768
    %v1771 = vadd.f32 %v1765, %v1770
    %v1772 = vadd.f32 %v1739, %v1732
    %v1773 = vadd.f32 %v1740, %v1734
    %v1774 = vxor.u32 %v1772, 2147483648
    %v1775 = vxor.u32 %v1773, 2147483648
    %v1776 = vmul.f32 %v1774, 1.442695
    %v1777 = vpow.pop %v1776
    %v1778 = vmul.f32 %v1775, 1.442695
    %v1779 = vpow.pop %v1778
    %v1780 = vadd.f32 %v1777, 1.0
    %v1781 = vadd.f32 %v1779, 1.0
    %v1782 = vrcp.pop %v1780
    %v1783 = vmul.f32 1.0, %v1782
    %v1784 = vrcp.pop %v1781
    %v1785 = vmul.f32 1.0, %v1784
    %v1786 = vadd.f32 %v1734, %v235
    %1788 = vrot.lane.b32.xlu0 %v1786, 64
    %v1789 = vpop.permute.xlu0 %1788
    %v1791 = vmul.f32 %v1783, %v1789
    %1793 = vrot.lane.b32.xlu0 %v1791, 64
    %v1794 = vpop.permute.xlu0 %1793
    %v1796 = vadd.f32 %v1740, %v1794
    %v1797 = vtanh.pop %v1796
    %v1798 = vsub.f32 1.0, %v1785
    %1800 = vrot.lane.b32.xlu0 %v1797, 96
    %v1801 = vpop.permute.xlu0 %1800
    %v1803 = vmul.f32 %v1798, %v1801
    %1804 = vrot.lane.b32.xlu0 %v1644, 96
    %v1805 = vpop.permute.xlu0 %1804
    %v1807 = vmul.f32 %v1785, %v1805
    %v1808 = vadd.f32 %v1803, %v1807
    %v1809 = vsel %vm424, %v1771, 0.0
    %v1810 = vsel %vm418, %v1808, 0.0
    %1812 = vrot.lane.b32.xlu0 %v1809, 96
    %v1813 = vpop.permute.xlu0 %1812
    %1815 = vst.msk [vmem:[%s435] sm:$0xff] %vm126, %v1813
    %1817 = vrot.lane.b32.xlu0 %v1810, 32
    %v1818 = vpop.permute.xlu0 %1817
    %1820 = vst.msk [vmem:[#allocation9] sm:$0xff] %vm436, %v1818
    %v1821 = vsel %vm424, %v1771, %v1768
    %1823 = vrot.lane.b32.xlu0 %v1821, 96
    %v1824 = vpop.permute.xlu0 %1823
    %1826 = vst.msk [vmem:[#allocation3] sm:$0xff] %vm126, %v1824
    %v1827 = vsel %vm418, %v1808, %v1805
    %1829 = vrot.lane.b32.xlu0 %v1827, 32
    %v1830 = vpop.permute.xlu0 %1829
    %1832 = vst.msk [vmem:[#allocation3] sm:$0xff] %vm436, %v1830
    %v1833 = vld [vmem:[#allocation3] sm:$0xff]
    %v1834 = vld [vmem:[#allocation7] sm:$0xff]
    %v1835 = vld [vmem:[#allocation7 + $0x8] sm:$0xff]
    %v1836 = vld [vmem:[#allocation7 + $0x10] sm:$0xff]
    %v1837 = vld [vmem:[#allocation7 + $0x18] sm:$0xff]
    %v1838 = vld [vmem:[%s7] sm:$0x1]
    %v1840 = vlaneseq
    %v1841 = vshrl.u32 %v1840, 7
    %v1842 = vsub.s32 0, %v1841
    %v1843 = vrot.slane %v1838, %v1842
    %1846 = vrot.lane.b32.xlu0 %v1833, 96
    %v1847 = vpop.permute.xlu0 %1846
    %v1848 = vsel %vm126, %v1847, 0
    %1850 = vmatprep.subr.mxu0 0.0
    %1851 = vmatpush1.msra.mxu0 %v1834
    %1852 = vmatprep.subr.mxu0 0.0
    %1853 = vmatpush1.msra.mxu0 %v1835
    %1854 = vmatprep.subr.mxu0 0.0
    %1855 = vmatpush1.msra.mxu0 %v1836
    %1856 = vmatprep.subr.mxu0 0.0
    %1857 = vmatpush1.msra.mxu0 %v1837
    %1858 = vmatprep.subr.mxu0 0.0
    %1859 = vmatpush1.msra.mxu0 0.0
    %1860 = vmatprep.subr.mxu0 0.0
    %1861 = vmatpush1.msra.mxu0 0.0
    %1862 = vmatprep.subr.mxu0 0.0
    %1863 = vmatpush1.msra.mxu0 0.0
    %1864 = vmatprep.subr.mxu0 0.0
    %1865 = vmatpush1.msra.mxu0 0.0
    %1866 = vmatprep.subr.mxu0 0.0
    %1867 = vmatpush1.msra.mxu0 0.0
    %1868 = vmatprep.subr.mxu0 0.0
    %1869 = vmatpush1.msra.mxu0 0.0
    %1870 = vmatprep.subr.mxu0 0.0
    %1871 = vmatpush1.msra.mxu0 0.0
    %1872 = vmatprep.subr.mxu0 0.0
    %1873 = vmatpush1.msra.mxu0 0.0
    %1874 = vmatprep.subr.mxu0 0.0
    %1875 = vmatpush1.msra.mxu0 0.0
    %1876 = vmatprep.subr.mxu0 0.0
    %1877 = vmatpush1.msra.mxu0 0.0
    %1878 = vmatprep.subr.mxu0 0.0
    %1879 = vmatpush1.msra.mxu0 0.0
    %1880 = vmatprep.subr.mxu0 0.0
    %1881 = vmatpush1.msra.mxu0 0.0
    %1882 = vmatprep.subr.mxu0 0.0
    %1883 = vmatpush1.msra.mxu0 0.0
    %1884 = vmatprep.subr.mxu0 0.0
    %1885 = vmatpush1.msra.mxu0 0.0
    %1886 = vmatprep.subr.mxu0 0.0
    %1887 = vmatpush1.msra.mxu0 0.0
    %1888 = vmatprep.subr.mxu0 0.0
    %1889 = vmatpush1.msra.mxu0 0.0
    %1890 = vmatprep.subr.mxu0 0.0
    %1891 = vmatpush1.msra.mxu0 0.0
    %1892 = vmatprep.subr.mxu0 0.0
    %1893 = vmatpush1.msra.mxu0 0.0
    %1894 = vmatprep.subr.mxu0 0.0
    %1895 = vmatpush1.msra.mxu0 0.0
    %1896 = vmatprep.subr.mxu0 0.0
    %1897 = vmatpush1.msra.mxu0 0.0
    %1898 = vmatprep.subr.mxu0 0.0
    %1899 = vmatpush1.msra.mxu0 0.0
    %1900 = vmatprep.subr.mxu0 0.0
    %1901 = vmatpush1.msra.mxu0 0.0
    %1902 = vmatprep.subr.mxu0 0.0
    %1903 = vmatpush1.msra.mxu0 0.0
    %1904 = vmatprep.subr.mxu0 0.0
    %1905 = vmatpush1.msra.mxu0 0.0
    %1906 = vmatprep.subr.mxu0 0.0
    %1907 = vmatpush1.msra.mxu0 0.0
    %1908 = vmatprep.subr.mxu0 0.0
    %1909 = vmatpush1.msra.mxu0 0.0
    %1910 = vmatprep.subr.mxu0 0.0
    %1911 = vmatpush1.msra.mxu0 0.0
    %1912 = vmatprep.subr.mxu0 0.0
    %1913 = vmatpush1.msra.mxu0 0.0
    %1914 = vmatprep.mubr.f32.mxu0 0.0
    %1915 = vmatmul.mubr.f32.gmra.mrb[0].mxu0 %v1848
    %v1916 = vpop.f32.mrb[0].mxu0
    %v1917 = vadd.f32 %v1843, %v1916
    %v1918 = vpop.f32.mrb[0].mxu0
    %1919 = vdwg.mxu0
    %v1920 = vtanh.pop %v1917
    %1921 = vst.msk [vmem:[#allocation10] sm:$0xff] %vm126, %v1920
    // Predicated region
    $region42: #{tpu_custom_call.1} parent=1 // pred_check
      _
    $region43: #{tpu_custom_call.1} parent=1 // pred_check_branch
      %1923 = sbr.rel (0) target = $region45
    $region44: #{tpu_custom_call.1} parent=1 // pred_region
      %s1925 = ssub.s32 1024, 1024
      %1926 = vsyncadd [#allocation6], %s1925
      %s1927 = sshll.u32 [#allocation9], 4
      %s1928 = int_to_ptr.vmem [resolvable:$true] %s1927
      %1933 = dma.vmem_to_hbm [thread:$0]  %s1928, 1024, %s8, [#allocation6], 128, 128, 8
    $region45: #{tpu_custom_call.1} parent=1 // pred_fallthru
      _
    // Predicated region
    $region46: #{tpu_custom_call.1} parent=1 // pred_check
      _
    $region47: #{tpu_custom_call.1} parent=1 // pred_check_branch
      %1935 = sbr.rel (0) target = $region49
    $region48: #{tpu_custom_call.1} parent=1 // pred_region
      %s1937 = ssub.s32 128, 128
      %1938 = vsyncadd [#allocation11], %s1937
      %s1940 = sshll.u32 [#allocation10], 4
      %s1941 = int_to_ptr.vmem [resolvable:$true] %s1940
      %1943 = dma.vmem_to_hbm [thread:$0]  %s1941, 128, %s9, [#allocation11]
    $region49: #{tpu_custom_call.1} parent=1 // pred_fallthru
      _
    // Predicated region
    $region50: #{tpu_custom_call.1} parent=1 // pred_check
      _
    $region51: #{tpu_custom_call.1} parent=1 // pred_check_branch
      %1945 = sbr.rel (0) target = $region53
    $region52: #{tpu_custom_call.1} parent=1 // pred_region
      %1946 = dma.done [#allocation6], 1024
    $region53: #{tpu_custom_call.1} parent=1 // pred_fallthru
      _
    // Predicated region
    $region54: #{tpu_custom_call.1} parent=1 // pred_check
      _
    $region55: #{tpu_custom_call.1} parent=1 // pred_check_branch
      %1948 = sbr.rel (0) target = $region57
    $region56: #{tpu_custom_call.1} parent=1 // pred_region
      %1949 = dma.done [#allocation11], 128
    $region57: #{tpu_custom_call.1} parent=1 // pred_fallthru
      _
    %1950 = vsyncpa [#allocation5], 1
    %1951 = vsyncpa [#allocation8], 1
    %1952 = vsyncpa [#allocation6], 1
    %1953 = vsyncpa [#allocation11], 1

</llo_original>
